<compile_context>
chip_gen: v7x
topology: tpu7x:2x2x1
jax: 0.10.0
libtpu: 0.0.40
codegen_flags: <defaults>
</compile_context>

<pallas_src>
import functools

import jax
import jax.numpy as jnp
import numpy as np
from jax import lax
from jax.experimental import pallas as pl
from jax.experimental.pallas import tpu as pltpu


# ----------------------------- Pallas kernel --------------------------------

def _spatial_weight2_kernel(p_ref, x1_ref, x2_ref, o_ref, *, gt, cpg, hw):
    # p_ref : (gt, 4)        per-group affine params [w1, b1, w2, b2]
    # x*_ref: (gt*cpg, hw)   group-major channel rows (group g -> rows g*cpg..)
    # o_ref : (gt*cpg, hw)
    cblk = gt * cpg
    x1 = x1_ref[...].astype(jnp.float32)
    x2 = x2_ref[...].astype(jnp.float32)

    # Block-structured 0/1 group selector matrices, built from 2-D iota
    # (no integer division).  S gathers channels->group, ST broadcasts back.
    g_row = lax.broadcasted_iota(jnp.int32, (gt, cblk), 0)
    c_col = lax.broadcasted_iota(jnp.int32, (gt, cblk), 1)
    s_mat = jnp.logical_and(c_col >= g_row * cpg,
                            c_col < (g_row + 1) * cpg).astype(jnp.float32)
    c_row = lax.broadcasted_iota(jnp.int32, (cblk, gt), 0)
    g_col = lax.broadcasted_iota(jnp.int32, (cblk, gt), 1)
    st_mat = jnp.logical_and(c_row >= g_col * cpg,
                             c_row < (g_col + 1) * cpg).astype(jnp.float32)

    hp = lax.Precision.HIGHEST  # exact-in-f32 gather/broadcast on the MXU

    def gate(x, wv, bv):
        # AdaptiveAvgPool2d(1): per-channel spatial mean.
        avg = jnp.mean(x, axis=-1, keepdims=True)                 # (cblk, 1)
        # Channel-weighted sum within each group (MXU, idle slot).
        t = jnp.dot(s_mat, x * avg, precision=hp,
                    preferred_element_type=jnp.float32)           # (gt, hw)
        # Normalize: subtract mean, divide by unbiased std (torch.std) + eps.
        t = t - jnp.mean(t, axis=-1, keepdims=True)
        var = jnp.sum(t * t, axis=-1, keepdims=True) / jnp.float32(hw - 1)
        std = jnp.sqrt(var) + jnp.float32(1e-5)
        # Fold 1/std into the per-group affine: one fused multiply-add.
        scale = wv / std                                          # (gt, 1)
        return jax.nn.sigmoid(t * scale + bv)                     # (gt, hw)

    f1 = gate(x1, p_ref[:, 0:1], p_ref[:, 1:2])
    f2 = gate(x2, p_ref[:, 2:3], p_ref[:, 3:4])
    # f_en / 2 folded into a single quarter factor on the small (gt, hw) map.
    fq = (f1 + f2) * jnp.float32(0.25)                            # (gt, hw)
    # Broadcast the per-group map to every channel of its group (MXU, exact).
    f_full = jnp.dot(st_mat, fq, precision=hp,
                     preferred_element_type=jnp.float32)          # (cblk, hw)
    o_ref[...] = ((x1 + x2) * f_full).astype(o_ref.dtype)


# ----------------------------- wrapper ---------------------------------------

def _pick_group_tile(groups, cpg, hw, itemsize):
    """Pick GT (groups per block) so blocks are ~256 KiB..2 MiB when possible."""
    cands = sorted({g for g in (8, 16, 32, groups)
                    if groups % g == 0 and (g * cpg) % 8 == 0})
    assert cands, "groups must be a multiple of 8"
    lo, hi = 256 << 10, 2 << 20
    blk = lambda g: g * cpg * hw * itemsize
    fitting = [g for g in cands if blk(g) <= hi]
    if not fitting:
        return cands[0]          # even the smallest block is large; grid stays fine
    for g in fitting:
        if blk(g) >= lo:
            return g             # smallest block >= 256 KiB -> most grid steps
    return fitting[-1]           # everything tiny -> largest block (amortize overhead)


def spatial_weight2_forward(x1, x2, w1, b1, w2, b2, groups=32):
    """x1, x2: (b, c, h, w); w*/b*: (1, groups, 1, 1).
    Returns v: (b, c, h, w), matching PyTorch spatial_weight2.forward."""
    b, c, h, w = x1.shape
    assert x2.shape == x1.shape
    assert c % groups == 0 and groups % 8 == 0
    cpg = c // groups
    hw = h * w
    # torch.std(ddof=1) over h*w elements needs h*w > 1 (else NaN in torch too).
    assert hw > 1, "spatial_weight2 needs h*w > 1 for the unbiased std"

    itemsize = jnp.dtype(x1.dtype).itemsize
    gt = _pick_group_tile(groups, cpg, hw, itemsize)
    n_gblk = groups // gt
    cblk = gt * cpg

    # Free reshapes only -- no wrapper astype / HBM copy of the activations.
    x1_2d = x1.reshape(b * c, hw)
    x2_2d = x2.reshape(b * c, hw)
    # Pack all four per-group affine params into a single (groups, 4) input.
    params = jnp.stack([w1.reshape(groups), b1.reshape(groups),
                        w2.reshape(groups), b2.reshape(groups)],
                       axis=1).astype(jnp.float32)

    x_spec = pl.BlockSpec((cblk, hw), lambda ib, ig: (ib * n_gblk + ig, 0))
    p_spec = pl.BlockSpec((gt, 4), lambda ib, ig: (ig, 0))

    block_bytes = cblk * hw * itemsize
    # 2 inputs + 1 output, double buffered (+ slack); clamp under v7x physical.
    vmem_limit = int(min(48 << 20, max(16 << 20, 8 * block_bytes)))

    kernel = functools.partial(_spatial_weight2_kernel, gt=gt, cpg=cpg, hw=hw)
    out = pl.pallas_call(
        kernel,
        out_shape=jax.ShapeDtypeStruct((b * c, hw), x1.dtype),
        grid=(b, n_gblk),
        in_specs=[p_spec, x_spec, x_spec],
        out_specs=x_spec,
        compiler_params=pltpu.CompilerParams(
            dimension_semantics=("parallel", "parallel"),
            vmem_limit_bytes=vmem_limit),
        cost_estimate=pl.CostEstimate(
            flops=10 * b * c * hw,
            transcendentals=2 * b * groups * hw,
            bytes_accessed=3 * b * c * hw * itemsize),
    )(params, x1_2d, x2_2d)

    return out.reshape(b, c, h, w)


# ----------------------------- pure-JAX reference ----------------------------

def _spatialweight_ref(x, weight, bias, groups):
    b, c, h, w = x.shape
    xv = x.reshape(b * groups, c // groups, h, w)
    avg = xv.mean(axis=(2, 3), keepdims=True)
    xn = (xv * avg).sum(axis=1, keepdims=True)
    t = xn.reshape(b * groups, -1)
    t = t - t.mean(axis=1, keepdims=True)
    std = jnp.std(t, axis=1, keepdims=True, ddof=1) + 1e-5   # torch.std is unbiased
    t = t / std
    t = t.reshape(b, groups, h, w)
    t = t * weight + bias
    t = t.reshape(b * groups, 1, h, w)
    return jax.nn.sigmoid(t)


def spatial_weight2_ref(x1, x2, w1, b1, w2, b2, groups=32):
    b, c, h, w = x1.shape
    f1 = _spatialweight_ref(x1, w1, b1, groups)
    f2 = _spatialweight_ref(x2, w2, b2, groups)
    f_en = (f1 + f2) / 2
    o0 = x1.reshape(b * groups, -1, h, w)
    o1 = x2.reshape(b * groups, -1, h, w)
    v = (o0 + o1) * f_en / 2
    return v.reshape(b, c, h, w)


# ----------------------------------- main -------------------------------------

if __name__ == "__main__":
    groups = 32

    def check(b, c, h, w, wb_key=None):
        key = jax.random.PRNGKey(0)
        k1, k2, k3, k4, k5, k6 = jax.random.split(key, 6)
        x1 = jax.random.normal(k1, (b, c, h, w), dtype=jnp.float32)
        x2 = jax.random.normal(k2, (b, c, h, w), dtype=jnp.float32)
        if wb_key is None:
            # The module's deterministic init (weight = zeros, bias = ones).
            w1 = jnp.zeros((1, groups, 1, 1), jnp.float32)
            b1 = jnp.ones((1, groups, 1, 1), jnp.float32)
            w2 = jnp.zeros((1, groups, 1, 1), jnp.float32)
            b2 = jnp.ones((1, groups, 1, 1), jnp.float32)
        else:
            w1 = 0.5 * jax.random.normal(k3, (1, groups, 1, 1), jnp.float32)
            b1 = 0.5 * jax.random.normal(k4, (1, groups, 1, 1), jnp.float32)
            w2 = 0.5 * jax.random.normal(k5, (1, groups, 1, 1), jnp.float32)
            b2 = 0.5 * jax.random.normal(k6, (1, groups, 1, 1), jnp.float32)
        out = jax.block_until_ready(
            spatial_weight2_forward(x1, x2, w1, b1, w2, b2, groups=groups))
        ref = jax.block_until_ready(
            spatial_weight2_ref(x1, x2, w1, b1, w2, b2, groups=groups))
        np.testing.assert_allclose(np.asarray(out), np.asarray(ref),
                                   rtol=1e-5, atol=1e-5)

    # Case 1: default init, small VGG-like block (cpg = 2).
    check(2, 64, 16, 16, wb_key=None)
    # Case 2: non-trivial affine params (normalization/sigmoid path exercised).
    check(2, 64, 16, 16, wb_key=1)
    # Case 3: different channel count / spatial size (cpg = 4, hw not a
    # multiple of 128 -> masked tail stores path).
    check(2, 128, 8, 8, wb_key=1)

    print("KERNEL_OK")
</pallas_src>

<mosaic_0001>
module attributes {stable_mosaic.version = 11 : i64} {
  func.func @_spatial_weight2_kernel(%arg0: i32, %arg1: i32, %arg2: memref<32x4xf32, #tpu.memory_space<vmem>>, %arg3: memref<64x256xf32, #tpu.memory_space<vmem>>, %arg4: memref<64x256xf32, #tpu.memory_space<vmem>>, %arg5: memref<64x256xf32, #tpu.memory_space<vmem>>) attributes {dimension_semantics = [#tpu.dimension_semantics<parallel>, #tpu.dimension_semantics<parallel>], iteration_bounds = array<i64: 2, 1>, scalar_prefetch = 0 : i64, scratch_operands = 0 : i64, tpu.core_type = #tpu.core_type<tc>, window_params = [{transform_indices = @transform_0, window_bounds = array<i64: 32, 4>}, {transform_indices = @transform_1, window_bounds = array<i64: 64, 256>}, {transform_indices = @transform_2, window_bounds = array<i64: 64, 256>}, {transform_indices = @transform_3, window_bounds = array<i64: 64, 256>}]} {
    %c0 = arith.constant 0 : index
    %c0_0 = arith.constant 0 : index
    %0 = vector.load %arg3[%c0, %c0_0] : memref<64x256xf32, #tpu.memory_space<vmem>>, vector<64x256xf32>
    %c0_1 = arith.constant 0 : index
    %c0_2 = arith.constant 0 : index
    %1 = vector.load %arg4[%c0_1, %c0_2] : memref<64x256xf32, #tpu.memory_space<vmem>>, vector<64x256xf32>
    %2 = tpu.iota {dimensions = array<i32: 0>} : vector<32x64xi32>
    %3 = tpu.iota {dimensions = array<i32: 1>} : vector<32x64xi32>
    %c2_i32 = arith.constant 2 : i32
    %4 = vector.broadcast %c2_i32 : i32 to vector<32x64xi32>
    %5 = arith.muli %2, %4 : vector<32x64xi32>
    %6 = arith.cmpi sge, %3, %5 : vector<32x64xi32>
    %c1_i32 = arith.constant 1 : i32
    %7 = vector.broadcast %c1_i32 : i32 to vector<32x64xi32>
    %8 = arith.addi %2, %7 : vector<32x64xi32>
    %c2_i32_3 = arith.constant 2 : i32
    %9 = vector.broadcast %c2_i32_3 : i32 to vector<32x64xi32>
    %10 = arith.muli %8, %9 : vector<32x64xi32>
    %11 = arith.cmpi slt, %3, %10 : vector<32x64xi32>
    %12 = arith.andi %6, %11 : vector<32x64xi1>
    %13 = arith.extui %12 : vector<32x64xi1> to vector<32x64xi32>
    %14 = arith.sitofp %13 : vector<32x64xi32> to vector<32x64xf32>
    %15 = tpu.iota {dimensions = array<i32: 0>} : vector<64x32xi32>
    %16 = tpu.iota {dimensions = array<i32: 1>} : vector<64x32xi32>
    %c2_i32_4 = arith.constant 2 : i32
    %17 = vector.broadcast %c2_i32_4 : i32 to vector<64x32xi32>
    %18 = arith.muli %16, %17 : vector<64x32xi32>
    %19 = arith.cmpi sge, %15, %18 : vector<64x32xi32>
    %c1_i32_5 = arith.constant 1 : i32
    %20 = vector.broadcast %c1_i32_5 : i32 to vector<64x32xi32>
    %21 = arith.addi %16, %20 : vector<64x32xi32>
    %c2_i32_6 = arith.constant 2 : i32
    %22 = vector.broadcast %c2_i32_6 : i32 to vector<64x32xi32>
    %23 = arith.muli %21, %22 : vector<64x32xi32>
    %24 = arith.cmpi slt, %15, %23 : vector<64x32xi32>
    %25 = arith.andi %19, %24 : vector<64x32xi1>
    %26 = arith.extui %25 : vector<64x32xi1> to vector<64x32xi32>
    %27 = arith.sitofp %26 : vector<64x32xi32> to vector<64x32xf32>
    %c0_7 = arith.constant 0 : index
    %c0_8 = arith.constant 0 : index
    %28 = vector.load %arg2[%c0_7, %c0_8] : memref<32x4xf32, #tpu.memory_space<vmem>>, vector<32x1xf32>
    %c0_9 = arith.constant 0 : index
    %c1 = arith.constant 1 : index
    %29 = vector.load %arg2[%c0_9, %c1] : memref<32x4xf32, #tpu.memory_space<vmem>>, vector<32x1xf32>
    %cst = arith.constant dense<0.000000e+00> : vector<64xf32>
    %30 = vector.multi_reduction <add>, %0, %cst [1] : vector<64x256xf32> to vector<64xf32>
    %31 = vector.shape_cast %30 : vector<64xf32> to vector<64x1xf32>
    %cst_10 = arith.constant 2.560000e+02 : f32
    %32 = vector.broadcast %cst_10 : f32 to vector<64x1xf32>
    %33 = arith.divf %31, %32 : vector<64x1xf32>
    %34 = vector.broadcast %33 : vector<64x1xf32> to vector<64x256xf32>
    %35 = arith.mulf %0, %34 : vector<64x256xf32>
    %cst_11 = arith.constant dense<0.000000e+00> : vector<32x256xf32>
    %36 = tpu.matmul %14, %35, %cst_11 {dimension_numbers = #tpu.dot_dimension_numbers<[1], [0], [0], [1], [0, 0, 1, 1], [], []>, precision = #tpu.contract_precision<fp32>} : vector<32x64xf32>, vector<64x256xf32>, vector<32x256xf32> -> vector<32x256xf32>
    %cst_12 = arith.constant dense<0.000000e+00> : vector<32xf32>
    %37 = vector.multi_reduction <add>, %36, %cst_12 [1] : vector<32x256xf32> to vector<32xf32>
    %38 = vector.shape_cast %37 : vector<32xf32> to vector<32x1xf32>
    %cst_13 = arith.constant 2.560000e+02 : f32
    %39 = vector.broadcast %cst_13 : f32 to vector<32x1xf32>
    %40 = arith.divf %38, %39 : vector<32x1xf32>
    %41 = vector.broadcast %40 : vector<32x1xf32> to vector<32x256xf32>
    %42 = arith.subf %36, %41 : vector<32x256xf32>
    %43 = arith.mulf %42, %42 : vector<32x256xf32>
    %cst_14 = arith.constant dense<0.000000e+00> : vector<32xf32>
    %44 = vector.multi_reduction <add>, %43, %cst_14 [1] : vector<32x256xf32> to vector<32xf32>
    %45 = vector.shape_cast %44 : vector<32xf32> to vector<32x1xf32>
    %cst_15 = arith.constant 2.550000e+02 : f32
    %46 = vector.broadcast %cst_15 : f32 to vector<32x1xf32>
    %47 = arith.divf %45, %46 : vector<32x1xf32>
    %48 = math.sqrt %47 : vector<32x1xf32>
    %cst_16 = arith.constant 9.99999974E-6 : f32
    %49 = vector.broadcast %cst_16 : f32 to vector<32x1xf32>
    %50 = arith.addf %48, %49 : vector<32x1xf32>
    %51 = arith.divf %28, %50 : vector<32x1xf32>
    %52 = vector.broadcast %51 : vector<32x1xf32> to vector<32x256xf32>
    %53 = arith.mulf %42, %52 : vector<32x256xf32>
    %54 = vector.broadcast %29 : vector<32x1xf32> to vector<32x256xf32>
    %55 = arith.addf %53, %54 : vector<32x256xf32>
    %56 = arith.negf %55 : vector<32x256xf32>
    %57 = math.exp %56 : vector<32x256xf32>
    %cst_17 = arith.constant 1.000000e+00 : f32
    %58 = vector.broadcast %cst_17 : f32 to vector<32x256xf32>
    %59 = arith.addf %58, %57 : vector<32x256xf32>
    %60 = arith.divf %58, %59 : vector<32x256xf32>
    %c0_18 = arith.constant 0 : index
    %c2 = arith.constant 2 : index
    %61 = vector.load %arg2[%c0_18, %c2] : memref<32x4xf32, #tpu.memory_space<vmem>>, vector<32x1xf32>
    %c0_19 = arith.constant 0 : index
    %c3 = arith.constant 3 : index
    %62 = vector.load %arg2[%c0_19, %c3] : memref<32x4xf32, #tpu.memory_space<vmem>>, vector<32x1xf32>
    %cst_20 = arith.constant dense<0.000000e+00> : vector<64xf32>
    %63 = vector.multi_reduction <add>, %1, %cst_20 [1] : vector<64x256xf32> to vector<64xf32>
    %64 = vector.shape_cast %63 : vector<64xf32> to vector<64x1xf32>
    %cst_21 = arith.constant 2.560000e+02 : f32
    %65 = vector.broadcast %cst_21 : f32 to vector<64x1xf32>
    %66 = arith.divf %64, %65 : vector<64x1xf32>
    %67 = vector.broadcast %66 : vector<64x1xf32> to vector<64x256xf32>
    %68 = arith.mulf %1, %67 : vector<64x256xf32>
    %cst_22 = arith.constant dense<0.000000e+00> : vector<32x256xf32>
    %69 = tpu.matmul %14, %68, %cst_22 {dimension_numbers = #tpu.dot_dimension_numbers<[1], [0], [0], [1], [0, 0, 1, 1], [], []>, precision = #tpu.contract_precision<fp32>} : vector<32x64xf32>, vector<64x256xf32>, vector<32x256xf32> -> vector<32x256xf32>
    %cst_23 = arith.constant dense<0.000000e+00> : vector<32xf32>
    %70 = vector.multi_reduction <add>, %69, %cst_23 [1] : vector<32x256xf32> to vector<32xf32>
    %71 = vector.shape_cast %70 : vector<32xf32> to vector<32x1xf32>
    %cst_24 = arith.constant 2.560000e+02 : f32
    %72 = vector.broadcast %cst_24 : f32 to vector<32x1xf32>
    %73 = arith.divf %71, %72 : vector<32x1xf32>
    %74 = vector.broadcast %73 : vector<32x1xf32> to vector<32x256xf32>
    %75 = arith.subf %69, %74 : vector<32x256xf32>
    %76 = arith.mulf %75, %75 : vector<32x256xf32>
    %cst_25 = arith.constant dense<0.000000e+00> : vector<32xf32>
    %77 = vector.multi_reduction <add>, %76, %cst_25 [1] : vector<32x256xf32> to vector<32xf32>
    %78 = vector.shape_cast %77 : vector<32xf32> to vector<32x1xf32>
    %cst_26 = arith.constant 2.550000e+02 : f32
    %79 = vector.broadcast %cst_26 : f32 to vector<32x1xf32>
    %80 = arith.divf %78, %79 : vector<32x1xf32>
    %81 = math.sqrt %80 : vector<32x1xf32>
    %cst_27 = arith.constant 9.99999974E-6 : f32
    %82 = vector.broadcast %cst_27 : f32 to vector<32x1xf32>
    %83 = arith.addf %81, %82 : vector<32x1xf32>
    %84 = arith.divf %61, %83 : vector<32x1xf32>
    %85 = vector.broadcast %84 : vector<32x1xf32> to vector<32x256xf32>
    %86 = arith.mulf %75, %85 : vector<32x256xf32>
    %87 = vector.broadcast %62 : vector<32x1xf32> to vector<32x256xf32>
    %88 = arith.addf %86, %87 : vector<32x256xf32>
    %89 = arith.negf %88 : vector<32x256xf32>
    %90 = math.exp %89 : vector<32x256xf32>
    %cst_28 = arith.constant 1.000000e+00 : f32
    %91 = vector.broadcast %cst_28 : f32 to vector<32x256xf32>
    %92 = arith.addf %91, %90 : vector<32x256xf32>
    %93 = arith.divf %91, %92 : vector<32x256xf32>
    %94 = arith.addf %60, %93 : vector<32x256xf32>
    %cst_29 = arith.constant 2.500000e-01 : f32
    %95 = vector.broadcast %cst_29 : f32 to vector<32x256xf32>
    %96 = arith.mulf %94, %95 : vector<32x256xf32>
    %cst_30 = arith.constant dense<0.000000e+00> : vector<64x256xf32>
    %97 = tpu.matmul %27, %96, %cst_30 {dimension_numbers = #tpu.dot_dimension_numbers<[1], [0], [0], [1], [0, 0, 1, 1], [], []>, precision = #tpu.contract_precision<fp32>} : vector<64x32xf32>, vector<32x256xf32>, vector<64x256xf32> -> vector<64x256xf32>
    %98 = arith.addf %0, %1 : vector<64x256xf32>
    %99 = arith.mulf %98, %97 : vector<64x256xf32>
    %c0_31 = arith.constant 0 : index
    %c0_32 = arith.constant 0 : index
    %100 = vector.load %arg5[%c0_31, %c0_32] : memref<64x256xf32, #tpu.memory_space<vmem>>, vector<64x256xf32>
    tpu.vector_store %arg5[%c0_31, %c0_32], %99 {strides = array<i32>} : memref<64x256xf32, #tpu.memory_space<vmem>>, vector<64x256xf32>,
    return
  }
  func.func @transform_0(%arg0: i32, %arg1: i32) -> (i32, i32) {
    %c0_i32 = arith.constant 0 : i32
    %c0_i32_0 = arith.constant 0 : i32
    return %arg1, %c0_i32 : i32, i32
  }
  func.func @transform_1(%arg0: i32, %arg1: i32) -> (i32, i32) {
    %c1_i32 = arith.constant 1 : i32
    %0 = arith.muli %arg0, %c1_i32 : i32
    %1 = arith.addi %0, %arg1 : i32
    %c0_i32 = arith.constant 0 : i32
    %c0_i32_0 = arith.constant 0 : i32
    return %1, %c0_i32 : i32, i32
  }
  func.func @transform_2(%arg0: i32, %arg1: i32) -> (i32, i32) {
    %c1_i32 = arith.constant 1 : i32
    %0 = arith.muli %arg0, %c1_i32 : i32
    %1 = arith.addi %0, %arg1 : i32
    %c0_i32 = arith.constant 0 : i32
    %c0_i32_0 = arith.constant 0 : i32
    return %1, %c0_i32 : i32, i32
  }
  func.func @transform_3(%arg0: i32, %arg1: i32) -> (i32, i32) {
    %c1_i32 = arith.constant 1 : i32
    %0 = arith.muli %arg0, %c1_i32 : i32
    %1 = arith.addi %0, %arg1 : i32
    %c0_i32 = arith.constant 0 : i32
    %c0_i32_0 = arith.constant 0 : i32
    return %1, %c0_i32 : i32, i32
  }
}

</mosaic_0001>

<llo_original>
// kernel: tpu_custom_call.1
$region0: #{tpu_custom_call.1}
  #allocation0 [shape = 'u32[]', space=smem, size = 0x4, offset = 0x4, fixed_abs, tag = 'smem constant byte address 0x4 - core index']
  #allocation1 [shape = 'u32[144,128]{1,0:T(1,128)}', space=vmem, size = 0x12000, scoped, tag = 'internal scratch']
  %s0 = inlined_call_operand.vmem [shape: f32[32,4], index: 0, kind: input, shape index: {}]
  %s1 = inlined_call_operand.hbm [shape: f32[128,256], index: 1, kind: input, shape index: {}]
  %s2 = inlined_call_operand.hbm [shape: f32[128,256], index: 2, kind: input, shape index: {}]
  %s3 = inlined_call_operand.hbm [shape: f32[128,256], index: 3, kind: output, shape index: {}]
  %s4 = sld [smem:[#allocation0]]
  $region53: #{tpu_custom_call.1} parent=0
    _
  %s6 = ssub.s32 1, %s4
  %s7 = scalar_select 0, %s6, %s4
  $region1: #{tpu_custom_call.1} parent=0
    #allocation2 [shape = 'u8[131072]{0}', space=vmem, size = 0x20000, scoped, tag = 'input window, operand 1']
    #allocation3 [shape = 's32[2]{0}', space=sflag, size = 0x8, scoped, tag = 'scoped memory for tpu_custom_call.1']
    #allocation4 [shape = 's32[2]{0}', space=sflag, size = 0x8, scoped, tag = 'scoped memory for tpu_custom_call.1']
    #allocation5 [shape = 'u8[131072]{0}', space=vmem, size = 0x20000, scoped, tag = 'input window, operand 2']
    #allocation6 [shape = 's32[2]{0}', space=sflag, size = 0x8, scoped, tag = 'scoped memory for tpu_custom_call.1']
    #allocation7 [shape = 'u8[131072]{0}', space=vmem, size = 0x20000, scoped, tag = 'output window, operand 0']
    %8 = vsyncpa [#allocation3], 0
    %s9 = scalar_lea.sflag [#allocation3], 1
    %10 = vsyncpa %s9, 0
    %11 = vsyncpa [#allocation6], 0
    %s12 = scalar_lea.sflag [#allocation6], 1
    %13 = vsyncpa %s12, 0
    %14 = vsyncpa [#allocation4], 0
    %s15 = scalar_lea.sflag [#allocation4], 1
    %16 = vsyncpa %s15, 0
    loop: start=0, step=1, limit=4
    $region2: #{tpu_custom_call.1} parent=1 // loop_pre_header
      _
    $region3: #{tpu_custom_call.1} parent=1 // loop_header
      %s18 = sphi 0, %s22
      %p19 = scmp.ge.s32.totalorder %s18, 4
      %s25 = sphi 0, %s37
      %s26 = sphi 0, %s33
      %s27 = sphi 0, %s25
      %s28 = sphi 0, %s26
      %s29 = sphi 0, %s27
      %s30 = sphi 0, %s28
      %s40 = sphi 0, %s42
      %s43 = sphi 0, %s40
      %s44 = sphi 0, %s43
      %s60 = sphi 0, %s44
      %s68 = sphi 0, %s70
      %s71 = sphi 0, %s68
      %s72 = sphi 0, %s71
      %s88 = sphi 0, %s72
      %s96 = sphi 0, %s98
      %s99 = sphi 0, %s96
      %s100 = sphi 0, %s99
      %s116 = sphi 0, %s100
      %s124 = sphi 0, %s126
      %s127 = sphi 0, %s124
      %s128 = sphi 0, %s127
      %s144 = sphi 0, %s128
    $region4: #{tpu_custom_call.1} parent=1 // loop_header_branch
      %21 = sbr.rel (%p19) target = $region8
    $region5: #{tpu_custom_call.1} parent=1 // loop_body
      %s23 = ssub.s32 %s18, 1
      %s24 = ssub.s32 %s18, 2
      %s31 = sadd.s32 1, %s26
      %p32 = scmp.ge.s32.totalorder %s31, 1
      %s33 = scalar_select %p32, 0, %s31
      %s34 = sadd.s32 1, %s25
      %s35 = scalar_select %p32, %s34, %s25
      %p36 = scmp.ge.s32.totalorder %s35, 2
      %s37 = scalar_select %p36, 0, %s35
      %s38 = ssub.s32 %s26, %s33
      %p39 = scmp.eq.s32.totalorder %s38, 0
      %s41 = sadd.s32 %s40, 1
      %s42 = scalar_select %p39, %s40, %s41
      %p45 = pneg %p39
      %p46 = scmp.eq.s32.totalorder %s18, 1
      %p47 = por %p45, %p46
      %p48 = scmp.ne.s32.totalorder %s40, %s43
      %p49 = scmp.eq.s32.totalorder %s18, 0
      %p50 = por %p48, %p49
      %p51 = scmp.ne.s32.totalorder %s40, %s43
      %p52 = scmp.eq.s32.totalorder %s23, 1
      %p53 = por %p51, %p52
      %p54 = scmp.ne.s32.totalorder %s43, %s44
      %p55 = scmp.eq.s32.totalorder %s23, 0
      %p56 = por %p54, %p55
      %p57 = scmp.ne.s32.totalorder %s43, %s44
      %p58 = scmp.eq.s32.totalorder %s24, 1
      %p59 = por %p57, %p58
      %p61 = scmp.ne.s32.totalorder %s44, %s60
      %p62 = scmp.eq.s32.totalorder %s24, 0
      %p63 = por %p61, %p62
      %s64 = sadd.s32 %s25, %s26
      %s65 = sadd.s32 %s37, %s33
      %s66 = ssub.s32 %s64, %s65
      %p67 = scmp.eq.s32.totalorder %s66, 0
      %s69 = sadd.s32 %s68, 1
      %s70 = scalar_select %p67, %s68, %s69
      %p73 = pneg %p67
      %p74 = scmp.eq.s32.totalorder %s18, 1
      %p75 = por %p73, %p74
      %p76 = scmp.ne.s32.totalorder %s68, %s71
      %p77 = scmp.eq.s32.totalorder %s18, 0
      %p78 = por %p76, %p77
      %p79 = scmp.ne.s32.totalorder %s68, %s71
      %p80 = scmp.eq.s32.totalorder %s23, 1
      %p81 = por %p79, %p80
      %p82 = scmp.ne.s32.totalorder %s71, %s72
      %p83 = scmp.eq.s32.totalorder %s23, 0
      %p84 = por %p82, %p83
      %p85 = scmp.ne.s32.totalorder %s71, %s72
      %p86 = scmp.eq.s32.totalorder %s24, 1
      %p87 = por %p85, %p86
      %p89 = scmp.ne.s32.totalorder %s72, %s88
      %p90 = scmp.eq.s32.totalorder %s24, 0
      %p91 = por %p89, %p90
      %s92 = sadd.s32 %s25, %s26
      %s93 = sadd.s32 %s37, %s33
      %s94 = ssub.s32 %s92, %s93
      %p95 = scmp.eq.s32.totalorder %s94, 0
      %s97 = sadd.s32 %s96, 1
      %s98 = scalar_select %p95, %s96, %s97
      %p101 = pneg %p95
      %p102 = scmp.eq.s32.totalorder %s18, 1
      %p103 = por %p101, %p102
      %p104 = scmp.ne.s32.totalorder %s96, %s99
      %p105 = scmp.eq.s32.totalorder %s18, 0
      %p106 = por %p104, %p105
      %p107 = scmp.ne.s32.totalorder %s96, %s99
      %p108 = scmp.eq.s32.totalorder %s23, 1
      %p109 = por %p107, %p108
      %p110 = scmp.ne.s32.totalorder %s99, %s100
      %p111 = scmp.eq.s32.totalorder %s23, 0
      %p112 = por %p110, %p111
      %p113 = scmp.ne.s32.totalorder %s99, %s100
      %p114 = scmp.eq.s32.totalorder %s24, 1
      %p115 = por %p113, %p114
      %p117 = scmp.ne.s32.totalorder %s100, %s116
      %p118 = scmp.eq.s32.totalorder %s24, 0
      %p119 = por %p117, %p118
      %s120 = sadd.s32 %s25, %s26
      %s121 = sadd.s32 %s37, %s33
      %s122 = ssub.s32 %s120, %s121
      %p123 = scmp.eq.s32.totalorder %s122, 0
      %s125 = sadd.s32 %s124, 1
      %s126 = scalar_select %p123, %s124, %s125
      %p129 = pneg %p123
      %p130 = scmp.eq.s32.totalorder %s18, 1
      %p131 = por %p129, %p130
      %p132 = scmp.ne.s32.totalorder %s124, %s127
      %p133 = scmp.eq.s32.totalorder %s18, 0
      %p134 = por %p132, %p133
      %p135 = scmp.ne.s32.totalorder %s124, %s127
      %p136 = scmp.eq.s32.totalorder %s23, 1
      %p137 = por %p135, %p136
      %p138 = scmp.ne.s32.totalorder %s127, %s128
      %p139 = scmp.eq.s32.totalorder %s23, 0
      %p140 = por %p138, %p139
      %p141 = scmp.ne.s32.totalorder %s127, %s128
      %p142 = scmp.eq.s32.totalorder %s24, 1
      %p143 = por %p141, %p142
      %p145 = scmp.ne.s32.totalorder %s128, %s144
      %p146 = scmp.eq.s32.totalorder %s24, 0
      %p147 = por %p145, %p146
      %p148 = scmp.le.s32.totalorder 1, %s18
      %p149 = scmp.lt.s32.totalorder %s18, 3
      %p150 = pnand %p148, %p149
      %p151 = pneg %p150
      // Predicated region
      $region9: #{tpu_custom_call.1} parent=5 // pred_check
        _
      $region10: #{tpu_custom_call.1} parent=5 // pred_check_branch
        %153 = sbr.rel (%p150) target = $region12
      $region11: #{tpu_custom_call.1} parent=5 // pred_region
        %s154 = ssub.s32 %s18, 1
        // Predicated region
        $region13: #{tpu_custom_call.1} parent=11 // pred_check
          %p155 = pneg %p56
        $region14: #{tpu_custom_call.1} parent=11 // pred_check_branch
          %157 = sbr.rel (%p155) target = $region16
        $region15: #{tpu_custom_call.1} parent=11 // pred_region
          %s158 = smul.u32 4, %s28
          %p159 = scmp.lt.s32.totalorder %s158, 3
          %s160 = scalar_select %p159, %s158, 3
          %s161 = smul.addr %s160, 8
          %s162 = scalar_lea.vmem %s0, %s161
          %s163 = smul.u32 4, %s28
        $region16: #{tpu_custom_call.1} parent=11 // pred_fallthru
          _
      $region12: #{tpu_custom_call.1} parent=5 // pred_fallthru
        _
      %p164 = scmp.lt.s32.totalorder %s18, 2
      // Predicated region
      $region17: #{tpu_custom_call.1} parent=5 // pred_check
        %p165 = pneg %p164
      $region18: #{tpu_custom_call.1} parent=5 // pred_check_branch
        %167 = sbr.rel (%p165) target = $region20
      $region19: #{tpu_custom_call.1} parent=5 // pred_region
        // Predicated region
        $region21: #{tpu_custom_call.1} parent=19 // pred_check
          %p168 = pneg %p78
        $region22: #{tpu_custom_call.1} parent=19 // pred_check_branch
          %170 = sbr.rel (%p168) target = $region24
        $region23: #{tpu_custom_call.1} parent=19 // pred_region
          %s171 = sand.u32 %s68, 1
          %s172 = scalar_lea.sflag [#allocation3], %s171
          %s173 = sand.u32 %s68, 1
          %s174 = smul.addr %s173, 128
          %s175 = scalar_lea.vmem [#allocation2], %s174
          %s176 = sadd.s32 %s25, %s26
          %s177 = smul.u32 8, %s176
          %s179 = ssub.s32 2048, 2048
          %180 = vsyncadd %s172, %s179
          %s181 = smul.addr %s177, 2
          %s182 = smul.addr %s181, 128
          %s183 = scalar_lea.hbm %s1, %s182
          %s184 = sshll.u32 %s175, 4
          %s185 = int_to_ptr.vmem [resolvable:$true] %s184
          %190 = dma.hbm_to_vmem [thread:$0]  %s183, 2048, %s185, %s172, 256, 256, 16
        $region24: #{tpu_custom_call.1} parent=19 // pred_fallthru
          _
        // Predicated region
        $region25: #{tpu_custom_call.1} parent=19 // pred_check
          %p191 = pneg %p106
        $region26: #{tpu_custom_call.1} parent=19 // pred_check_branch
          %193 = sbr.rel (%p191) target = $region28
        $region27: #{tpu_custom_call.1} parent=19 // pred_region
          %s194 = sand.u32 %s96, 1
          %s195 = scalar_lea.sflag [#allocation6], %s194
          %s196 = sand.u32 %s96, 1
          %s197 = smul.addr %s196, 128
          %s198 = scalar_lea.vmem [#allocation5], %s197
          %s199 = sadd.s32 %s25, %s26
          %s200 = smul.u32 8, %s199
          %s202 = ssub.s32 2048, 2048
          %203 = vsyncadd %s195, %s202
          %s204 = smul.addr %s200, 2
          %s205 = smul.addr %s204, 128
          %s206 = scalar_lea.hbm %s2, %s205
          %s207 = sshll.u32 %s198, 4
          %s208 = int_to_ptr.vmem [resolvable:$true] %s207
          %213 = dma.hbm_to_vmem [thread:$0]  %s206, 2048, %s208, %s195, 256, 256, 16
        $region28: #{tpu_custom_call.1} parent=19 // pred_fallthru
          _
      $region20: #{tpu_custom_call.1} parent=5 // pred_fallthru
        _
      %p214 = scmp.le.s32.totalorder 1, %s18
      %p215 = scmp.lt.s32.totalorder %s18, 3
      %p216 = pnand %p214, %p215
      %p217 = pneg %p216
      // Predicated region
      $region29: #{tpu_custom_call.1} parent=5 // pred_check
        _
      $region30: #{tpu_custom_call.1} parent=5 // pred_check_branch
        %219 = sbr.rel (%p216) target = $region32
      $region31: #{tpu_custom_call.1} parent=5 // pred_region
        %s220 = ssub.s32 %s18, 1
        %s221 = sand.u32 %s71, 1
        %s222 = scalar_lea.sflag [#allocation3], %s221
        %s223 = sand.u32 %s71, 1
        %s224 = smul.addr %s223, 128
        %s225 = scalar_lea.vmem [#allocation2], %s224
        // Predicated region
        $region33: #{tpu_custom_call.1} parent=31 // pred_check
          %p226 = pneg %p84
        $region34: #{tpu_custom_call.1} parent=31 // pred_check_branch
          %228 = sbr.rel (%p226) target = $region36
        $region35: #{tpu_custom_call.1} parent=31 // pred_region
          %229 = dma.done %s222, 2048
        $region36: #{tpu_custom_call.1} parent=31 // pred_fallthru
          _
        %s230 = sand.u32 %s99, 1
        %s231 = scalar_lea.sflag [#allocation6], %s230
        %s232 = sand.u32 %s99, 1
        %s233 = smul.addr %s232, 128
        %s234 = scalar_lea.vmem [#allocation5], %s233
        // Predicated region
        $region37: #{tpu_custom_call.1} parent=31 // pred_check
          %p235 = pneg %p112
        $region38: #{tpu_custom_call.1} parent=31 // pred_check_branch
          %237 = sbr.rel (%p235) target = $region40
        $region39: #{tpu_custom_call.1} parent=31 // pred_region
          %238 = dma.done %s231, 2048
        $region40: #{tpu_custom_call.1} parent=31 // pred_fallthru
          _
        %s239 = smul.u32 4, %s28
        %p240 = scmp.lt.s32.totalorder %s239, 3
        %s241 = scalar_select %p240, %s239, 3
        %s242 = smul.addr %s241, 8
        %s243 = scalar_lea.vmem %s0, %s242
        %p244 = pneg %p56
        %p245 = pneg %p53
        %s246 = sand.u32 %s71, 1
        %s247 = scalar_lea.sflag [#allocation3], %s246
        %s248 = sand.u32 %s71, 1
        %s249 = smul.addr %s248, 128
        %s250 = scalar_lea.vmem [#allocation2], %s249
        %p251 = pneg %p84
        %p252 = pneg %p81
        %s253 = sand.u32 %s99, 1
        %s254 = scalar_lea.sflag [#allocation6], %s253
        %s255 = sand.u32 %s99, 1
        %s256 = smul.addr %s255, 128
        %s257 = scalar_lea.vmem [#allocation5], %s256
        %p258 = pneg %p112
        %p259 = pneg %p109
        %p260 = pneg %p140
        %p261 = pneg %p137
        %s262 = sand.u32 %s127, 1
        %s263 = scalar_lea.sflag [#allocation4], %s262
        %s264 = sand.u32 %s127, 1
        %s265 = smul.addr %s264, 128
        %s266 = scalar_lea.vmem [#allocation7], %s265
        %s267 = smul.u32 4, %s28
        %p268 = scmp.lt.s32.totalorder %s267, 3
        %s269 = scalar_select %p268, %s267, 3
        %s270 = smul.addr %s269, 8
        %s271 = scalar_lea.vmem %s0, %s270
        %s272 = smul.u32 4, %s28
        %s273 = sadd.s32 %s27, %s28
        %s274 = smul.u32 8, %s273
        %s275 = sadd.s32 %s27, %s28
        %s276 = smul.u32 8, %s275
        %s277 = sadd.s32 %s27, %s28
        %s278 = smul.u32 8, %s277
        %v279 = vld [vmem:[%s225] sm:$0xff]
        %v280 = vld [vmem:[%s225 + $0x8] sm:$0xff]
        %v281 = vld [vmem:[%s225 + $0x10] sm:$0xff]
        %v282 = vld [vmem:[%s225 + $0x18] sm:$0xff]
        %v283 = vld [vmem:[%s225 + $0x20] sm:$0xff]
        %v284 = vld [vmem:[%s225 + $0x28] sm:$0xff]
        %v285 = vld [vmem:[%s225 + $0x30] sm:$0xff]
        %v286 = vld [vmem:[%s225 + $0x38] sm:$0xff]
        %v287 = vld [vmem:[%s225 + $0x40] sm:$0xff]
        %v288 = vld [vmem:[%s225 + $0x48] sm:$0xff]
        %v289 = vld [vmem:[%s225 + $0x50] sm:$0xff]
        %v290 = vld [vmem:[%s225 + $0x58] sm:$0xff]
        %v291 = vld [vmem:[%s225 + $0x60] sm:$0xff]
        %v292 = vld [vmem:[%s225 + $0x68] sm:$0xff]
        %v293 = vld [vmem:[%s225 + $0x70] sm:$0xff]
        %v294 = vld [vmem:[%s225 + $0x78] sm:$0xff]
        %v295 = vld [vmem:[%s234] sm:$0xff]
        %v296 = vld [vmem:[%s234 + $0x8] sm:$0xff]
        %v297 = vld [vmem:[%s234 + $0x10] sm:$0xff]
        %v298 = vld [vmem:[%s234 + $0x18] sm:$0xff]
        %v299 = vld [vmem:[%s234 + $0x20] sm:$0xff]
        %v300 = vld [vmem:[%s234 + $0x28] sm:$0xff]
        %v301 = vld [vmem:[%s234 + $0x30] sm:$0xff]
        %v302 = vld [vmem:[%s234 + $0x38] sm:$0xff]
        %v303 = vld [vmem:[%s234 + $0x40] sm:$0xff]
        %v304 = vld [vmem:[%s234 + $0x48] sm:$0xff]
        %v305 = vld [vmem:[%s234 + $0x50] sm:$0xff]
        %v306 = vld [vmem:[%s234 + $0x58] sm:$0xff]
        %v307 = vld [vmem:[%s234 + $0x60] sm:$0xff]
        %v308 = vld [vmem:[%s234 + $0x68] sm:$0xff]
        %v309 = vld [vmem:[%s234 + $0x70] sm:$0xff]
        %v310 = vld [vmem:[%s234 + $0x78] sm:$0xff]
        %v311 = vlaneseq
        %v312 = vshrl.u32 %v311, 7
        %v313 = vadd.s32 %v312, 8
        %v314 = vadd.s32 %v312, 16
        %v315 = vadd.s32 %v312, 24
        %v316 = vlaneseq
        %v317 = vand.u32 %v316, 127
        %v318 = vmul.u32 %v312, 2
        %v319 = vmul.u32 %v313, 2
        %v320 = vmul.u32 %v314, 2
        %v321 = vmul.u32 %v315, 2
        %vm322 = vcmp.ge.s32.totalorder %v317, %v318
        %vm323 = vcmp.ge.s32.totalorder %v317, %v319
        %vm324 = vcmp.ge.s32.totalorder %v317, %v320
        %vm325 = vcmp.ge.s32.totalorder %v317, %v321
        %v326 = vadd.s32 %v312, 1
        %v327 = vadd.s32 %v313, 1
        %v328 = vadd.s32 %v314, 1
        %v329 = vadd.s32 %v315, 1
        %v330 = vmul.u32 %v326, 2
        %v331 = vmul.u32 %v327, 2
        %v332 = vmul.u32 %v328, 2
        %v333 = vmul.u32 %v329, 2
        %vm334 = vcmp.lt.s32.totalorder %v317, %v330
        %vm335 = vcmp.lt.s32.totalorder %v317, %v331
        %vm336 = vcmp.lt.s32.totalorder %v317, %v332
        %vm337 = vcmp.lt.s32.totalorder %v317, %v333
        %vm338 = vmand %vm322, %vm334
        %vm339 = vmand %vm323, %vm335
        %vm340 = vmand %vm324, %vm336
        %vm341 = vmand %vm325, %vm337
        %v342 = vsel %vm338, 1, 0
        %v343 = vsel %vm339, 1, 0
        %v344 = vsel %vm340, 1, 0
        %v345 = vsel %vm341, 1, 0
        %v346 = vcvt.s32.f32 %v342
        %v347 = vcvt.s32.f32 %v343
        %v348 = vcvt.s32.f32 %v344
        %v349 = vcvt.s32.f32 %v345
        %v350 = vadd.s32 %v312, 32
        %v351 = vadd.s32 %v312, 40
        %v352 = vadd.s32 %v312, 48
        %v353 = vadd.s32 %v312, 56
        %v354 = vmul.u32 %v317, 2
        %vm355 = vcmp.ge.s32.totalorder %v312, %v354
        %vm356 = vcmp.ge.s32.totalorder %v313, %v354
        %vm357 = vcmp.ge.s32.totalorder %v314, %v354
        %vm358 = vcmp.ge.s32.totalorder %v315, %v354
        %vm359 = vcmp.ge.s32.totalorder %v350, %v354
        %vm360 = vcmp.ge.s32.totalorder %v351, %v354
        %vm361 = vcmp.ge.s32.totalorder %v352, %v354
        %vm362 = vcmp.ge.s32.totalorder %v353, %v354
        %v363 = vadd.s32 %v317, 1
        %v364 = vmul.u32 %v363, 2
        %vm365 = vcmp.lt.s32.totalorder %v312, %v364
        %vm366 = vcmp.lt.s32.totalorder %v313, %v364
        %vm367 = vcmp.lt.s32.totalorder %v314, %v364
        %vm368 = vcmp.lt.s32.totalorder %v315, %v364
        %vm369 = vcmp.lt.s32.totalorder %v350, %v364
        %vm370 = vcmp.lt.s32.totalorder %v351, %v364
        %vm371 = vcmp.lt.s32.totalorder %v352, %v364
        %vm372 = vcmp.lt.s32.totalorder %v353, %v364
        %vm373 = vmand %vm355, %vm365
        %vm374 = vmand %vm356, %vm366
        %vm375 = vmand %vm357, %vm367
        %vm376 = vmand %vm358, %vm368
        %vm377 = vmand %vm359, %vm369
        %vm378 = vmand %vm360, %vm370
        %vm379 = vmand %vm361, %vm371
        %vm380 = vmand %vm362, %vm372
        %v381 = vsel %vm373, 1, 0
        %v382 = vsel %vm374, 1, 0
        %v383 = vsel %vm375, 1, 0
        %v384 = vsel %vm376, 1, 0
        %v385 = vsel %vm377, 1, 0
        %v386 = vsel %vm378, 1, 0
        %v387 = vsel %vm379, 1, 0
        %v388 = vsel %vm380, 1, 0
        %v389 = vcvt.s32.f32 %v381
        %v390 = vcvt.s32.f32 %v382
        %v391 = vcvt.s32.f32 %v383
        %v392 = vcvt.s32.f32 %v384
        %v393 = vcvt.s32.f32 %v385
        %v394 = vcvt.s32.f32 %v386
        %v395 = vcvt.s32.f32 %v387
        %v396 = vcvt.s32.f32 %v388
        %v397 = vld [vmem:[%s271] sm:$0xff]
        %v398 = vld [vmem:[%s271 + $0x8] sm:$0xff]
        %v399 = vld [vmem:[%s271 + $0x10] sm:$0xff]
        %v400 = vld [vmem:[%s271 + $0x18] sm:$0xff]
        %v401 = vadd.f32 %v279, %v280
        %402 = vadd.xlane.f32.xlu0 %v401
        %v403 = vpop.xlane.xlu0 %402
        %v404 = vadd.f32 %v281, %v282
        %405 = vadd.xlane.f32.xlu0 %v404
        %v406 = vpop.xlane.xlu0 %405
        %v407 = vadd.f32 %v283, %v284
        %408 = vadd.xlane.f32.xlu0 %v407
        %v409 = vpop.xlane.xlu0 %408
        %v410 = vadd.f32 %v285, %v286
        %411 = vadd.xlane.f32.xlu0 %v410
        %v412 = vpop.xlane.xlu0 %411
        %v413 = vadd.f32 %v287, %v288
        %414 = vadd.xlane.f32.xlu0 %v413
        %v415 = vpop.xlane.xlu0 %414
        %v416 = vadd.f32 %v289, %v290
        %417 = vadd.xlane.f32.xlu0 %v416
        %v418 = vpop.xlane.xlu0 %417
        %v419 = vadd.f32 %v291, %v292
        %420 = vadd.xlane.f32.xlu0 %v419
        %v421 = vpop.xlane.xlu0 %420
        %v422 = vadd.f32 %v293, %v294
        %423 = vadd.xlane.f32.xlu0 %v422
        %v424 = vpop.xlane.xlu0 %423
        %v425 = vrcp.pop 256.0
        %v426 = vmul.f32 %v403, %v425
        %v427 = vmul.f32 %v406, %v425
        %v428 = vmul.f32 %v409, %v425
        %v429 = vmul.f32 %v412, %v425
        %v430 = vmul.f32 %v415, %v425
        %v431 = vmul.f32 %v418, %v425
        %v432 = vmul.f32 %v421, %v425
        %v433 = vmul.f32 %v424, %v425
        %v434 = vmul.f32 %v279, %v426
        %v435 = vmul.f32 %v280, %v426
        %v436 = vmul.f32 %v281, %v427
        %v437 = vmul.f32 %v282, %v427
        %v438 = vmul.f32 %v283, %v428
        %v439 = vmul.f32 %v284, %v428
        %v440 = vmul.f32 %v285, %v429
        %v441 = vmul.f32 %v286, %v429
        %v442 = vmul.f32 %v287, %v430
        %v443 = vmul.f32 %v288, %v430
        %v444 = vmul.f32 %v289, %v431
        %v445 = vmul.f32 %v290, %v431
        %v446 = vmul.f32 %v291, %v432
        %v447 = vmul.f32 %v292, %v432
        %v448 = vmul.f32 %v293, %v433
        %v449 = vmul.f32 %v294, %v433
        %vm450 = vcmask 523264
        %v452 = vsel %vm450, %v346, 0
        %v455 = vsel %vm450, %v347, 0
        %v458 = vsel %vm450, %v348, 0
        %v461 = vsel %vm450, %v349, 0
        %v463 = vand.u32 %v435, 4294901760
        %464 = vmatprep.subr.mxu0 %v463
        %v465 = vand.u32 %v434, 4294901760
        %466 = vmatpush1.msra.mxu0 %v465
        %v467 = vand.u32 %v437, 4294901760
        %468 = vmatprep.subr.mxu0 %v467
        %v469 = vand.u32 %v436, 4294901760
        %470 = vmatpush1.msra.mxu0 %v469
        %v471 = vand.u32 %v439, 4294901760
        %472 = vmatprep.subr.mxu0 %v471
        %v473 = vand.u32 %v438, 4294901760
        %474 = vmatpush1.msra.mxu0 %v473
        %v475 = vand.u32 %v441, 4294901760
        %476 = vmatprep.subr.mxu0 %v475
        %v477 = vand.u32 %v440, 4294901760
        %478 = vmatpush1.msra.mxu0 %v477
        %v479 = vand.u32 %v443, 4294901760
        %480 = vmatprep.subr.mxu0 %v479
        %v481 = vand.u32 %v442, 4294901760
        %482 = vmatpush1.msra.mxu0 %v481
        %v483 = vand.u32 %v445, 4294901760
        %484 = vmatprep.subr.mxu0 %v483
        %v485 = vand.u32 %v444, 4294901760
        %486 = vmatpush1.msra.mxu0 %v485
        %v487 = vand.u32 %v447, 4294901760
        %488 = vmatprep.subr.mxu0 %v487
        %v489 = vand.u32 %v446, 4294901760
        %490 = vmatpush1.msra.mxu0 %v489
        %v491 = vand.u32 %v449, 4294901760
        %492 = vmatprep.subr.mxu0 %v491
        %v493 = vand.u32 %v448, 4294901760
        %494 = vmatpush1.msra.mxu0 %v493
        %495 = vmatprep.subr.mxu0 0.0
        %496 = vmatpush1.msra.mxu0 0.0
        %497 = vmatprep.subr.mxu0 0.0
        %498 = vmatpush1.msra.mxu0 0.0
        %499 = vmatprep.subr.mxu0 0.0
        %500 = vmatpush1.msra.mxu0 0.0
        %501 = vmatprep.subr.mxu0 0.0
        %502 = vmatpush1.msra.mxu0 0.0
        %503 = vmatprep.subr.mxu0 0.0
        %504 = vmatpush1.msra.mxu0 0.0
        %505 = vmatprep.subr.mxu0 0.0
        %506 = vmatpush1.msra.mxu0 0.0
        %507 = vmatprep.subr.mxu0 0.0
        %508 = vmatpush1.msra.mxu0 0.0
        %509 = vmatprep.subr.mxu0 0.0
        %510 = vmatpush1.msra.mxu0 0.0
        %511 = vmatprep.subr.mxu0 0.0
        %512 = vmatpush1.msra.mxu0 0.0
        %513 = vmatprep.subr.mxu0 0.0
        %514 = vmatpush1.msra.mxu0 0.0
        %515 = vmatprep.subr.mxu0 0.0
        %516 = vmatpush1.msra.mxu0 0.0
        %517 = vmatprep.subr.mxu0 0.0
        %518 = vmatpush1.msra.mxu0 0.0
        %519 = vmatprep.subr.mxu0 0.0
        %520 = vmatpush1.msra.mxu0 0.0
        %521 = vmatprep.subr.mxu0 0.0
        %522 = vmatpush1.msra.mxu0 0.0
        %523 = vmatprep.subr.mxu0 0.0
        %524 = vmatpush1.msra.mxu0 0.0
        %525 = vmatprep.subr.mxu0 0.0
        %526 = vmatpush1.msra.mxu0 0.0
        %527 = vmatprep.subr.mxu0 0.0
        %528 = vmatpush1.msra.mxu0 0.0
        %529 = vmatprep.subr.mxu0 0.0
        %530 = vmatpush1.msra.mxu0 0.0
        %531 = vmatprep.subr.mxu0 0.0
        %532 = vmatpush1.msra.mxu0 0.0
        %533 = vmatprep.subr.mxu0 0.0
        %534 = vmatpush1.msra.mxu0 0.0
        %535 = vmatprep.subr.mxu0 0.0
        %536 = vmatpush1.msra.mxu0 0.0
        %537 = vmatprep.subr.mxu0 0.0
        %538 = vmatpush1.msra.mxu0 0.0
        %539 = vmatprep.subr.mxu0 0.0
        %540 = vmatpush1.msra.mxu0 0.0
        %541 = vmatprep.subr.mxu0 0.0
        %542 = vmatpush1.msra.mxu0 0.0
        %543 = vmatprep.mubr.f32.mxu0 0.0
        %v544 = vand.u32 %v452, 4294901760
        %v545 = vsub.f32 %v452, %v544
        %v546 = vand.u32 %v545, 4294901760
        %v547 = vsub.f32 %v545, %v546
        %v548 = vand.u32 %v547, 4294901760
        %549 = vmatmul.mubr.f32.gmra.mrb[0].mxu0 %v548
        %v550 = vpop.f32.mrb[0].mxu0
        %v551 = vadd.f32 0.0, %v550
        %v552 = vpop.f32.mrb[0].mxu0
        %v553 = vadd.f32 0.0, %v552
        %554 = vmatprep.mubr.f32.mxu0 0.0
        %v555 = vand.u32 %v455, 4294901760
        %v556 = vsub.f32 %v455, %v555
        %v557 = vand.u32 %v556, 4294901760
        %v558 = vsub.f32 %v556, %v557
        %v559 = vand.u32 %v558, 4294901760
        %560 = vmatmul.mubr.f32.gmra.mrb[0].mxu0 %v559
        %v561 = vpop.f32.mrb[0].mxu0
        %v562 = vadd.f32 0.0, %v561
        %v563 = vpop.f32.mrb[0].mxu0
        %v564 = vadd.f32 0.0, %v563
        %565 = vmatprep.mubr.f32.mxu0 0.0
        %v566 = vand.u32 %v458, 4294901760
        %v567 = vsub.f32 %v458, %v566
        %v568 = vand.u32 %v567, 4294901760
        %v569 = vsub.f32 %v567, %v568
        %v570 = vand.u32 %v569, 4294901760
        %571 = vmatmul.mubr.f32.gmra.mrb[0].mxu0 %v570
        %v572 = vpop.f32.mrb[0].mxu0
        %v573 = vadd.f32 0.0, %v572
        %v574 = vpop.f32.mrb[0].mxu0
        %v575 = vadd.f32 0.0, %v574
        %576 = vmatprep.mubr.f32.mxu0 0.0
        %v577 = vand.u32 %v461, 4294901760
        %v578 = vsub.f32 %v461, %v577
        %v579 = vand.u32 %v578, 4294901760
        %v580 = vsub.f32 %v578, %v579
        %v581 = vand.u32 %v580, 4294901760
        %582 = vmatmul.mubr.f32.gmra.mrb[0].mxu0 %v581
        %v583 = vpop.f32.mrb[0].mxu0
        %v584 = vadd.f32 0.0, %v583
        %v585 = vpop.f32.mrb[0].mxu0
        %v586 = vadd.f32 0.0, %v585
        %587 = vdwg.mxu0
        %v588 = vand.u32 %v435, 4294901760
        %v589 = vsub.f32 %v435, %v588
        %v590 = vand.u32 %v589, 4294901760
        %v591 = vsub.f32 %v589, %v590
        %v592 = vand.u32 %v591, 4294901760
        %593 = vmatprep.subr.mxu0 %v592
        %v594 = vand.u32 %v434, 4294901760
        %v595 = vsub.f32 %v434, %v594
        %v596 = vand.u32 %v595, 4294901760
        %v597 = vsub.f32 %v595, %v596
        %v598 = vand.u32 %v597, 4294901760
        %599 = vmatpush1.msra.mxu0 %v598
        %v600 = vand.u32 %v437, 4294901760
        %v601 = vsub.f32 %v437, %v600
        %v602 = vand.u32 %v601, 4294901760
        %v603 = vsub.f32 %v601, %v602
        %v604 = vand.u32 %v603, 4294901760
        %605 = vmatprep.subr.mxu0 %v604
        %v606 = vand.u32 %v436, 4294901760
        %v607 = vsub.f32 %v436, %v606
        %v608 = vand.u32 %v607, 4294901760
        %v609 = vsub.f32 %v607, %v608
        %v610 = vand.u32 %v609, 4294901760
        %611 = vmatpush1.msra.mxu0 %v610
        %v612 = vand.u32 %v439, 4294901760
        %v613 = vsub.f32 %v439, %v612
        %v614 = vand.u32 %v613, 4294901760
        %v615 = vsub.f32 %v613, %v614
        %v616 = vand.u32 %v615, 4294901760
        %617 = vmatprep.subr.mxu0 %v616
        %v618 = vand.u32 %v438, 4294901760
        %v619 = vsub.f32 %v438, %v618
        %v620 = vand.u32 %v619, 4294901760
        %v621 = vsub.f32 %v619, %v620
        %v622 = vand.u32 %v621, 4294901760
        %623 = vmatpush1.msra.mxu0 %v622
        %v624 = vand.u32 %v441, 4294901760
        %v625 = vsub.f32 %v441, %v624
        %v626 = vand.u32 %v625, 4294901760
        %v627 = vsub.f32 %v625, %v626
        %v628 = vand.u32 %v627, 4294901760
        %629 = vmatprep.subr.mxu0 %v628
        %v630 = vand.u32 %v440, 4294901760
        %v631 = vsub.f32 %v440, %v630
        %v632 = vand.u32 %v631, 4294901760
        %v633 = vsub.f32 %v631, %v632
        %v634 = vand.u32 %v633, 4294901760
        %635 = vmatpush1.msra.mxu0 %v634
        %v636 = vand.u32 %v443, 4294901760
        %v637 = vsub.f32 %v443, %v636
        %v638 = vand.u32 %v637, 4294901760
        %v639 = vsub.f32 %v637, %v638
        %v640 = vand.u32 %v639, 4294901760
        %641 = vmatprep.subr.mxu0 %v640
        %v642 = vand.u32 %v442, 4294901760
        %v643 = vsub.f32 %v442, %v642
        %v644 = vand.u32 %v643, 4294901760
        %v645 = vsub.f32 %v643, %v644
        %v646 = vand.u32 %v645, 4294901760
        %647 = vmatpush1.msra.mxu0 %v646
        %v648 = vand.u32 %v445, 4294901760
        %v649 = vsub.f32 %v445, %v648
        %v650 = vand.u32 %v649, 4294901760
        %v651 = vsub.f32 %v649, %v650
        %v652 = vand.u32 %v651, 4294901760
        %653 = vmatprep.subr.mxu0 %v652
        %v654 = vand.u32 %v444, 4294901760
        %v655 = vsub.f32 %v444, %v654
        %v656 = vand.u32 %v655, 4294901760
        %v657 = vsub.f32 %v655, %v656
        %v658 = vand.u32 %v657, 4294901760
        %659 = vmatpush1.msra.mxu0 %v658
        %v660 = vand.u32 %v447, 4294901760
        %v661 = vsub.f32 %v447, %v660
        %v662 = vand.u32 %v661, 4294901760
        %v663 = vsub.f32 %v661, %v662
        %v664 = vand.u32 %v663, 4294901760
        %665 = vmatprep.subr.mxu0 %v664
        %v666 = vand.u32 %v446, 4294901760
        %v667 = vsub.f32 %v446, %v666
        %v668 = vand.u32 %v667, 4294901760
        %v669 = vsub.f32 %v667, %v668
        %v670 = vand.u32 %v669, 4294901760
        %671 = vmatpush1.msra.mxu0 %v670
        %v672 = vand.u32 %v449, 4294901760
        %v673 = vsub.f32 %v449, %v672
        %v674 = vand.u32 %v673, 4294901760
        %v675 = vsub.f32 %v673, %v674
        %v676 = vand.u32 %v675, 4294901760
        %677 = vmatprep.subr.mxu0 %v676
        %v678 = vand.u32 %v448, 4294901760
        %v679 = vsub.f32 %v448, %v678
        %v680 = vand.u32 %v679, 4294901760
        %v681 = vsub.f32 %v679, %v680
        %v682 = vand.u32 %v681, 4294901760
        %683 = vmatpush1.msra.mxu0 %v682
        %684 = vmatprep.subr.mxu0 0.0
        %685 = vmatpush1.msra.mxu0 0.0
        %686 = vmatprep.subr.mxu0 0.0
        %687 = vmatpush1.msra.mxu0 0.0
        %688 = vmatprep.subr.mxu0 0.0
        %689 = vmatpush1.msra.mxu0 0.0
        %690 = vmatprep.subr.mxu0 0.0
        %691 = vmatpush1.msra.mxu0 0.0
        %692 = vmatprep.subr.mxu0 0.0
        %693 = vmatpush1.msra.mxu0 0.0
        %694 = vmatprep.subr.mxu0 0.0
        %695 = vmatpush1.msra.mxu0 0.0
        %696 = vmatprep.subr.mxu0 0.0
        %697 = vmatpush1.msra.mxu0 0.0
        %698 = vmatprep.subr.mxu0 0.0
        %699 = vmatpush1.msra.mxu0 0.0
        %700 = vmatprep.subr.mxu0 0.0
        %701 = vmatpush1.msra.mxu0 0.0
        %702 = vmatprep.subr.mxu0 0.0
        %703 = vmatpush1.msra.mxu0 0.0
        %704 = vmatprep.subr.mxu0 0.0
        %705 = vmatpush1.msra.mxu0 0.0
        %706 = vmatprep.subr.mxu0 0.0
        %707 = vmatpush1.msra.mxu0 0.0
        %708 = vmatprep.subr.mxu0 0.0
        %709 = vmatpush1.msra.mxu0 0.0
        %710 = vmatprep.subr.mxu0 0.0
        %711 = vmatpush1.msra.mxu0 0.0
        %712 = vmatprep.subr.mxu0 0.0
        %713 = vmatpush1.msra.mxu0 0.0
        %714 = vmatprep.subr.mxu0 0.0
        %715 = vmatpush1.msra.mxu0 0.0
        %716 = vmatprep.subr.mxu0 0.0
        %717 = vmatpush1.msra.mxu0 0.0
        %718 = vmatprep.subr.mxu0 0.0
        %719 = vmatpush1.msra.mxu0 0.0
        %720 = vmatprep.subr.mxu0 0.0
        %721 = vmatpush1.msra.mxu0 0.0
        %722 = vmatprep.subr.mxu0 0.0
        %723 = vmatpush1.msra.mxu0 0.0
        %724 = vmatprep.subr.mxu0 0.0
        %725 = vmatpush1.msra.mxu0 0.0
        %726 = vmatprep.subr.mxu0 0.0
        %727 = vmatpush1.msra.mxu0 0.0
        %728 = vmatprep.subr.mxu0 0.0
        %729 = vmatpush1.msra.mxu0 0.0
        %730 = vmatprep.subr.mxu0 0.0
        %731 = vmatpush1.msra.mxu0 0.0
        %732 = vmatprep.mubr.f32.mxu0 0.0
        %v733 = vand.u32 %v452, 4294901760
        %734 = vmatmul.mubr.f32.gmra.mrb[0].mxu0 %v733
        %v735 = vpop.f32.mrb[0].mxu0
        %v736 = vadd.f32 %v551, %v735
        %v737 = vpop.f32.mrb[0].mxu0
        %v738 = vadd.f32 %v553, %v737
        %739 = vmatprep.mubr.f32.mxu0 0.0
        %v740 = vand.u32 %v455, 4294901760
        %741 = vmatmul.mubr.f32.gmra.mrb[0].mxu0 %v740
        %v742 = vpop.f32.mrb[0].mxu0
        %v743 = vadd.f32 %v562, %v742
        %v744 = vpop.f32.mrb[0].mxu0
        %v745 = vadd.f32 %v564, %v744
        %746 = vmatprep.mubr.f32.mxu0 0.0
        %v747 = vand.u32 %v458, 4294901760
        %748 = vmatmul.mubr.f32.gmra.mrb[0].mxu0 %v747
        %v749 = vpop.f32.mrb[0].mxu0
        %v750 = vadd.f32 %v573, %v749
        %v751 = vpop.f32.mrb[0].mxu0
        %v752 = vadd.f32 %v575, %v751
        %753 = vmatprep.mubr.f32.mxu0 0.0
        %v754 = vand.u32 %v461, 4294901760
        %755 = vmatmul.mubr.f32.gmra.mrb[0].mxu0 %v754
        %v756 = vpop.f32.mrb[0].mxu0
        %v757 = vadd.f32 %v584, %v756
        %v758 = vpop.f32.mrb[0].mxu0
        %v759 = vadd.f32 %v586, %v758
        %760 = vdwg.mxu0
        %v761 = vand.u32 %v435, 4294901760
        %v762 = vsub.f32 %v435, %v761
        %763 = vmatprep.subr.mxu0 %v762
        %v764 = vand.u32 %v434, 4294901760
        %v765 = vsub.f32 %v434, %v764
        %766 = vmatpush1.msra.mxu0 %v765
        %v767 = vand.u32 %v437, 4294901760
        %v768 = vsub.f32 %v437, %v767
        %769 = vmatprep.subr.mxu0 %v768
        %v770 = vand.u32 %v436, 4294901760
        %v771 = vsub.f32 %v436, %v770
        %772 = vmatpush1.msra.mxu0 %v771
        %v773 = vand.u32 %v439, 4294901760
        %v774 = vsub.f32 %v439, %v773
        %775 = vmatprep.subr.mxu0 %v774
        %v776 = vand.u32 %v438, 4294901760
        %v777 = vsub.f32 %v438, %v776
        %778 = vmatpush1.msra.mxu0 %v777
        %v779 = vand.u32 %v441, 4294901760
        %v780 = vsub.f32 %v441, %v779
        %781 = vmatprep.subr.mxu0 %v780
        %v782 = vand.u32 %v440, 4294901760
        %v783 = vsub.f32 %v440, %v782
        %784 = vmatpush1.msra.mxu0 %v783
        %v785 = vand.u32 %v443, 4294901760
        %v786 = vsub.f32 %v443, %v785
        %787 = vmatprep.subr.mxu0 %v786
        %v788 = vand.u32 %v442, 4294901760
        %v789 = vsub.f32 %v442, %v788
        %790 = vmatpush1.msra.mxu0 %v789
        %v791 = vand.u32 %v445, 4294901760
        %v792 = vsub.f32 %v445, %v791
        %793 = vmatprep.subr.mxu0 %v792
        %v794 = vand.u32 %v444, 4294901760
        %v795 = vsub.f32 %v444, %v794
        %796 = vmatpush1.msra.mxu0 %v795
        %v797 = vand.u32 %v447, 4294901760
        %v798 = vsub.f32 %v447, %v797
        %799 = vmatprep.subr.mxu0 %v798
        %v800 = vand.u32 %v446, 4294901760
        %v801 = vsub.f32 %v446, %v800
        %802 = vmatpush1.msra.mxu0 %v801
        %v803 = vand.u32 %v449, 4294901760
        %v804 = vsub.f32 %v449, %v803
        %805 = vmatprep.subr.mxu0 %v804
        %v806 = vand.u32 %v448, 4294901760
        %v807 = vsub.f32 %v448, %v806
        %808 = vmatpush1.msra.mxu0 %v807
        %809 = vmatprep.subr.mxu0 0.0
        %810 = vmatpush1.msra.mxu0 0.0
        %811 = vmatprep.subr.mxu0 0.0
        %812 = vmatpush1.msra.mxu0 0.0
        %813 = vmatprep.subr.mxu0 0.0
        %814 = vmatpush1.msra.mxu0 0.0
        %815 = vmatprep.subr.mxu0 0.0
        %816 = vmatpush1.msra.mxu0 0.0
        %817 = vmatprep.subr.mxu0 0.0
        %818 = vmatpush1.msra.mxu0 0.0
        %819 = vmatprep.subr.mxu0 0.0
        %820 = vmatpush1.msra.mxu0 0.0
        %821 = vmatprep.subr.mxu0 0.0
        %822 = vmatpush1.msra.mxu0 0.0
        %823 = vmatprep.subr.mxu0 0.0
        %824 = vmatpush1.msra.mxu0 0.0
        %825 = vmatprep.subr.mxu0 0.0
        %826 = vmatpush1.msra.mxu0 0.0
        %827 = vmatprep.subr.mxu0 0.0
        %828 = vmatpush1.msra.mxu0 0.0
        %829 = vmatprep.subr.mxu0 0.0
        %830 = vmatpush1.msra.mxu0 0.0
        %831 = vmatprep.subr.mxu0 0.0
        %832 = vmatpush1.msra.mxu0 0.0
        %833 = vmatprep.subr.mxu0 0.0
        %834 = vmatpush1.msra.mxu0 0.0
        %835 = vmatprep.subr.mxu0 0.0
        %836 = vmatpush1.msra.mxu0 0.0
        %837 = vmatprep.subr.mxu0 0.0
        %838 = vmatpush1.msra.mxu0 0.0
        %839 = vmatprep.subr.mxu0 0.0
        %840 = vmatpush1.msra.mxu0 0.0
        %841 = vmatprep.subr.mxu0 0.0
        %842 = vmatpush1.msra.mxu0 0.0
        %843 = vmatprep.subr.mxu0 0.0
        %844 = vmatpush1.msra.mxu0 0.0
        %845 = vmatprep.subr.mxu0 0.0
        %846 = vmatpush1.msra.mxu0 0.0
        %847 = vmatprep.subr.mxu0 0.0
        %848 = vmatpush1.msra.mxu0 0.0
        %849 = vmatprep.subr.mxu0 0.0
        %850 = vmatpush1.msra.mxu0 0.0
        %851 = vmatprep.subr.mxu0 0.0
        %852 = vmatpush1.msra.mxu0 0.0
        %853 = vmatprep.subr.mxu0 0.0
        %854 = vmatpush1.msra.mxu0 0.0
        %855 = vmatprep.subr.mxu0 0.0
        %856 = vmatpush1.msra.mxu0 0.0
        %857 = vmatprep.mubr.f32.mxu0 0.0
        %v858 = vand.u32 %v452, 4294901760
        %v859 = vsub.f32 %v452, %v858
        %860 = vmatmul.mubr.f32.gmra.mrb[0].mxu0 %v859
        %v861 = vpop.f32.mrb[0].mxu0
        %v862 = vadd.f32 %v736, %v861
        %v863 = vpop.f32.mrb[0].mxu0
        %v864 = vadd.f32 %v738, %v863
        %865 = vmatprep.mubr.f32.mxu0 0.0
        %v866 = vand.u32 %v455, 4294901760
        %v867 = vsub.f32 %v455, %v866
        %868 = vmatmul.mubr.f32.gmra.mrb[0].mxu0 %v867
        %v869 = vpop.f32.mrb[0].mxu0
        %v870 = vadd.f32 %v743, %v869
        %v871 = vpop.f32.mrb[0].mxu0
        %v872 = vadd.f32 %v745, %v871
        %873 = vmatprep.mubr.f32.mxu0 0.0
        %v874 = vand.u32 %v458, 4294901760
        %v875 = vsub.f32 %v458, %v874
        %876 = vmatmul.mubr.f32.gmra.mrb[0].mxu0 %v875
        %v877 = vpop.f32.mrb[0].mxu0
        %v878 = vadd.f32 %v750, %v877
        %v879 = vpop.f32.mrb[0].mxu0
        %v880 = vadd.f32 %v752, %v879
        %881 = vmatprep.mubr.f32.mxu0 0.0
        %v882 = vand.u32 %v461, 4294901760
        %v883 = vsub.f32 %v461, %v882
        %884 = vmatmul.mubr.f32.gmra.mrb[0].mxu0 %v883
        %v885 = vpop.f32.mrb[0].mxu0
        %v886 = vadd.f32 %v757, %v885
        %v887 = vpop.f32.mrb[0].mxu0
        %v888 = vadd.f32 %v759, %v887
        %889 = vdwg.mxu0
        %v890 = vand.u32 %v435, 4294901760
        %891 = vmatprep.subr.mxu0 %v890
        %v892 = vand.u32 %v434, 4294901760
        %893 = vmatpush1.msra.mxu0 %v892
        %v894 = vand.u32 %v437, 4294901760
        %895 = vmatprep.subr.mxu0 %v894
        %v896 = vand.u32 %v436, 4294901760
        %897 = vmatpush1.msra.mxu0 %v896
        %v898 = vand.u32 %v439, 4294901760
        %899 = vmatprep.subr.mxu0 %v898
        %v900 = vand.u32 %v438, 4294901760
        %901 = vmatpush1.msra.mxu0 %v900
        %v902 = vand.u32 %v441, 4294901760
        %903 = vmatprep.subr.mxu0 %v902
        %v904 = vand.u32 %v440, 4294901760
        %905 = vmatpush1.msra.mxu0 %v904
        %v906 = vand.u32 %v443, 4294901760
        %907 = vmatprep.subr.mxu0 %v906
        %v908 = vand.u32 %v442, 4294901760
        %909 = vmatpush1.msra.mxu0 %v908
        %v910 = vand.u32 %v445, 4294901760
        %911 = vmatprep.subr.mxu0 %v910
        %v912 = vand.u32 %v444, 4294901760
        %913 = vmatpush1.msra.mxu0 %v912
        %v914 = vand.u32 %v447, 4294901760
        %915 = vmatprep.subr.mxu0 %v914
        %v916 = vand.u32 %v446, 4294901760
        %917 = vmatpush1.msra.mxu0 %v916
        %v918 = vand.u32 %v449, 4294901760
        %919 = vmatprep.subr.mxu0 %v918
        %v920 = vand.u32 %v448, 4294901760
        %921 = vmatpush1.msra.mxu0 %v920
        %922 = vmatprep.subr.mxu0 0.0
        %923 = vmatpush1.msra.mxu0 0.0
        %924 = vmatprep.subr.mxu0 0.0
        %925 = vmatpush1.msra.mxu0 0.0
        %926 = vmatprep.subr.mxu0 0.0
        %927 = vmatpush1.msra.mxu0 0.0
        %928 = vmatprep.subr.mxu0 0.0
        %929 = vmatpush1.msra.mxu0 0.0
        %930 = vmatprep.subr.mxu0 0.0
        %931 = vmatpush1.msra.mxu0 0.0
        %932 = vmatprep.subr.mxu0 0.0
        %933 = vmatpush1.msra.mxu0 0.0
        %934 = vmatprep.subr.mxu0 0.0
        %935 = vmatpush1.msra.mxu0 0.0
        %936 = vmatprep.subr.mxu0 0.0
        %937 = vmatpush1.msra.mxu0 0.0
        %938 = vmatprep.subr.mxu0 0.0
        %939 = vmatpush1.msra.mxu0 0.0
        %940 = vmatprep.subr.mxu0 0.0
        %941 = vmatpush1.msra.mxu0 0.0
        %942 = vmatprep.subr.mxu0 0.0
        %943 = vmatpush1.msra.mxu0 0.0
        %944 = vmatprep.subr.mxu0 0.0
        %945 = vmatpush1.msra.mxu0 0.0
        %946 = vmatprep.subr.mxu0 0.0
        %947 = vmatpush1.msra.mxu0 0.0
        %948 = vmatprep.subr.mxu0 0.0
        %949 = vmatpush1.msra.mxu0 0.0
        %950 = vmatprep.subr.mxu0 0.0
        %951 = vmatpush1.msra.mxu0 0.0
        %952 = vmatprep.subr.mxu0 0.0
        %953 = vmatpush1.msra.mxu0 0.0
        %954 = vmatprep.subr.mxu0 0.0
        %955 = vmatpush1.msra.mxu0 0.0
        %956 = vmatprep.subr.mxu0 0.0
        %957 = vmatpush1.msra.mxu0 0.0
        %958 = vmatprep.subr.mxu0 0.0
        %959 = vmatpush1.msra.mxu0 0.0
        %960 = vmatprep.subr.mxu0 0.0
        %961 = vmatpush1.msra.mxu0 0.0
        %962 = vmatprep.subr.mxu0 0.0
        %963 = vmatpush1.msra.mxu0 0.0
        %964 = vmatprep.subr.mxu0 0.0
        %965 = vmatpush1.msra.mxu0 0.0
        %966 = vmatprep.subr.mxu0 0.0
        %967 = vmatpush1.msra.mxu0 0.0
        %968 = vmatprep.subr.mxu0 0.0
        %969 = vmatpush1.msra.mxu0 0.0
        %970 = vmatprep.mubr.f32.mxu0 0.0
        %v971 = vand.u32 %v452, 4294901760
        %v972 = vsub.f32 %v452, %v971
        %v973 = vand.u32 %v972, 4294901760
        %974 = vmatmul.mubr.f32.gmra.mrb[0].mxu0 %v973
        %v975 = vpop.f32.mrb[0].mxu0
        %v976 = vadd.f32 %v862, %v975
        %v977 = vpop.f32.mrb[0].mxu0
        %v978 = vadd.f32 %v864, %v977
        %979 = vmatprep.mubr.f32.mxu0 0.0
        %v980 = vand.u32 %v455, 4294901760
        %v981 = vsub.f32 %v455, %v980
        %v982 = vand.u32 %v981, 4294901760
        %983 = vmatmul.mubr.f32.gmra.mrb[0].mxu0 %v982
        %v984 = vpop.f32.mrb[0].mxu0
        %v985 = vadd.f32 %v870, %v984
        %v986 = vpop.f32.mrb[0].mxu0
        %v987 = vadd.f32 %v872, %v986
        %988 = vmatprep.mubr.f32.mxu0 0.0
        %v989 = vand.u32 %v458, 4294901760
        %v990 = vsub.f32 %v458, %v989
        %v991 = vand.u32 %v990, 4294901760
        %992 = vmatmul.mubr.f32.gmra.mrb[0].mxu0 %v991
        %v993 = vpop.f32.mrb[0].mxu0
        %v994 = vadd.f32 %v878, %v993
        %v995 = vpop.f32.mrb[0].mxu0
        %v996 = vadd.f32 %v880, %v995
        %997 = vmatprep.mubr.f32.mxu0 0.0
        %v998 = vand.u32 %v461, 4294901760
        %v999 = vsub.f32 %v461, %v998
        %v1000 = vand.u32 %v999, 4294901760
        %1001 = vmatmul.mubr.f32.gmra.mrb[0].mxu0 %v1000
        %v1002 = vpop.f32.mrb[0].mxu0
        %v1003 = vadd.f32 %v886, %v1002
        %v1004 = vpop.f32.mrb[0].mxu0
        %v1005 = vadd.f32 %v888, %v1004
        %1006 = vdwg.mxu0
        %v1007 = vand.u32 %v435, 4294901760
        %v1008 = vsub.f32 %v435, %v1007
        %v1009 = vand.u32 %v1008, 4294901760
        %1010 = vmatprep.subr.mxu0 %v1009
        %v1011 = vand.u32 %v434, 4294901760
        %v1012 = vsub.f32 %v434, %v1011
        %v1013 = vand.u32 %v1012, 4294901760
        %1014 = vmatpush1.msra.mxu0 %v1013
        %v1015 = vand.u32 %v437, 4294901760
        %v1016 = vsub.f32 %v437, %v1015
        %v1017 = vand.u32 %v1016, 4294901760
        %1018 = vmatprep.subr.mxu0 %v1017
        %v1019 = vand.u32 %v436, 4294901760
        %v1020 = vsub.f32 %v436, %v1019
        %v1021 = vand.u32 %v1020, 4294901760
        %1022 = vmatpush1.msra.mxu0 %v1021
        %v1023 = vand.u32 %v439, 4294901760
        %v1024 = vsub.f32 %v439, %v1023
        %v1025 = vand.u32 %v1024, 4294901760
        %1026 = vmatprep.subr.mxu0 %v1025
        %v1027 = vand.u32 %v438, 4294901760
        %v1028 = vsub.f32 %v438, %v1027
        %v1029 = vand.u32 %v1028, 4294901760
        %1030 = vmatpush1.msra.mxu0 %v1029
        %v1031 = vand.u32 %v441, 4294901760
        %v1032 = vsub.f32 %v441, %v1031
        %v1033 = vand.u32 %v1032, 4294901760
        %1034 = vmatprep.subr.mxu0 %v1033
        %v1035 = vand.u32 %v440, 4294901760
        %v1036 = vsub.f32 %v440, %v1035
        %v1037 = vand.u32 %v1036, 4294901760
        %1038 = vmatpush1.msra.mxu0 %v1037
        %v1039 = vand.u32 %v443, 4294901760
        %v1040 = vsub.f32 %v443, %v1039
        %v1041 = vand.u32 %v1040, 4294901760
        %1042 = vmatprep.subr.mxu0 %v1041
        %v1043 = vand.u32 %v442, 4294901760
        %v1044 = vsub.f32 %v442, %v1043
        %v1045 = vand.u32 %v1044, 4294901760
        %1046 = vmatpush1.msra.mxu0 %v1045
        %v1047 = vand.u32 %v445, 4294901760
        %v1048 = vsub.f32 %v445, %v1047
        %v1049 = vand.u32 %v1048, 4294901760
        %1050 = vmatprep.subr.mxu0 %v1049
        %v1051 = vand.u32 %v444, 4294901760
        %v1052 = vsub.f32 %v444, %v1051
        %v1053 = vand.u32 %v1052, 4294901760
        %1054 = vmatpush1.msra.mxu0 %v1053
        %v1055 = vand.u32 %v447, 4294901760
        %v1056 = vsub.f32 %v447, %v1055
        %v1057 = vand.u32 %v1056, 4294901760
        %1058 = vmatprep.subr.mxu0 %v1057
        %v1059 = vand.u32 %v446, 4294901760
        %v1060 = vsub.f32 %v446, %v1059
        %v1061 = vand.u32 %v1060, 4294901760
        %1062 = vmatpush1.msra.mxu0 %v1061
        %v1063 = vand.u32 %v449, 4294901760
        %v1064 = vsub.f32 %v449, %v1063
        %v1065 = vand.u32 %v1064, 4294901760
        %1066 = vmatprep.subr.mxu0 %v1065
        %v1067 = vand.u32 %v448, 4294901760
        %v1068 = vsub.f32 %v448, %v1067
        %v1069 = vand.u32 %v1068, 4294901760
        %1070 = vmatpush1.msra.mxu0 %v1069
        %1071 = vmatprep.subr.mxu0 0.0
        %1072 = vmatpush1.msra.mxu0 0.0
        %1073 = vmatprep.subr.mxu0 0.0
        %1074 = vmatpush1.msra.mxu0 0.0
        %1075 = vmatprep.subr.mxu0 0.0
        %1076 = vmatpush1.msra.mxu0 0.0
        %1077 = vmatprep.subr.mxu0 0.0
        %1078 = vmatpush1.msra.mxu0 0.0
        %1079 = vmatprep.subr.mxu0 0.0
        %1080 = vmatpush1.msra.mxu0 0.0
        %1081 = vmatprep.subr.mxu0 0.0
        %1082 = vmatpush1.msra.mxu0 0.0
        %1083 = vmatprep.subr.mxu0 0.0
        %1084 = vmatpush1.msra.mxu0 0.0
        %1085 = vmatprep.subr.mxu0 0.0
        %1086 = vmatpush1.msra.mxu0 0.0
        %1087 = vmatprep.subr.mxu0 0.0
        %1088 = vmatpush1.msra.mxu0 0.0
        %1089 = vmatprep.subr.mxu0 0.0
        %1090 = vmatpush1.msra.mxu0 0.0
        %1091 = vmatprep.subr.mxu0 0.0
        %1092 = vmatpush1.msra.mxu0 0.0
        %1093 = vmatprep.subr.mxu0 0.0
        %1094 = vmatpush1.msra.mxu0 0.0
        %1095 = vmatprep.subr.mxu0 0.0
        %1096 = vmatpush1.msra.mxu0 0.0
        %1097 = vmatprep.subr.mxu0 0.0
        %1098 = vmatpush1.msra.mxu0 0.0
        %1099 = vmatprep.subr.mxu0 0.0
        %1100 = vmatpush1.msra.mxu0 0.0
        %1101 = vmatprep.subr.mxu0 0.0
        %1102 = vmatpush1.msra.mxu0 0.0
        %1103 = vmatprep.subr.mxu0 0.0
        %1104 = vmatpush1.msra.mxu0 0.0
        %1105 = vmatprep.subr.mxu0 0.0
        %1106 = vmatpush1.msra.mxu0 0.0
        %1107 = vmatprep.subr.mxu0 0.0
        %1108 = vmatpush1.msra.mxu0 0.0
        %1109 = vmatprep.subr.mxu0 0.0
        %1110 = vmatpush1.msra.mxu0 0.0
        %1111 = vmatprep.subr.mxu0 0.0
        %1112 = vmatpush1.msra.mxu0 0.0
        %1113 = vmatprep.subr.mxu0 0.0
        %1114 = vmatpush1.msra.mxu0 0.0
        %1115 = vmatprep.subr.mxu0 0.0
        %1116 = vmatpush1.msra.mxu0 0.0
        %1117 = vmatprep.subr.mxu0 0.0
        %1118 = vmatpush1.msra.mxu0 0.0
        %1119 = vmatprep.mubr.f32.mxu0 0.0
        %v1120 = vand.u32 %v452, 4294901760
        %1121 = vmatmul.mubr.f32.gmra.mrb[0].mxu0 %v1120
        %v1122 = vpop.f32.mrb[0].mxu0
        %v1123 = vadd.f32 %v976, %v1122
        %v1124 = vpop.f32.mrb[0].mxu0
        %v1125 = vadd.f32 %v978, %v1124
        %1126 = vmatprep.mubr.f32.mxu0 0.0
        %v1127 = vand.u32 %v455, 4294901760
        %1128 = vmatmul.mubr.f32.gmra.mrb[0].mxu0 %v1127
        %v1129 = vpop.f32.mrb[0].mxu0
        %v1130 = vadd.f32 %v985, %v1129
        %v1131 = vpop.f32.mrb[0].mxu0
        %v1132 = vadd.f32 %v987, %v1131
        %1133 = vmatprep.mubr.f32.mxu0 0.0
        %v1134 = vand.u32 %v458, 4294901760
        %1135 = vmatmul.mubr.f32.gmra.mrb[0].mxu0 %v1134
        %v1136 = vpop.f32.mrb[0].mxu0
        %v1137 = vadd.f32 %v994, %v1136
        %v1138 = vpop.f32.mrb[0].mxu0
        %v1139 = vadd.f32 %v996, %v1138
        %1140 = vmatprep.mubr.f32.mxu0 0.0
        %v1141 = vand.u32 %v461, 4294901760
        %1142 = vmatmul.mubr.f32.gmra.mrb[0].mxu0 %v1141
        %v1143 = vpop.f32.mrb[0].mxu0
        %v1144 = vadd.f32 %v1003, %v1143
        %v1145 = vpop.f32.mrb[0].mxu0
        %v1146 = vadd.f32 %v1005, %v1145
        %1147 = vdwg.mxu0
        %v1148 = vand.u32 %v435, 4294901760
        %1149 = vmatprep.subr.mxu0 %v1148
        %v1150 = vand.u32 %v434, 4294901760
        %1151 = vmatpush1.msra.mxu0 %v1150
        %v1152 = vand.u32 %v437, 4294901760
        %1153 = vmatprep.subr.mxu0 %v1152
        %v1154 = vand.u32 %v436, 4294901760
        %1155 = vmatpush1.msra.mxu0 %v1154
        %v1156 = vand.u32 %v439, 4294901760
        %1157 = vmatprep.subr.mxu0 %v1156
        %v1158 = vand.u32 %v438, 4294901760
        %1159 = vmatpush1.msra.mxu0 %v1158
        %v1160 = vand.u32 %v441, 4294901760
        %1161 = vmatprep.subr.mxu0 %v1160
        %v1162 = vand.u32 %v440, 4294901760
        %1163 = vmatpush1.msra.mxu0 %v1162
        %v1164 = vand.u32 %v443, 4294901760
        %1165 = vmatprep.subr.mxu0 %v1164
        %v1166 = vand.u32 %v442, 4294901760
        %1167 = vmatpush1.msra.mxu0 %v1166
        %v1168 = vand.u32 %v445, 4294901760
        %1169 = vmatprep.subr.mxu0 %v1168
        %v1170 = vand.u32 %v444, 4294901760
        %1171 = vmatpush1.msra.mxu0 %v1170
        %v1172 = vand.u32 %v447, 4294901760
        %1173 = vmatprep.subr.mxu0 %v1172
        %v1174 = vand.u32 %v446, 4294901760
        %1175 = vmatpush1.msra.mxu0 %v1174
        %v1176 = vand.u32 %v449, 4294901760
        %1177 = vmatprep.subr.mxu0 %v1176
        %v1178 = vand.u32 %v448, 4294901760
        %1179 = vmatpush1.msra.mxu0 %v1178
        %1180 = vmatprep.subr.mxu0 0.0
        %1181 = vmatpush1.msra.mxu0 0.0
        %1182 = vmatprep.subr.mxu0 0.0
        %1183 = vmatpush1.msra.mxu0 0.0
        %1184 = vmatprep.subr.mxu0 0.0
        %1185 = vmatpush1.msra.mxu0 0.0
        %1186 = vmatprep.subr.mxu0 0.0
        %1187 = vmatpush1.msra.mxu0 0.0
        %1188 = vmatprep.subr.mxu0 0.0
        %1189 = vmatpush1.msra.mxu0 0.0
        %1190 = vmatprep.subr.mxu0 0.0
        %1191 = vmatpush1.msra.mxu0 0.0
        %1192 = vmatprep.subr.mxu0 0.0
        %1193 = vmatpush1.msra.mxu0 0.0
        %1194 = vmatprep.subr.mxu0 0.0
        %1195 = vmatpush1.msra.mxu0 0.0
        %1196 = vmatprep.subr.mxu0 0.0
        %1197 = vmatpush1.msra.mxu0 0.0
        %1198 = vmatprep.subr.mxu0 0.0
        %1199 = vmatpush1.msra.mxu0 0.0
        %1200 = vmatprep.subr.mxu0 0.0
        %1201 = vmatpush1.msra.mxu0 0.0
        %1202 = vmatprep.subr.mxu0 0.0
        %1203 = vmatpush1.msra.mxu0 0.0
        %1204 = vmatprep.subr.mxu0 0.0
        %1205 = vmatpush1.msra.mxu0 0.0
        %1206 = vmatprep.subr.mxu0 0.0
        %1207 = vmatpush1.msra.mxu0 0.0
        %1208 = vmatprep.subr.mxu0 0.0
        %1209 = vmatpush1.msra.mxu0 0.0
        %1210 = vmatprep.subr.mxu0 0.0
        %1211 = vmatpush1.msra.mxu0 0.0
        %1212 = vmatprep.subr.mxu0 0.0
        %1213 = vmatpush1.msra.mxu0 0.0
        %1214 = vmatprep.subr.mxu0 0.0
        %1215 = vmatpush1.msra.mxu0 0.0
        %1216 = vmatprep.subr.mxu0 0.0
        %1217 = vmatpush1.msra.mxu0 0.0
        %1218 = vmatprep.subr.mxu0 0.0
        %1219 = vmatpush1.msra.mxu0 0.0
        %1220 = vmatprep.subr.mxu0 0.0
        %1221 = vmatpush1.msra.mxu0 0.0
        %1222 = vmatprep.subr.mxu0 0.0
        %1223 = vmatpush1.msra.mxu0 0.0
        %1224 = vmatprep.subr.mxu0 0.0
        %1225 = vmatpush1.msra.mxu0 0.0
        %1226 = vmatprep.subr.mxu0 0.0
        %1227 = vmatpush1.msra.mxu0 0.0
        %1228 = vmatprep.mubr.f32.mxu0 0.0
        %v1229 = vand.u32 %v452, 4294901760
        %1230 = vmatmul.mubr.f32.gmra.mrb[0].mxu0 %v1229
        %v1231 = vpop.f32.mrb[0].mxu0
        %v1232 = vadd.f32 %v1123, %v1231
        %v1233 = vpop.f32.mrb[0].mxu0
        %v1234 = vadd.f32 %v1125, %v1233
        %1235 = vmatprep.mubr.f32.mxu0 0.0
        %v1236 = vand.u32 %v455, 4294901760
        %1237 = vmatmul.mubr.f32.gmra.mrb[0].mxu0 %v1236
        %v1238 = vpop.f32.mrb[0].mxu0
        %v1239 = vadd.f32 %v1130, %v1238
        %v1240 = vpop.f32.mrb[0].mxu0
        %v1241 = vadd.f32 %v1132, %v1240
        %1242 = vmatprep.mubr.f32.mxu0 0.0
        %v1243 = vand.u32 %v458, 4294901760
        %1244 = vmatmul.mubr.f32.gmra.mrb[0].mxu0 %v1243
        %v1245 = vpop.f32.mrb[0].mxu0
        %v1246 = vadd.f32 %v1137, %v1245
        %v1247 = vpop.f32.mrb[0].mxu0
        %v1248 = vadd.f32 %v1139, %v1247
        %1249 = vmatprep.mubr.f32.mxu0 0.0
        %v1250 = vand.u32 %v461, 4294901760
        %1251 = vmatmul.mubr.f32.gmra.mrb[0].mxu0 %v1250
        %v1252 = vpop.f32.mrb[0].mxu0
        %v1253 = vadd.f32 %v1144, %v1252
        %v1254 = vpop.f32.mrb[0].mxu0
        %v1255 = vadd.f32 %v1146, %v1254
        %1256 = vdwg.mxu0
        %v1257 = vadd.f32 %v1232, %v1234
        %1258 = vadd.xlane.f32.xlu0 %v1257
        %v1259 = vpop.xlane.xlu0 %1258
        %v1260 = vadd.f32 %v1239, %v1241
        %1261 = vadd.xlane.f32.xlu0 %v1260
        %v1262 = vpop.xlane.xlu0 %1261
        %v1263 = vadd.f32 %v1246, %v1248
        %1264 = vadd.xlane.f32.xlu0 %v1263
        %v1265 = vpop.xlane.xlu0 %1264
        %v1266 = vadd.f32 %v1253, %v1255
        %1267 = vadd.xlane.f32.xlu0 %v1266
        %v1268 = vpop.xlane.xlu0 %1267
        %v1269 = vmul.f32 %v1259, %v425
        %v1270 = vmul.f32 %v1262, %v425
        %v1271 = vmul.f32 %v1265, %v425
        %v1272 = vmul.f32 %v1268, %v425
        %v1273 = vsub.f32 %v1232, %v1269
        %v1274 = vsub.f32 %v1234, %v1269
        %v1275 = vsub.f32 %v1239, %v1270
        %v1276 = vsub.f32 %v1241, %v1270
        %v1277 = vsub.f32 %v1246, %v1271
        %v1278 = vsub.f32 %v1248, %v1271
        %v1279 = vsub.f32 %v1253, %v1272
        %v1280 = vsub.f32 %v1255, %v1272
        %v1281 = vmul.f32 %v1273, %v1273
        %v1282 = vmul.f32 %v1274, %v1274
        %v1283 = vmul.f32 %v1275, %v1275
        %v1284 = vmul.f32 %v1276, %v1276
        %v1285 = vmul.f32 %v1277, %v1277
        %v1286 = vmul.f32 %v1278, %v1278
        %v1287 = vmul.f32 %v1279, %v1279
        %v1288 = vmul.f32 %v1280, %v1280
        %v1289 = vadd.f32 %v1281, %v1282
        %1290 = vadd.xlane.f32.xlu0 %v1289
        %v1291 = vpop.xlane.xlu0 %1290
        %v1292 = vadd.f32 %v1283, %v1284
        %1293 = vadd.xlane.f32.xlu0 %v1292
        %v1294 = vpop.xlane.xlu0 %1293
        %v1295 = vadd.f32 %v1285, %v1286
        %1296 = vadd.xlane.f32.xlu0 %v1295
        %v1297 = vpop.xlane.xlu0 %1296
        %v1298 = vadd.f32 %v1287, %v1288
        %1299 = vadd.xlane.f32.xlu0 %v1298
        %v1300 = vpop.xlane.xlu0 %1299
        %v1301 = vrcp.pop 255.0
        %v1302 = vmul.f32 %v1291, %v1301
        %v1303 = vmul.f32 %v1294, %v1301
        %v1304 = vmul.f32 %v1297, %v1301
        %v1305 = vmul.f32 %v1300, %v1301
        %v1306 = vrsqrt.pop %v1302
        %v1307 = vmul.f32 %v1302, %v1306
        %vm1308 = vcmp.eq.f32.partialorder %v1302, inf
        %v1309 = vsel %vm1308, %v1302, %v1307
        %vm1310 = vcmp.eq.f32.partialorder %v1302, 0.0
        %v1311 = vand.u32 %v1302, 2147483648
        %v1312 = vsel %vm1310, %v1311, %v1309
        %v1313 = vrsqrt.pop %v1303
        %v1314 = vmul.f32 %v1303, %v1313
        %vm1315 = vcmp.eq.f32.partialorder %v1303, inf
        %v1316 = vsel %vm1315, %v1303, %v1314
        %vm1317 = vcmp.eq.f32.partialorder %v1303, 0.0
        %v1318 = vand.u32 %v1303, 2147483648
        %v1319 = vsel %vm1317, %v1318, %v1316
        %v1320 = vrsqrt.pop %v1304
        %v1321 = vmul.f32 %v1304, %v1320
        %vm1322 = vcmp.eq.f32.partialorder %v1304, inf
        %v1323 = vsel %vm1322, %v1304, %v1321
        %vm1324 = vcmp.eq.f32.partialorder %v1304, 0.0
        %v1325 = vand.u32 %v1304, 2147483648
        %v1326 = vsel %vm1324, %v1325, %v1323
        %v1327 = vrsqrt.pop %v1305
        %v1328 = vmul.f32 %v1305, %v1327
        %vm1329 = vcmp.eq.f32.partialorder %v1305, inf
        %v1330 = vsel %vm1329, %v1305, %v1328
        %vm1331 = vcmp.eq.f32.partialorder %v1305, 0.0
        %v1332 = vand.u32 %v1305, 2147483648
        %v1333 = vsel %vm1331, %v1332, %v1330
        %v1334 = vadd.f32 %v1312, 1e-05
        %v1335 = vadd.f32 %v1319, 1e-05
        %v1336 = vadd.f32 %v1326, 1e-05
        %v1337 = vadd.f32 %v1333, 1e-05
        %v1338 = vrcp.pop %v1334
        %v1339 = vmul.f32 %v397, %v1338
        %v1340 = vrcp.pop %v1335
        %v1341 = vmul.f32 %v398, %v1340
        %v1342 = vrcp.pop %v1336
        %v1343 = vmul.f32 %v399, %v1342
        %v1344 = vrcp.pop %v1337
        %v1345 = vmul.f32 %v400, %v1344
        %1347 = vset.pattern.permute.xlu0 0
        %1348 = vperm.xlu0 %1347, %v1339
        %v1349 = vpop.permute.xlu0 %1348
        %1352 = vset.pattern.permute.xlu0 0
        %1353 = vperm.xlu0 %1352, %v1341
        %v1354 = vpop.permute.xlu0 %1353
        %1357 = vset.pattern.permute.xlu0 0
        %1358 = vperm.xlu0 %1357, %v1343
        %v1359 = vpop.permute.xlu0 %1358
        %1362 = vset.pattern.permute.xlu0 0
        %1363 = vperm.xlu0 %1362, %v1345
        %v1364 = vpop.permute.xlu0 %1363
        %v1366 = vmul.f32 %v1273, %v1349
        %v1367 = vmul.f32 %v1274, %v1349
        %v1368 = vmul.f32 %v1275, %v1354
        %v1369 = vmul.f32 %v1276, %v1354
        %v1370 = vmul.f32 %v1277, %v1359
        %v1371 = vmul.f32 %v1278, %v1359
        %v1372 = vmul.f32 %v1279, %v1364
        %v1373 = vmul.f32 %v1280, %v1364
        %1375 = vset.pattern.permute.xlu0 1
        %1376 = vperm.xlu0 %1375, %v397
        %v1377 = vpop.permute.xlu0 %1376
        %1380 = vset.pattern.permute.xlu0 1
        %1381 = vperm.xlu0 %1380, %v398
        %v1382 = vpop.permute.xlu0 %1381
        %1385 = vset.pattern.permute.xlu0 1
        %1386 = vperm.xlu0 %1385, %v399
        %v1387 = vpop.permute.xlu0 %1386
        %1390 = vset.pattern.permute.xlu0 1
        %1391 = vperm.xlu0 %1390, %v400
        %v1392 = vpop.permute.xlu0 %1391
        %v1394 = vadd.f32 %v1366, %v1377
        %v1395 = vadd.f32 %v1367, %v1377
        %v1396 = vadd.f32 %v1368, %v1382
        %v1397 = vadd.f32 %v1369, %v1382
        %v1398 = vadd.f32 %v1370, %v1387
        %v1399 = vadd.f32 %v1371, %v1387
        %v1400 = vadd.f32 %v1372, %v1392
        %v1401 = vadd.f32 %v1373, %v1392
        %v1402 = vxor.u32 %v1394, 2147483648
        %v1403 = vxor.u32 %v1395, 2147483648
        %v1404 = vxor.u32 %v1396, 2147483648
        %v1405 = vxor.u32 %v1397, 2147483648
        %v1406 = vxor.u32 %v1398, 2147483648
        %v1407 = vxor.u32 %v1399, 2147483648
        %v1408 = vxor.u32 %v1400, 2147483648
        %v1409 = vxor.u32 %v1401, 2147483648
        %v1410 = vmul.f32 %v1402, 1.442695
        %v1411 = vpow.pop %v1410
        %v1412 = vmul.f32 %v1403, 1.442695
        %v1413 = vpow.pop %v1412
        %v1414 = vmul.f32 %v1404, 1.442695
        %v1415 = vpow.pop %v1414
        %v1416 = vmul.f32 %v1405, 1.442695
        %v1417 = vpow.pop %v1416
        %v1418 = vmul.f32 %v1406, 1.442695
        %v1419 = vpow.pop %v1418
        %v1420 = vmul.f32 %v1407, 1.442695
        %v1421 = vpow.pop %v1420
        %v1422 = vmul.f32 %v1408, 1.442695
        %v1423 = vpow.pop %v1422
        %v1424 = vmul.f32 %v1409, 1.442695
        %v1425 = vpow.pop %v1424
        %v1426 = vadd.f32 %v1411, 1.0
        %v1427 = vadd.f32 %v1413, 1.0
        %v1428 = vadd.f32 %v1415, 1.0
        %v1429 = vadd.f32 %v1417, 1.0
        %v1430 = vadd.f32 %v1419, 1.0
        %v1431 = vadd.f32 %v1421, 1.0
        %v1432 = vadd.f32 %v1423, 1.0
        %v1433 = vadd.f32 %v1425, 1.0
        %v1434 = vrcp.pop %v1426
        %v1435 = vmul.f32 1.0, %v1434
        %v1436 = vrcp.pop %v1427
        %v1437 = vmul.f32 1.0, %v1436
        %v1438 = vrcp.pop %v1428
        %v1439 = vmul.f32 1.0, %v1438
        %v1440 = vrcp.pop %v1429
        %v1441 = vmul.f32 1.0, %v1440
        %v1442 = vrcp.pop %v1430
        %v1443 = vmul.f32 1.0, %v1442
        %v1444 = vrcp.pop %v1431
        %v1445 = vmul.f32 1.0, %v1444
        %v1446 = vrcp.pop %v1432
        %v1447 = vmul.f32 1.0, %v1446
        %v1448 = vrcp.pop %v1433
        %v1449 = vmul.f32 1.0, %v1448
        %v1450 = vadd.f32 %v295, %v296
        %1451 = vadd.xlane.f32.xlu0 %v1450
        %v1452 = vpop.xlane.xlu0 %1451
        %v1453 = vadd.f32 %v297, %v298
        %1454 = vadd.xlane.f32.xlu0 %v1453
        %v1455 = vpop.xlane.xlu0 %1454
        %v1456 = vadd.f32 %v299, %v300
        %1457 = vadd.xlane.f32.xlu0 %v1456
        %v1458 = vpop.xlane.xlu0 %1457
        %v1459 = vadd.f32 %v301, %v302
        %1460 = vadd.xlane.f32.xlu0 %v1459
        %v1461 = vpop.xlane.xlu0 %1460
        %v1462 = vadd.f32 %v303, %v304
        %1463 = vadd.xlane.f32.xlu0 %v1462
        %v1464 = vpop.xlane.xlu0 %1463
        %v1465 = vadd.f32 %v305, %v306
        %1466 = vadd.xlane.f32.xlu0 %v1465
        %v1467 = vpop.xlane.xlu0 %1466
        %v1468 = vadd.f32 %v307, %v308
        %1469 = vadd.xlane.f32.xlu0 %v1468
        %v1470 = vpop.xlane.xlu0 %1469
        %v1471 = vadd.f32 %v309, %v310
        %1472 = vadd.xlane.f32.xlu0 %v1471
        %v1473 = vpop.xlane.xlu0 %1472
        %v1474 = vmul.f32 %v1452, %v425
        %v1475 = vmul.f32 %v1455, %v425
        %v1476 = vmul.f32 %v1458, %v425
        %v1477 = vmul.f32 %v1461, %v425
        %v1478 = vmul.f32 %v1464, %v425
        %v1479 = vmul.f32 %v1467, %v425
        %v1480 = vmul.f32 %v1470, %v425
        %v1481 = vmul.f32 %v1473, %v425
        %v1482 = vmul.f32 %v295, %v1474
        %v1483 = vmul.f32 %v296, %v1474
        %v1484 = vmul.f32 %v297, %v1475
        %v1485 = vmul.f32 %v298, %v1475
        %v1486 = vmul.f32 %v299, %v1476
        %v1487 = vmul.f32 %v300, %v1476
        %v1488 = vmul.f32 %v301, %v1477
        %v1489 = vmul.f32 %v302, %v1477
        %v1490 = vmul.f32 %v303, %v1478
        %v1491 = vmul.f32 %v304, %v1478
        %v1492 = vmul.f32 %v305, %v1479
        %v1493 = vmul.f32 %v306, %v1479
        %v1494 = vmul.f32 %v307, %v1480
        %v1495 = vmul.f32 %v308, %v1480
        %v1496 = vmul.f32 %v309, %v1481
        %v1497 = vmul.f32 %v310, %v1481
        %v1498 = vand.u32 %v1483, 4294901760
        %1499 = vmatprep.subr.mxu0 %v1498
        %v1500 = vand.u32 %v1482, 4294901760
        %1501 = vmatpush1.msra.mxu0 %v1500
        %v1502 = vand.u32 %v1485, 4294901760
        %1503 = vmatprep.subr.mxu0 %v1502
        %v1504 = vand.u32 %v1484, 4294901760
        %1505 = vmatpush1.msra.mxu0 %v1504
        %v1506 = vand.u32 %v1487, 4294901760
        %1507 = vmatprep.subr.mxu0 %v1506
        %v1508 = vand.u32 %v1486, 4294901760
        %1509 = vmatpush1.msra.mxu0 %v1508
        %v1510 = vand.u32 %v1489, 4294901760
        %1511 = vmatprep.subr.mxu0 %v1510
        %v1512 = vand.u32 %v1488, 4294901760
        %1513 = vmatpush1.msra.mxu0 %v1512
        %v1514 = vand.u32 %v1491, 4294901760
        %1515 = vmatprep.subr.mxu0 %v1514
        %v1516 = vand.u32 %v1490, 4294901760
        %1517 = vmatpush1.msra.mxu0 %v1516
        %v1518 = vand.u32 %v1493, 4294901760
        %1519 = vmatprep.subr.mxu0 %v1518
        %v1520 = vand.u32 %v1492, 4294901760
        %1521 = vmatpush1.msra.mxu0 %v1520
        %v1522 = vand.u32 %v1495, 4294901760
        %1523 = vmatprep.subr.mxu0 %v1522
        %v1524 = vand.u32 %v1494, 4294901760
        %1525 = vmatpush1.msra.mxu0 %v1524
        %v1526 = vand.u32 %v1497, 4294901760
        %1527 = vmatprep.subr.mxu0 %v1526
        %v1528 = vand.u32 %v1496, 4294901760
        %1529 = vmatpush1.msra.mxu0 %v1528
        %1530 = vmatprep.subr.mxu0 0.0
        %1531 = vmatpush1.msra.mxu0 0.0
        %1532 = vmatprep.subr.mxu0 0.0
        %1533 = vmatpush1.msra.mxu0 0.0
        %1534 = vmatprep.subr.mxu0 0.0
        %1535 = vmatpush1.msra.mxu0 0.0
        %1536 = vmatprep.subr.mxu0 0.0
        %1537 = vmatpush1.msra.mxu0 0.0
        %1538 = vmatprep.subr.mxu0 0.0
        %1539 = vmatpush1.msra.mxu0 0.0
        %1540 = vmatprep.subr.mxu0 0.0
        %1541 = vmatpush1.msra.mxu0 0.0
        %1542 = vmatprep.subr.mxu0 0.0
        %1543 = vmatpush1.msra.mxu0 0.0
        %1544 = vmatprep.subr.mxu0 0.0
        %1545 = vmatpush1.msra.mxu0 0.0
        %1546 = vmatprep.subr.mxu0 0.0
        %1547 = vmatpush1.msra.mxu0 0.0
        %1548 = vmatprep.subr.mxu0 0.0
        %1549 = vmatpush1.msra.mxu0 0.0
        %1550 = vmatprep.subr.mxu0 0.0
        %1551 = vmatpush1.msra.mxu0 0.0
        %1552 = vmatprep.subr.mxu0 0.0
        %1553 = vmatpush1.msra.mxu0 0.0
        %1554 = vmatprep.subr.mxu0 0.0
        %1555 = vmatpush1.msra.mxu0 0.0
        %1556 = vmatprep.subr.mxu0 0.0
        %1557 = vmatpush1.msra.mxu0 0.0
        %1558 = vmatprep.subr.mxu0 0.0
        %1559 = vmatpush1.msra.mxu0 0.0
        %1560 = vmatprep.subr.mxu0 0.0
        %1561 = vmatpush1.msra.mxu0 0.0
        %1562 = vmatprep.subr.mxu0 0.0
        %1563 = vmatpush1.msra.mxu0 0.0
        %1564 = vmatprep.subr.mxu0 0.0
        %1565 = vmatpush1.msra.mxu0 0.0
        %1566 = vmatprep.subr.mxu0 0.0
        %1567 = vmatpush1.msra.mxu0 0.0
        %1568 = vmatprep.subr.mxu0 0.0
        %1569 = vmatpush1.msra.mxu0 0.0
        %1570 = vmatprep.subr.mxu0 0.0
        %1571 = vmatpush1.msra.mxu0 0.0
        %1572 = vmatprep.subr.mxu0 0.0
        %1573 = vmatpush1.msra.mxu0 0.0
        %1574 = vmatprep.subr.mxu0 0.0
        %1575 = vmatpush1.msra.mxu0 0.0
        %1576 = vmatprep.subr.mxu0 0.0
        %1577 = vmatpush1.msra.mxu0 0.0
        %1578 = vmatprep.mubr.f32.mxu0 0.0
        %v1579 = vand.u32 %v452, 4294901760
        %v1580 = vsub.f32 %v452, %v1579
        %v1581 = vand.u32 %v1580, 4294901760
        %v1582 = vsub.f32 %v1580, %v1581
        %v1583 = vand.u32 %v1582, 4294901760
        %1584 = vmatmul.mubr.f32.gmra.mrb[0].mxu0 %v1583
        %v1585 = vpop.f32.mrb[0].mxu0
        %v1586 = vadd.f32 0.0, %v1585
        %v1587 = vpop.f32.mrb[0].mxu0
        %v1588 = vadd.f32 0.0, %v1587
        %1589 = vmatprep.mubr.f32.mxu0 0.0
        %v1590 = vand.u32 %v455, 4294901760
        %v1591 = vsub.f32 %v455, %v1590
        %v1592 = vand.u32 %v1591, 4294901760
        %v1593 = vsub.f32 %v1591, %v1592
        %v1594 = vand.u32 %v1593, 4294901760
        %1595 = vmatmul.mubr.f32.gmra.mrb[0].mxu0 %v1594
        %v1596 = vpop.f32.mrb[0].mxu0
        %v1597 = vadd.f32 0.0, %v1596
        %v1598 = vpop.f32.mrb[0].mxu0
        %v1599 = vadd.f32 0.0, %v1598
        %1600 = vmatprep.mubr.f32.mxu0 0.0
        %v1601 = vand.u32 %v458, 4294901760
        %v1602 = vsub.f32 %v458, %v1601
        %v1603 = vand.u32 %v1602, 4294901760
        %v1604 = vsub.f32 %v1602, %v1603
        %v1605 = vand.u32 %v1604, 4294901760
        %1606 = vmatmul.mubr.f32.gmra.mrb[0].mxu0 %v1605
        %v1607 = vpop.f32.mrb[0].mxu0
        %v1608 = vadd.f32 0.0, %v1607
        %v1609 = vpop.f32.mrb[0].mxu0
        %v1610 = vadd.f32 0.0, %v1609
        %1611 = vmatprep.mubr.f32.mxu0 0.0
        %v1612 = vand.u32 %v461, 4294901760
        %v1613 = vsub.f32 %v461, %v1612
        %v1614 = vand.u32 %v1613, 4294901760
        %v1615 = vsub.f32 %v1613, %v1614
        %v1616 = vand.u32 %v1615, 4294901760
        %1617 = vmatmul.mubr.f32.gmra.mrb[0].mxu0 %v1616
        %v1618 = vpop.f32.mrb[0].mxu0
        %v1619 = vadd.f32 0.0, %v1618
        %v1620 = vpop.f32.mrb[0].mxu0
        %v1621 = vadd.f32 0.0, %v1620
        %1622 = vdwg.mxu0
        %v1623 = vand.u32 %v1483, 4294901760
        %v1624 = vsub.f32 %v1483, %v1623
        %v1625 = vand.u32 %v1624, 4294901760
        %v1626 = vsub.f32 %v1624, %v1625
        %v1627 = vand.u32 %v1626, 4294901760
        %1628 = vmatprep.subr.mxu0 %v1627
        %v1629 = vand.u32 %v1482, 4294901760
        %v1630 = vsub.f32 %v1482, %v1629
        %v1631 = vand.u32 %v1630, 4294901760
        %v1632 = vsub.f32 %v1630, %v1631
        %v1633 = vand.u32 %v1632, 4294901760
        %1634 = vmatpush1.msra.mxu0 %v1633
        %v1635 = vand.u32 %v1485, 4294901760
        %v1636 = vsub.f32 %v1485, %v1635
        %v1637 = vand.u32 %v1636, 4294901760
        %v1638 = vsub.f32 %v1636, %v1637
        %v1639 = vand.u32 %v1638, 4294901760
        %1640 = vmatprep.subr.mxu0 %v1639
        %v1641 = vand.u32 %v1484, 4294901760
        %v1642 = vsub.f32 %v1484, %v1641
        %v1643 = vand.u32 %v1642, 4294901760
        %v1644 = vsub.f32 %v1642, %v1643
        %v1645 = vand.u32 %v1644, 4294901760
        %1646 = vmatpush1.msra.mxu0 %v1645
        %v1647 = vand.u32 %v1487, 4294901760
        %v1648 = vsub.f32 %v1487, %v1647
        %v1649 = vand.u32 %v1648, 4294901760
        %v1650 = vsub.f32 %v1648, %v1649
        %v1651 = vand.u32 %v1650, 4294901760
        %1652 = vmatprep.subr.mxu0 %v1651
        %v1653 = vand.u32 %v1486, 4294901760
        %v1654 = vsub.f32 %v1486, %v1653
        %v1655 = vand.u32 %v1654, 4294901760
        %v1656 = vsub.f32 %v1654, %v1655
        %v1657 = vand.u32 %v1656, 4294901760
        %1658 = vmatpush1.msra.mxu0 %v1657
        %v1659 = vand.u32 %v1489, 4294901760
        %v1660 = vsub.f32 %v1489, %v1659
        %v1661 = vand.u32 %v1660, 4294901760
        %v1662 = vsub.f32 %v1660, %v1661
        %v1663 = vand.u32 %v1662, 4294901760
        %1664 = vmatprep.subr.mxu0 %v1663
        %v1665 = vand.u32 %v1488, 4294901760
        %v1666 = vsub.f32 %v1488, %v1665
        %v1667 = vand.u32 %v1666, 4294901760
        %v1668 = vsub.f32 %v1666, %v1667
        %v1669 = vand.u32 %v1668, 4294901760
        %1670 = vmatpush1.msra.mxu0 %v1669
        %v1671 = vand.u32 %v1491, 4294901760
        %v1672 = vsub.f32 %v1491, %v1671
        %v1673 = vand.u32 %v1672, 4294901760
        %v1674 = vsub.f32 %v1672, %v1673
        %v1675 = vand.u32 %v1674, 4294901760
        %1676 = vmatprep.subr.mxu0 %v1675
        %v1677 = vand.u32 %v1490, 4294901760
        %v1678 = vsub.f32 %v1490, %v1677
        %v1679 = vand.u32 %v1678, 4294901760
        %v1680 = vsub.f32 %v1678, %v1679
        %v1681 = vand.u32 %v1680, 4294901760
        %1682 = vmatpush1.msra.mxu0 %v1681
        %v1683 = vand.u32 %v1493, 4294901760
        %v1684 = vsub.f32 %v1493, %v1683
        %v1685 = vand.u32 %v1684, 4294901760
        %v1686 = vsub.f32 %v1684, %v1685
        %v1687 = vand.u32 %v1686, 4294901760
        %1688 = vmatprep.subr.mxu0 %v1687
        %v1689 = vand.u32 %v1492, 4294901760
        %v1690 = vsub.f32 %v1492, %v1689
        %v1691 = vand.u32 %v1690, 4294901760
        %v1692 = vsub.f32 %v1690, %v1691
        %v1693 = vand.u32 %v1692, 4294901760
        %1694 = vmatpush1.msra.mxu0 %v1693
        %v1695 = vand.u32 %v1495, 4294901760
        %v1696 = vsub.f32 %v1495, %v1695
        %v1697 = vand.u32 %v1696, 4294901760
        %v1698 = vsub.f32 %v1696, %v1697
        %v1699 = vand.u32 %v1698, 4294901760
        %1700 = vmatprep.subr.mxu0 %v1699
        %v1701 = vand.u32 %v1494, 4294901760
        %v1702 = vsub.f32 %v1494, %v1701
        %v1703 = vand.u32 %v1702, 4294901760
        %v1704 = vsub.f32 %v1702, %v1703
        %v1705 = vand.u32 %v1704, 4294901760
        %1706 = vmatpush1.msra.mxu0 %v1705
        %v1707 = vand.u32 %v1497, 4294901760
        %v1708 = vsub.f32 %v1497, %v1707
        %v1709 = vand.u32 %v1708, 4294901760
        %v1710 = vsub.f32 %v1708, %v1709
        %v1711 = vand.u32 %v1710, 4294901760
        %1712 = vmatprep.subr.mxu0 %v1711
        %v1713 = vand.u32 %v1496, 4294901760
        %v1714 = vsub.f32 %v1496, %v1713
        %v1715 = vand.u32 %v1714, 4294901760
        %v1716 = vsub.f32 %v1714, %v1715
        %v1717 = vand.u32 %v1716, 4294901760
        %1718 = vmatpush1.msra.mxu0 %v1717
        %1719 = vmatprep.subr.mxu0 0.0
        %1720 = vmatpush1.msra.mxu0 0.0
        %1721 = vmatprep.subr.mxu0 0.0
        %1722 = vmatpush1.msra.mxu0 0.0
        %1723 = vmatprep.subr.mxu0 0.0
        %1724 = vmatpush1.msra.mxu0 0.0
        %1725 = vmatprep.subr.mxu0 0.0
        %1726 = vmatpush1.msra.mxu0 0.0
        %1727 = vmatprep.subr.mxu0 0.0
        %1728 = vmatpush1.msra.mxu0 0.0
        %1729 = vmatprep.subr.mxu0 0.0
        %1730 = vmatpush1.msra.mxu0 0.0
        %1731 = vmatprep.subr.mxu0 0.0
        %1732 = vmatpush1.msra.mxu0 0.0
        %1733 = vmatprep.subr.mxu0 0.0
        %1734 = vmatpush1.msra.mxu0 0.0
        %1735 = vmatprep.subr.mxu0 0.0
        %1736 = vmatpush1.msra.mxu0 0.0
        %1737 = vmatprep.subr.mxu0 0.0
        %1738 = vmatpush1.msra.mxu0 0.0
        %1739 = vmatprep.subr.mxu0 0.0
        %1740 = vmatpush1.msra.mxu0 0.0
        %1741 = vmatprep.subr.mxu0 0.0
        %1742 = vmatpush1.msra.mxu0 0.0
        %1743 = vmatprep.subr.mxu0 0.0
        %1744 = vmatpush1.msra.mxu0 0.0
        %1745 = vmatprep.subr.mxu0 0.0
        %1746 = vmatpush1.msra.mxu0 0.0
        %1747 = vmatprep.subr.mxu0 0.0
        %1748 = vmatpush1.msra.mxu0 0.0
        %1749 = vmatprep.subr.mxu0 0.0
        %1750 = vmatpush1.msra.mxu0 0.0
        %1751 = vmatprep.subr.mxu0 0.0
        %1752 = vmatpush1.msra.mxu0 0.0
        %1753 = vmatprep.subr.mxu0 0.0
        %1754 = vmatpush1.msra.mxu0 0.0
        %1755 = vmatprep.subr.mxu0 0.0
        %1756 = vmatpush1.msra.mxu0 0.0
        %1757 = vmatprep.subr.mxu0 0.0
        %1758 = vmatpush1.msra.mxu0 0.0
        %1759 = vmatprep.subr.mxu0 0.0
        %1760 = vmatpush1.msra.mxu0 0.0
        %1761 = vmatprep.subr.mxu0 0.0
        %1762 = vmatpush1.msra.mxu0 0.0
        %1763 = vmatprep.subr.mxu0 0.0
        %1764 = vmatpush1.msra.mxu0 0.0
        %1765 = vmatprep.subr.mxu0 0.0
        %1766 = vmatpush1.msra.mxu0 0.0
        %1767 = vmatprep.mubr.f32.mxu0 0.0
        %v1768 = vand.u32 %v452, 4294901760
        %1769 = vmatmul.mubr.f32.gmra.mrb[0].mxu0 %v1768
        %v1770 = vpop.f32.mrb[0].mxu0
        %v1771 = vadd.f32 %v1586, %v1770
        %v1772 = vpop.f32.mrb[0].mxu0
        %v1773 = vadd.f32 %v1588, %v1772
        %1774 = vmatprep.mubr.f32.mxu0 0.0
        %v1775 = vand.u32 %v455, 4294901760
        %1776 = vmatmul.mubr.f32.gmra.mrb[0].mxu0 %v1775
        %v1777 = vpop.f32.mrb[0].mxu0
        %v1778 = vadd.f32 %v1597, %v1777
        %v1779 = vpop.f32.mrb[0].mxu0
        %v1780 = vadd.f32 %v1599, %v1779
        %1781 = vmatprep.mubr.f32.mxu0 0.0
        %v1782 = vand.u32 %v458, 4294901760
        %1783 = vmatmul.mubr.f32.gmra.mrb[0].mxu0 %v1782
        %v1784 = vpop.f32.mrb[0].mxu0
        %v1785 = vadd.f32 %v1608, %v1784
        %v1786 = vpop.f32.mrb[0].mxu0
        %v1787 = vadd.f32 %v1610, %v1786
        %1788 = vmatprep.mubr.f32.mxu0 0.0
        %v1789 = vand.u32 %v461, 4294901760
        %1790 = vmatmul.mubr.f32.gmra.mrb[0].mxu0 %v1789
        %v1791 = vpop.f32.mrb[0].mxu0
        %v1792 = vadd.f32 %v1619, %v1791
        %v1793 = vpop.f32.mrb[0].mxu0
        %v1794 = vadd.f32 %v1621, %v1793
        %1795 = vdwg.mxu0
        %v1796 = vand.u32 %v1483, 4294901760
        %v1797 = vsub.f32 %v1483, %v1796
        %1798 = vmatprep.subr.mxu0 %v1797
        %v1799 = vand.u32 %v1482, 4294901760
        %v1800 = vsub.f32 %v1482, %v1799
        %1801 = vmatpush1.msra.mxu0 %v1800
        %v1802 = vand.u32 %v1485, 4294901760
        %v1803 = vsub.f32 %v1485, %v1802
        %1804 = vmatprep.subr.mxu0 %v1803
        %v1805 = vand.u32 %v1484, 4294901760
        %v1806 = vsub.f32 %v1484, %v1805
        %1807 = vmatpush1.msra.mxu0 %v1806
        %v1808 = vand.u32 %v1487, 4294901760
        %v1809 = vsub.f32 %v1487, %v1808
        %1810 = vmatprep.subr.mxu0 %v1809
        %v1811 = vand.u32 %v1486, 4294901760
        %v1812 = vsub.f32 %v1486, %v1811
        %1813 = vmatpush1.msra.mxu0 %v1812
        %v1814 = vand.u32 %v1489, 4294901760
        %v1815 = vsub.f32 %v1489, %v1814
        %1816 = vmatprep.subr.mxu0 %v1815
        %v1817 = vand.u32 %v1488, 4294901760
        %v1818 = vsub.f32 %v1488, %v1817
        %1819 = vmatpush1.msra.mxu0 %v1818
        %v1820 = vand.u32 %v1491, 4294901760
        %v1821 = vsub.f32 %v1491, %v1820
        %1822 = vmatprep.subr.mxu0 %v1821
        %v1823 = vand.u32 %v1490, 4294901760
        %v1824 = vsub.f32 %v1490, %v1823
        %1825 = vmatpush1.msra.mxu0 %v1824
        %v1826 = vand.u32 %v1493, 4294901760
        %v1827 = vsub.f32 %v1493, %v1826
        %1828 = vmatprep.subr.mxu0 %v1827
        %v1829 = vand.u32 %v1492, 4294901760
        %v1830 = vsub.f32 %v1492, %v1829
        %1831 = vmatpush1.msra.mxu0 %v1830
        %v1832 = vand.u32 %v1495, 4294901760
        %v1833 = vsub.f32 %v1495, %v1832
        %1834 = vmatprep.subr.mxu0 %v1833
        %v1835 = vand.u32 %v1494, 4294901760
        %v1836 = vsub.f32 %v1494, %v1835
        %1837 = vmatpush1.msra.mxu0 %v1836
        %v1838 = vand.u32 %v1497, 4294901760
        %v1839 = vsub.f32 %v1497, %v1838
        %1840 = vmatprep.subr.mxu0 %v1839
        %v1841 = vand.u32 %v1496, 4294901760
        %v1842 = vsub.f32 %v1496, %v1841
        %1843 = vmatpush1.msra.mxu0 %v1842
        %1844 = vmatprep.subr.mxu0 0.0
        %1845 = vmatpush1.msra.mxu0 0.0
        %1846 = vmatprep.subr.mxu0 0.0
        %1847 = vmatpush1.msra.mxu0 0.0
        %1848 = vmatprep.subr.mxu0 0.0
        %1849 = vmatpush1.msra.mxu0 0.0
        %1850 = vmatprep.subr.mxu0 0.0
        %1851 = vmatpush1.msra.mxu0 0.0
        %1852 = vmatprep.subr.mxu0 0.0
        %1853 = vmatpush1.msra.mxu0 0.0
        %1854 = vmatprep.subr.mxu0 0.0
        %1855 = vmatpush1.msra.mxu0 0.0
        %1856 = vmatprep.subr.mxu0 0.0
        %1857 = vmatpush1.msra.mxu0 0.0
        %1858 = vmatprep.subr.mxu0 0.0
        %1859 = vmatpush1.msra.mxu0 0.0
        %1860 = vmatprep.subr.mxu0 0.0
        %1861 = vmatpush1.msra.mxu0 0.0
        %1862 = vmatprep.subr.mxu0 0.0
        %1863 = vmatpush1.msra.mxu0 0.0
        %1864 = vmatprep.subr.mxu0 0.0
        %1865 = vmatpush1.msra.mxu0 0.0
        %1866 = vmatprep.subr.mxu0 0.0
        %1867 = vmatpush1.msra.mxu0 0.0
        %1868 = vmatprep.subr.mxu0 0.0
        %1869 = vmatpush1.msra.mxu0 0.0
        %1870 = vmatprep.subr.mxu0 0.0
        %1871 = vmatpush1.msra.mxu0 0.0
        %1872 = vmatprep.subr.mxu0 0.0
        %1873 = vmatpush1.msra.mxu0 0.0
        %1874 = vmatprep.subr.mxu0 0.0
        %1875 = vmatpush1.msra.mxu0 0.0
        %1876 = vmatprep.subr.mxu0 0.0
        %1877 = vmatpush1.msra.mxu0 0.0
        %1878 = vmatprep.subr.mxu0 0.0
        %1879 = vmatpush1.msra.mxu0 0.0
        %1880 = vmatprep.subr.mxu0 0.0
        %1881 = vmatpush1.msra.mxu0 0.0
        %1882 = vmatprep.subr.mxu0 0.0
        %1883 = vmatpush1.msra.mxu0 0.0
        %1884 = vmatprep.subr.mxu0 0.0
        %1885 = vmatpush1.msra.mxu0 0.0
        %1886 = vmatprep.subr.mxu0 0.0
        %1887 = vmatpush1.msra.mxu0 0.0
        %1888 = vmatprep.subr.mxu0 0.0
        %1889 = vmatpush1.msra.mxu0 0.0
        %1890 = vmatprep.subr.mxu0 0.0
        %1891 = vmatpush1.msra.mxu0 0.0
        %1892 = vmatprep.mubr.f32.mxu0 0.0
        %v1893 = vand.u32 %v452, 4294901760
        %v1894 = vsub.f32 %v452, %v1893
        %1895 = vmatmul.mubr.f32.gmra.mrb[0].mxu0 %v1894
        %v1896 = vpop.f32.mrb[0].mxu0
        %v1897 = vadd.f32 %v1771, %v1896
        %v1898 = vpop.f32.mrb[0].mxu0
        %v1899 = vadd.f32 %v1773, %v1898
        %1900 = vmatprep.mubr.f32.mxu0 0.0
        %v1901 = vand.u32 %v455, 4294901760
        %v1902 = vsub.f32 %v455, %v1901
        %1903 = vmatmul.mubr.f32.gmra.mrb[0].mxu0 %v1902
        %v1904 = vpop.f32.mrb[0].mxu0
        %v1905 = vadd.f32 %v1778, %v1904
        %v1906 = vpop.f32.mrb[0].mxu0
        %v1907 = vadd.f32 %v1780, %v1906
        %1908 = vmatprep.mubr.f32.mxu0 0.0
        %v1909 = vand.u32 %v458, 4294901760
        %v1910 = vsub.f32 %v458, %v1909
        %1911 = vmatmul.mubr.f32.gmra.mrb[0].mxu0 %v1910
        %v1912 = vpop.f32.mrb[0].mxu0
        %v1913 = vadd.f32 %v1785, %v1912
        %v1914 = vpop.f32.mrb[0].mxu0
        %v1915 = vadd.f32 %v1787, %v1914
        %1916 = vmatprep.mubr.f32.mxu0 0.0
        %v1917 = vand.u32 %v461, 4294901760
        %v1918 = vsub.f32 %v461, %v1917
        %1919 = vmatmul.mubr.f32.gmra.mrb[0].mxu0 %v1918
        %v1920 = vpop.f32.mrb[0].mxu0
        %v1921 = vadd.f32 %v1792, %v1920
        %v1922 = vpop.f32.mrb[0].mxu0
        %v1923 = vadd.f32 %v1794, %v1922
        %1924 = vdwg.mxu0
        %v1925 = vand.u32 %v1483, 4294901760
        %1926 = vmatprep.subr.mxu0 %v1925
        %v1927 = vand.u32 %v1482, 4294901760
        %1928 = vmatpush1.msra.mxu0 %v1927
        %v1929 = vand.u32 %v1485, 4294901760
        %1930 = vmatprep.subr.mxu0 %v1929
        %v1931 = vand.u32 %v1484, 4294901760
        %1932 = vmatpush1.msra.mxu0 %v1931
        %v1933 = vand.u32 %v1487, 4294901760
        %1934 = vmatprep.subr.mxu0 %v1933
        %v1935 = vand.u32 %v1486, 4294901760
        %1936 = vmatpush1.msra.mxu0 %v1935
        %v1937 = vand.u32 %v1489, 4294901760
        %1938 = vmatprep.subr.mxu0 %v1937
        %v1939 = vand.u32 %v1488, 4294901760
        %1940 = vmatpush1.msra.mxu0 %v1939
        %v1941 = vand.u32 %v1491, 4294901760
        %1942 = vmatprep.subr.mxu0 %v1941
        %v1943 = vand.u32 %v1490, 4294901760
        %1944 = vmatpush1.msra.mxu0 %v1943
        %v1945 = vand.u32 %v1493, 4294901760
        %1946 = vmatprep.subr.mxu0 %v1945
        %v1947 = vand.u32 %v1492, 4294901760
        %1948 = vmatpush1.msra.mxu0 %v1947
        %v1949 = vand.u32 %v1495, 4294901760
        %1950 = vmatprep.subr.mxu0 %v1949
        %v1951 = vand.u32 %v1494, 4294901760
        %1952 = vmatpush1.msra.mxu0 %v1951
        %v1953 = vand.u32 %v1497, 4294901760
        %1954 = vmatprep.subr.mxu0 %v1953
        %v1955 = vand.u32 %v1496, 4294901760
        %1956 = vmatpush1.msra.mxu0 %v1955
        %1957 = vmatprep.subr.mxu0 0.0
        %1958 = vmatpush1.msra.mxu0 0.0
        %1959 = vmatprep.subr.mxu0 0.0
        %1960 = vmatpush1.msra.mxu0 0.0
        %1961 = vmatprep.subr.mxu0 0.0
        %1962 = vmatpush1.msra.mxu0 0.0
        %1963 = vmatprep.subr.mxu0 0.0
        %1964 = vmatpush1.msra.mxu0 0.0
        %1965 = vmatprep.subr.mxu0 0.0
        %1966 = vmatpush1.msra.mxu0 0.0
        %1967 = vmatprep.subr.mxu0 0.0
        %1968 = vmatpush1.msra.mxu0 0.0
        %1969 = vmatprep.subr.mxu0 0.0
        %1970 = vmatpush1.msra.mxu0 0.0
        %1971 = vmatprep.subr.mxu0 0.0
        %1972 = vmatpush1.msra.mxu0 0.0
        %1973 = vmatprep.subr.mxu0 0.0
        %1974 = vmatpush1.msra.mxu0 0.0
        %1975 = vmatprep.subr.mxu0 0.0
        %1976 = vmatpush1.msra.mxu0 0.0
        %1977 = vmatprep.subr.mxu0 0.0
        %1978 = vmatpush1.msra.mxu0 0.0
        %1979 = vmatprep.subr.mxu0 0.0
        %1980 = vmatpush1.msra.mxu0 0.0
        %1981 = vmatprep.subr.mxu0 0.0
        %1982 = vmatpush1.msra.mxu0 0.0
        %1983 = vmatprep.subr.mxu0 0.0
        %1984 = vmatpush1.msra.mxu0 0.0
        %1985 = vmatprep.subr.mxu0 0.0
        %1986 = vmatpush1.msra.mxu0 0.0
        %1987 = vmatprep.subr.mxu0 0.0
        %1988 = vmatpush1.msra.mxu0 0.0
        %1989 = vmatprep.subr.mxu0 0.0
        %1990 = vmatpush1.msra.mxu0 0.0
        %1991 = vmatprep.subr.mxu0 0.0
        %1992 = vmatpush1.msra.mxu0 0.0
        %1993 = vmatprep.subr.mxu0 0.0
        %1994 = vmatpush1.msra.mxu0 0.0
        %1995 = vmatprep.subr.mxu0 0.0
        %1996 = vmatpush1.msra.mxu0 0.0
        %1997 = vmatprep.subr.mxu0 0.0
        %1998 = vmatpush1.msra.mxu0 0.0
        %1999 = vmatprep.subr.mxu0 0.0
        %2000 = vmatpush1.msra.mxu0 0.0
        %2001 = vmatprep.subr.mxu0 0.0
        %2002 = vmatpush1.msra.mxu0 0.0
        %2003 = vmatprep.subr.mxu0 0.0
        %2004 = vmatpush1.msra.mxu0 0.0
        %2005 = vmatprep.mubr.f32.mxu0 0.0
        %v2006 = vand.u32 %v452, 4294901760
        %v2007 = vsub.f32 %v452, %v2006
        %v2008 = vand.u32 %v2007, 4294901760
        %2009 = vmatmul.mubr.f32.gmra.mrb[0].mxu0 %v2008
        %v2010 = vpop.f32.mrb[0].mxu0
        %v2011 = vadd.f32 %v1897, %v2010
        %v2012 = vpop.f32.mrb[0].mxu0
        %v2013 = vadd.f32 %v1899, %v2012
        %2014 = vmatprep.mubr.f32.mxu0 0.0
        %v2015 = vand.u32 %v455, 4294901760
        %v2016 = vsub.f32 %v455, %v2015
        %v2017 = vand.u32 %v2016, 4294901760
        %2018 = vmatmul.mubr.f32.gmra.mrb[0].mxu0 %v2017
        %v2019 = vpop.f32.mrb[0].mxu0
        %v2020 = vadd.f32 %v1905, %v2019
        %v2021 = vpop.f32.mrb[0].mxu0
        %v2022 = vadd.f32 %v1907, %v2021
        %2023 = vmatprep.mubr.f32.mxu0 0.0
        %v2024 = vand.u32 %v458, 4294901760
        %v2025 = vsub.f32 %v458, %v2024
        %v2026 = vand.u32 %v2025, 4294901760
        %2027 = vmatmul.mubr.f32.gmra.mrb[0].mxu0 %v2026
        %v2028 = vpop.f32.mrb[0].mxu0
        %v2029 = vadd.f32 %v1913, %v2028
        %v2030 = vpop.f32.mrb[0].mxu0
        %v2031 = vadd.f32 %v1915, %v2030
        %2032 = vmatprep.mubr.f32.mxu0 0.0
        %v2033 = vand.u32 %v461, 4294901760
        %v2034 = vsub.f32 %v461, %v2033
        %v2035 = vand.u32 %v2034, 4294901760
        %2036 = vmatmul.mubr.f32.gmra.mrb[0].mxu0 %v2035
        %v2037 = vpop.f32.mrb[0].mxu0
        %v2038 = vadd.f32 %v1921, %v2037
        %v2039 = vpop.f32.mrb[0].mxu0
        %v2040 = vadd.f32 %v1923, %v2039
        %2041 = vdwg.mxu0
        %v2042 = vand.u32 %v1483, 4294901760
        %v2043 = vsub.f32 %v1483, %v2042
        %v2044 = vand.u32 %v2043, 4294901760
        %2045 = vmatprep.subr.mxu0 %v2044
        %v2046 = vand.u32 %v1482, 4294901760
        %v2047 = vsub.f32 %v1482, %v2046
        %v2048 = vand.u32 %v2047, 4294901760
        %2049 = vmatpush1.msra.mxu0 %v2048
        %v2050 = vand.u32 %v1485, 4294901760
        %v2051 = vsub.f32 %v1485, %v2050
        %v2052 = vand.u32 %v2051, 4294901760
        %2053 = vmatprep.subr.mxu0 %v2052
        %v2054 = vand.u32 %v1484, 4294901760
        %v2055 = vsub.f32 %v1484, %v2054
        %v2056 = vand.u32 %v2055, 4294901760
        %2057 = vmatpush1.msra.mxu0 %v2056
        %v2058 = vand.u32 %v1487, 4294901760
        %v2059 = vsub.f32 %v1487, %v2058
        %v2060 = vand.u32 %v2059, 4294901760
        %2061 = vmatprep.subr.mxu0 %v2060
        %v2062 = vand.u32 %v1486, 4294901760
        %v2063 = vsub.f32 %v1486, %v2062
        %v2064 = vand.u32 %v2063, 4294901760
        %2065 = vmatpush1.msra.mxu0 %v2064
        %v2066 = vand.u32 %v1489, 4294901760
        %v2067 = vsub.f32 %v1489, %v2066
        %v2068 = vand.u32 %v2067, 4294901760
        %2069 = vmatprep.subr.mxu0 %v2068
        %v2070 = vand.u32 %v1488, 4294901760
        %v2071 = vsub.f32 %v1488, %v2070
        %v2072 = vand.u32 %v2071, 4294901760
        %2073 = vmatpush1.msra.mxu0 %v2072
        %v2074 = vand.u32 %v1491, 4294901760
        %v2075 = vsub.f32 %v1491, %v2074
        %v2076 = vand.u32 %v2075, 4294901760
        %2077 = vmatprep.subr.mxu0 %v2076
        %v2078 = vand.u32 %v1490, 4294901760
        %v2079 = vsub.f32 %v1490, %v2078
        %v2080 = vand.u32 %v2079, 4294901760
        %2081 = vmatpush1.msra.mxu0 %v2080
        %v2082 = vand.u32 %v1493, 4294901760
        %v2083 = vsub.f32 %v1493, %v2082
        %v2084 = vand.u32 %v2083, 4294901760
        %2085 = vmatprep.subr.mxu0 %v2084
        %v2086 = vand.u32 %v1492, 4294901760
        %v2087 = vsub.f32 %v1492, %v2086
        %v2088 = vand.u32 %v2087, 4294901760
        %2089 = vmatpush1.msra.mxu0 %v2088
        %v2090 = vand.u32 %v1495, 4294901760
        %v2091 = vsub.f32 %v1495, %v2090
        %v2092 = vand.u32 %v2091, 4294901760
        %2093 = vmatprep.subr.mxu0 %v2092
        %v2094 = vand.u32 %v1494, 4294901760
        %v2095 = vsub.f32 %v1494, %v2094
        %v2096 = vand.u32 %v2095, 4294901760
        %2097 = vmatpush1.msra.mxu0 %v2096
        %v2098 = vand.u32 %v1497, 4294901760
        %v2099 = vsub.f32 %v1497, %v2098
        %v2100 = vand.u32 %v2099, 4294901760
        %2101 = vmatprep.subr.mxu0 %v2100
        %v2102 = vand.u32 %v1496, 4294901760
        %v2103 = vsub.f32 %v1496, %v2102
        %v2104 = vand.u32 %v2103, 4294901760
        %2105 = vmatpush1.msra.mxu0 %v2104
        %2106 = vmatprep.subr.mxu0 0.0
        %2107 = vmatpush1.msra.mxu0 0.0
        %2108 = vmatprep.subr.mxu0 0.0
        %2109 = vmatpush1.msra.mxu0 0.0
        %2110 = vmatprep.subr.mxu0 0.0
        %2111 = vmatpush1.msra.mxu0 0.0
        %2112 = vmatprep.subr.mxu0 0.0
        %2113 = vmatpush1.msra.mxu0 0.0
        %2114 = vmatprep.subr.mxu0 0.0
        %2115 = vmatpush1.msra.mxu0 0.0
        %2116 = vmatprep.subr.mxu0 0.0
        %2117 = vmatpush1.msra.mxu0 0.0
        %2118 = vmatprep.subr.mxu0 0.0
        %2119 = vmatpush1.msra.mxu0 0.0
        %2120 = vmatprep.subr.mxu0 0.0
        %2121 = vmatpush1.msra.mxu0 0.0
        %2122 = vmatprep.subr.mxu0 0.0
        %2123 = vmatpush1.msra.mxu0 0.0
        %2124 = vmatprep.subr.mxu0 0.0
        %2125 = vmatpush1.msra.mxu0 0.0
        %2126 = vmatprep.subr.mxu0 0.0
        %2127 = vmatpush1.msra.mxu0 0.0
        %2128 = vmatprep.subr.mxu0 0.0
        %2129 = vmatpush1.msra.mxu0 0.0
        %2130 = vmatprep.subr.mxu0 0.0
        %2131 = vmatpush1.msra.mxu0 0.0
        %2132 = vmatprep.subr.mxu0 0.0
        %2133 = vmatpush1.msra.mxu0 0.0
        %2134 = vmatprep.subr.mxu0 0.0
        %2135 = vmatpush1.msra.mxu0 0.0
        %2136 = vmatprep.subr.mxu0 0.0
        %2137 = vmatpush1.msra.mxu0 0.0
        %2138 = vmatprep.subr.mxu0 0.0
        %2139 = vmatpush1.msra.mxu0 0.0
        %2140 = vmatprep.subr.mxu0 0.0
        %2141 = vmatpush1.msra.mxu0 0.0
        %2142 = vmatprep.subr.mxu0 0.0
        %2143 = vmatpush1.msra.mxu0 0.0
        %2144 = vmatprep.subr.mxu0 0.0
        %2145 = vmatpush1.msra.mxu0 0.0
        %2146 = vmatprep.subr.mxu0 0.0
        %2147 = vmatpush1.msra.mxu0 0.0
        %2148 = vmatprep.subr.mxu0 0.0
        %2149 = vmatpush1.msra.mxu0 0.0
        %2150 = vmatprep.subr.mxu0 0.0
        %2151 = vmatpush1.msra.mxu0 0.0
        %2152 = vmatprep.subr.mxu0 0.0
        %2153 = vmatpush1.msra.mxu0 0.0
        %2154 = vmatprep.mubr.f32.mxu0 0.0
        %v2155 = vand.u32 %v452, 4294901760
        %2156 = vmatmul.mubr.f32.gmra.mrb[0].mxu0 %v2155
        %v2157 = vpop.f32.mrb[0].mxu0
        %v2158 = vadd.f32 %v2011, %v2157
        %v2159 = vpop.f32.mrb[0].mxu0
        %v2160 = vadd.f32 %v2013, %v2159
        %2161 = vmatprep.mubr.f32.mxu0 0.0
        %v2162 = vand.u32 %v455, 4294901760
        %2163 = vmatmul.mubr.f32.gmra.mrb[0].mxu0 %v2162
        %v2164 = vpop.f32.mrb[0].mxu0
        %v2165 = vadd.f32 %v2020, %v2164
        %v2166 = vpop.f32.mrb[0].mxu0
        %v2167 = vadd.f32 %v2022, %v2166
        %2168 = vmatprep.mubr.f32.mxu0 0.0
        %v2169 = vand.u32 %v458, 4294901760
        %2170 = vmatmul.mubr.f32.gmra.mrb[0].mxu0 %v2169
        %v2171 = vpop.f32.mrb[0].mxu0
        %v2172 = vadd.f32 %v2029, %v2171
        %v2173 = vpop.f32.mrb[0].mxu0
        %v2174 = vadd.f32 %v2031, %v2173
        %2175 = vmatprep.mubr.f32.mxu0 0.0
        %v2176 = vand.u32 %v461, 4294901760
        %2177 = vmatmul.mubr.f32.gmra.mrb[0].mxu0 %v2176
        %v2178 = vpop.f32.mrb[0].mxu0
        %v2179 = vadd.f32 %v2038, %v2178
        %v2180 = vpop.f32.mrb[0].mxu0
        %v2181 = vadd.f32 %v2040, %v2180
        %2182 = vdwg.mxu0
        %v2183 = vand.u32 %v1483, 4294901760
        %2184 = vmatprep.subr.mxu0 %v2183
        %v2185 = vand.u32 %v1482, 4294901760
        %2186 = vmatpush1.msra.mxu0 %v2185
        %v2187 = vand.u32 %v1485, 4294901760
        %2188 = vmatprep.subr.mxu0 %v2187
        %v2189 = vand.u32 %v1484, 4294901760
        %2190 = vmatpush1.msra.mxu0 %v2189
        %v2191 = vand.u32 %v1487, 4294901760
        %2192 = vmatprep.subr.mxu0 %v2191
        %v2193 = vand.u32 %v1486, 4294901760
        %2194 = vmatpush1.msra.mxu0 %v2193
        %v2195 = vand.u32 %v1489, 4294901760
        %2196 = vmatprep.subr.mxu0 %v2195
        %v2197 = vand.u32 %v1488, 4294901760
        %2198 = vmatpush1.msra.mxu0 %v2197
        %v2199 = vand.u32 %v1491, 4294901760
        %2200 = vmatprep.subr.mxu0 %v2199
        %v2201 = vand.u32 %v1490, 4294901760
        %2202 = vmatpush1.msra.mxu0 %v2201
        %v2203 = vand.u32 %v1493, 4294901760
        %2204 = vmatprep.subr.mxu0 %v2203
        %v2205 = vand.u32 %v1492, 4294901760
        %2206 = vmatpush1.msra.mxu0 %v2205
        %v2207 = vand.u32 %v1495, 4294901760
        %2208 = vmatprep.subr.mxu0 %v2207
        %v2209 = vand.u32 %v1494, 4294901760
        %2210 = vmatpush1.msra.mxu0 %v2209
        %v2211 = vand.u32 %v1497, 4294901760
        %2212 = vmatprep.subr.mxu0 %v2211
        %v2213 = vand.u32 %v1496, 4294901760
        %2214 = vmatpush1.msra.mxu0 %v2213
        %2215 = vmatprep.subr.mxu0 0.0
        %2216 = vmatpush1.msra.mxu0 0.0
        %2217 = vmatprep.subr.mxu0 0.0
        %2218 = vmatpush1.msra.mxu0 0.0
        %2219 = vmatprep.subr.mxu0 0.0
        %2220 = vmatpush1.msra.mxu0 0.0
        %2221 = vmatprep.subr.mxu0 0.0
        %2222 = vmatpush1.msra.mxu0 0.0
        %2223 = vmatprep.subr.mxu0 0.0
        %2224 = vmatpush1.msra.mxu0 0.0
        %2225 = vmatprep.subr.mxu0 0.0
        %2226 = vmatpush1.msra.mxu0 0.0
        %2227 = vmatprep.subr.mxu0 0.0
        %2228 = vmatpush1.msra.mxu0 0.0
        %2229 = vmatprep.subr.mxu0 0.0
        %2230 = vmatpush1.msra.mxu0 0.0
        %2231 = vmatprep.subr.mxu0 0.0
        %2232 = vmatpush1.msra.mxu0 0.0
        %2233 = vmatprep.subr.mxu0 0.0
        %2234 = vmatpush1.msra.mxu0 0.0
        %2235 = vmatprep.subr.mxu0 0.0
        %2236 = vmatpush1.msra.mxu0 0.0
        %2237 = vmatprep.subr.mxu0 0.0
        %2238 = vmatpush1.msra.mxu0 0.0
        %2239 = vmatprep.subr.mxu0 0.0
        %2240 = vmatpush1.msra.mxu0 0.0
        %2241 = vmatprep.subr.mxu0 0.0
        %2242 = vmatpush1.msra.mxu0 0.0
        %2243 = vmatprep.subr.mxu0 0.0
        %2244 = vmatpush1.msra.mxu0 0.0
        %2245 = vmatprep.subr.mxu0 0.0
        %2246 = vmatpush1.msra.mxu0 0.0
        %2247 = vmatprep.subr.mxu0 0.0
        %2248 = vmatpush1.msra.mxu0 0.0
        %2249 = vmatprep.subr.mxu0 0.0
        %2250 = vmatpush1.msra.mxu0 0.0
        %2251 = vmatprep.subr.mxu0 0.0
        %2252 = vmatpush1.msra.mxu0 0.0
        %2253 = vmatprep.subr.mxu0 0.0
        %2254 = vmatpush1.msra.mxu0 0.0
        %2255 = vmatprep.subr.mxu0 0.0
        %2256 = vmatpush1.msra.mxu0 0.0
        %2257 = vmatprep.subr.mxu0 0.0
        %2258 = vmatpush1.msra.mxu0 0.0
        %2259 = vmatprep.subr.mxu0 0.0
        %2260 = vmatpush1.msra.mxu0 0.0
        %2261 = vmatprep.subr.mxu0 0.0
        %2262 = vmatpush1.msra.mxu0 0.0
        %2263 = vmatprep.mubr.f32.mxu0 0.0
        %v2264 = vand.u32 %v452, 4294901760
        %2265 = vmatmul.mubr.f32.gmra.mrb[0].mxu0 %v2264
        %v2266 = vpop.f32.mrb[0].mxu0
        %v2267 = vadd.f32 %v2158, %v2266
        %v2268 = vpop.f32.mrb[0].mxu0
        %v2269 = vadd.f32 %v2160, %v2268
        %2270 = vmatprep.mubr.f32.mxu0 0.0
        %v2271 = vand.u32 %v455, 4294901760
        %2272 = vmatmul.mubr.f32.gmra.mrb[0].mxu0 %v2271
        %v2273 = vpop.f32.mrb[0].mxu0
        %v2274 = vadd.f32 %v2165, %v2273
        %v2275 = vpop.f32.mrb[0].mxu0
        %v2276 = vadd.f32 %v2167, %v2275
        %2277 = vmatprep.mubr.f32.mxu0 0.0
        %v2278 = vand.u32 %v458, 4294901760
        %2279 = vmatmul.mubr.f32.gmra.mrb[0].mxu0 %v2278
        %v2280 = vpop.f32.mrb[0].mxu0
        %v2281 = vadd.f32 %v2172, %v2280
        %v2282 = vpop.f32.mrb[0].mxu0
        %v2283 = vadd.f32 %v2174, %v2282
        %2284 = vmatprep.mubr.f32.mxu0 0.0
        %v2285 = vand.u32 %v461, 4294901760
        %2286 = vmatmul.mubr.f32.gmra.mrb[0].mxu0 %v2285
        %v2287 = vpop.f32.mrb[0].mxu0
        %v2288 = vadd.f32 %v2179, %v2287
        %v2289 = vpop.f32.mrb[0].mxu0
        %v2290 = vadd.f32 %v2181, %v2289
        %2291 = vdwg.mxu0
        %v2292 = vadd.f32 %v2267, %v2269
        %2293 = vadd.xlane.f32.xlu0 %v2292
        %v2294 = vpop.xlane.xlu0 %2293
        %v2295 = vadd.f32 %v2274, %v2276
        %2296 = vadd.xlane.f32.xlu0 %v2295
        %v2297 = vpop.xlane.xlu0 %2296
        %v2298 = vadd.f32 %v2281, %v2283
        %2299 = vadd.xlane.f32.xlu0 %v2298
        %v2300 = vpop.xlane.xlu0 %2299
        %v2301 = vadd.f32 %v2288, %v2290
        %2302 = vadd.xlane.f32.xlu0 %v2301
        %v2303 = vpop.xlane.xlu0 %2302
        %v2304 = vmul.f32 %v2294, %v425
        %v2305 = vmul.f32 %v2297, %v425
        %v2306 = vmul.f32 %v2300, %v425
        %v2307 = vmul.f32 %v2303, %v425
        %v2308 = vsub.f32 %v2267, %v2304
        %v2309 = vsub.f32 %v2269, %v2304
        %v2310 = vsub.f32 %v2274, %v2305
        %v2311 = vsub.f32 %v2276, %v2305
        %v2312 = vsub.f32 %v2281, %v2306
        %v2313 = vsub.f32 %v2283, %v2306
        %v2314 = vsub.f32 %v2288, %v2307
        %v2315 = vsub.f32 %v2290, %v2307
        %v2316 = vmul.f32 %v2308, %v2308
        %v2317 = vmul.f32 %v2309, %v2309
        %v2318 = vmul.f32 %v2310, %v2310
        %v2319 = vmul.f32 %v2311, %v2311
        %v2320 = vmul.f32 %v2312, %v2312
        %v2321 = vmul.f32 %v2313, %v2313
        %v2322 = vmul.f32 %v2314, %v2314
        %v2323 = vmul.f32 %v2315, %v2315
        %v2324 = vadd.f32 %v2316, %v2317
        %2325 = vadd.xlane.f32.xlu0 %v2324
        %v2326 = vpop.xlane.xlu0 %2325
        %v2327 = vadd.f32 %v2318, %v2319
        %2328 = vadd.xlane.f32.xlu0 %v2327
        %v2329 = vpop.xlane.xlu0 %2328
        %v2330 = vadd.f32 %v2320, %v2321
        %2331 = vadd.xlane.f32.xlu0 %v2330
        %v2332 = vpop.xlane.xlu0 %2331
        %v2333 = vadd.f32 %v2322, %v2323
        %2334 = vadd.xlane.f32.xlu0 %v2333
        %v2335 = vpop.xlane.xlu0 %2334
        %v2336 = vmul.f32 %v2326, %v1301
        %v2337 = vmul.f32 %v2329, %v1301
        %v2338 = vmul.f32 %v2332, %v1301
        %v2339 = vmul.f32 %v2335, %v1301
        %v2340 = vrsqrt.pop %v2336
        %v2341 = vmul.f32 %v2336, %v2340
        %vm2342 = vcmp.eq.f32.partialorder %v2336, inf
        %v2343 = vsel %vm2342, %v2336, %v2341
        %vm2344 = vcmp.eq.f32.partialorder %v2336, 0.0
        %v2345 = vand.u32 %v2336, 2147483648
        %v2346 = vsel %vm2344, %v2345, %v2343
        %v2347 = vrsqrt.pop %v2337
        %v2348 = vmul.f32 %v2337, %v2347
        %vm2349 = vcmp.eq.f32.partialorder %v2337, inf
        %v2350 = vsel %vm2349, %v2337, %v2348
        %vm2351 = vcmp.eq.f32.partialorder %v2337, 0.0
        %v2352 = vand.u32 %v2337, 2147483648
        %v2353 = vsel %vm2351, %v2352, %v2350
        %v2354 = vrsqrt.pop %v2338
        %v2355 = vmul.f32 %v2338, %v2354
        %vm2356 = vcmp.eq.f32.partialorder %v2338, inf
        %v2357 = vsel %vm2356, %v2338, %v2355
        %vm2358 = vcmp.eq.f32.partialorder %v2338, 0.0
        %v2359 = vand.u32 %v2338, 2147483648
        %v2360 = vsel %vm2358, %v2359, %v2357
        %v2361 = vrsqrt.pop %v2339
        %v2362 = vmul.f32 %v2339, %v2361
        %vm2363 = vcmp.eq.f32.partialorder %v2339, inf
        %v2364 = vsel %vm2363, %v2339, %v2362
        %vm2365 = vcmp.eq.f32.partialorder %v2339, 0.0
        %v2366 = vand.u32 %v2339, 2147483648
        %v2367 = vsel %vm2365, %v2366, %v2364
        %v2368 = vadd.f32 %v2346, 1e-05
        %v2369 = vadd.f32 %v2353, 1e-05
        %v2370 = vadd.f32 %v2360, 1e-05
        %v2371 = vadd.f32 %v2367, 1e-05
        %v2372 = vrcp.pop %v2368
        %v2373 = vmul.f32 %v397, %v2372
        %v2374 = vrcp.pop %v2369
        %v2375 = vmul.f32 %v398, %v2374
        %v2376 = vrcp.pop %v2370
        %v2377 = vmul.f32 %v399, %v2376
        %v2378 = vrcp.pop %v2371
        %v2379 = vmul.f32 %v400, %v2378
        %2381 = vset.pattern.permute.xlu0 2
        %2382 = vperm.xlu0 %2381, %v2373
        %v2383 = vpop.permute.xlu0 %2382
        %2386 = vset.pattern.permute.xlu0 2
        %2387 = vperm.xlu0 %2386, %v2375
        %v2388 = vpop.permute.xlu0 %2387
        %2391 = vset.pattern.permute.xlu0 2
        %2392 = vperm.xlu0 %2391, %v2377
        %v2393 = vpop.permute.xlu0 %2392
        %2396 = vset.pattern.permute.xlu0 2
        %2397 = vperm.xlu0 %2396, %v2379
        %v2398 = vpop.permute.xlu0 %2397
        %v2400 = vmul.f32 %v2308, %v2383
        %v2401 = vmul.f32 %v2309, %v2383
        %v2402 = vmul.f32 %v2310, %v2388
        %v2403 = vmul.f32 %v2311, %v2388
        %v2404 = vmul.f32 %v2312, %v2393
        %v2405 = vmul.f32 %v2313, %v2393
        %v2406 = vmul.f32 %v2314, %v2398
        %v2407 = vmul.f32 %v2315, %v2398
        %2408 = vset.pattern.permute.xlu0 3
        %2409 = vperm.xlu0 %2408, %v397
        %v2410 = vpop.permute.xlu0 %2409
        %2412 = vset.pattern.permute.xlu0 3
        %2413 = vperm.xlu0 %2412, %v398
        %v2414 = vpop.permute.xlu0 %2413
        %2416 = vset.pattern.permute.xlu0 3
        %2417 = vperm.xlu0 %2416, %v399
        %v2418 = vpop.permute.xlu0 %2417
        %2420 = vset.pattern.permute.xlu0 3
        %2421 = vperm.xlu0 %2420, %v400
        %v2422 = vpop.permute.xlu0 %2421
        %v2424 = vadd.f32 %v2400, %v2410
        %v2425 = vadd.f32 %v2401, %v2410
        %v2426 = vadd.f32 %v2402, %v2414
        %v2427 = vadd.f32 %v2403, %v2414
        %v2428 = vadd.f32 %v2404, %v2418
        %v2429 = vadd.f32 %v2405, %v2418
        %v2430 = vadd.f32 %v2406, %v2422
        %v2431 = vadd.f32 %v2407, %v2422
        %v2432 = vxor.u32 %v2424, 2147483648
        %v2433 = vxor.u32 %v2425, 2147483648
        %v2434 = vxor.u32 %v2426, 2147483648
        %v2435 = vxor.u32 %v2427, 2147483648
        %v2436 = vxor.u32 %v2428, 2147483648
        %v2437 = vxor.u32 %v2429, 2147483648
        %v2438 = vxor.u32 %v2430, 2147483648
        %v2439 = vxor.u32 %v2431, 2147483648
        %v2440 = vmul.f32 %v2432, 1.442695
        %v2441 = vpow.pop %v2440
        %v2442 = vmul.f32 %v2433, 1.442695
        %v2443 = vpow.pop %v2442
        %v2444 = vmul.f32 %v2434, 1.442695
        %v2445 = vpow.pop %v2444
        %v2446 = vmul.f32 %v2435, 1.442695
        %v2447 = vpow.pop %v2446
        %v2448 = vmul.f32 %v2436, 1.442695
        %v2449 = vpow.pop %v2448
        %v2450 = vmul.f32 %v2437, 1.442695
        %v2451 = vpow.pop %v2450
        %v2452 = vmul.f32 %v2438, 1.442695
        %v2453 = vpow.pop %v2452
        %v2454 = vmul.f32 %v2439, 1.442695
        %v2455 = vpow.pop %v2454
        %v2456 = vadd.f32 %v2441, 1.0
        %v2457 = vadd.f32 %v2443, 1.0
        %v2458 = vadd.f32 %v2445, 1.0
        %v2459 = vadd.f32 %v2447, 1.0
        %v2460 = vadd.f32 %v2449, 1.0
        %v2461 = vadd.f32 %v2451, 1.0
        %v2462 = vadd.f32 %v2453, 1.0
        %v2463 = vadd.f32 %v2455, 1.0
        %v2464 = vrcp.pop %v2456
        %v2465 = vmul.f32 1.0, %v2464
        %v2466 = vrcp.pop %v2457
        %v2467 = vmul.f32 1.0, %v2466
        %v2468 = vrcp.pop %v2458
        %v2469 = vmul.f32 1.0, %v2468
        %v2470 = vrcp.pop %v2459
        %v2471 = vmul.f32 1.0, %v2470
        %v2472 = vrcp.pop %v2460
        %v2473 = vmul.f32 1.0, %v2472
        %v2474 = vrcp.pop %v2461
        %v2475 = vmul.f32 1.0, %v2474
        %v2476 = vrcp.pop %v2462
        %v2477 = vmul.f32 1.0, %v2476
        %v2478 = vrcp.pop %v2463
        %v2479 = vmul.f32 1.0, %v2478
        %v2480 = vadd.f32 %v1435, %v2465
        %v2481 = vadd.f32 %v1437, %v2467
        %v2482 = vadd.f32 %v1439, %v2469
        %v2483 = vadd.f32 %v1441, %v2471
        %v2484 = vadd.f32 %v1443, %v2473
        %v2485 = vadd.f32 %v1445, %v2475
        %v2486 = vadd.f32 %v1447, %v2477
        %v2487 = vadd.f32 %v1449, %v2479
        %v2488 = vmul.f32 %v2480, 0.25
        %v2489 = vmul.f32 %v2481, 0.25
        %v2490 = vmul.f32 %v2482, 0.25
        %v2491 = vmul.f32 %v2483, 0.25
        %v2492 = vmul.f32 %v2484, 0.25
        %v2493 = vmul.f32 %v2485, 0.25
        %v2494 = vmul.f32 %v2486, 0.25
        %v2495 = vmul.f32 %v2487, 0.25
        %vm2496 = vcmask 261120
        %v2498 = vsel %vm2496, %v389, 0
        %v2501 = vsel %vm2496, %v390, 0
        %v2504 = vsel %vm2496, %v391, 0
        %v2507 = vsel %vm2496, %v392, 0
        %v2510 = vsel %vm2496, %v393, 0
        %v2513 = vsel %vm2496, %v394, 0
        %v2516 = vsel %vm2496, %v395, 0
        %v2519 = vsel %vm2496, %v396, 0
        %v2521 = vand.u32 %v2489, 4294901760
        %2522 = vmatprep.subr.mxu0 %v2521
        %v2523 = vand.u32 %v2488, 4294901760
        %2524 = vmatpush1.msra.mxu0 %v2523
        %v2525 = vand.u32 %v2491, 4294901760
        %2526 = vmatprep.subr.mxu0 %v2525
        %v2527 = vand.u32 %v2490, 4294901760
        %2528 = vmatpush1.msra.mxu0 %v2527
        %v2529 = vand.u32 %v2493, 4294901760
        %2530 = vmatprep.subr.mxu0 %v2529
        %v2531 = vand.u32 %v2492, 4294901760
        %2532 = vmatpush1.msra.mxu0 %v2531
        %v2533 = vand.u32 %v2495, 4294901760
        %2534 = vmatprep.subr.mxu0 %v2533
        %v2535 = vand.u32 %v2494, 4294901760
        %2536 = vmatpush1.msra.mxu0 %v2535
        %2537 = vmatprep.subr.mxu0 0.0
        %2538 = vmatpush1.msra.mxu0 0.0
        %2539 = vmatprep.subr.mxu0 0.0
        %2540 = vmatpush1.msra.mxu0 0.0
        %2541 = vmatprep.subr.mxu0 0.0
        %2542 = vmatpush1.msra.mxu0 0.0
        %2543 = vmatprep.subr.mxu0 0.0
        %2544 = vmatpush1.msra.mxu0 0.0
        %2545 = vmatprep.subr.mxu0 0.0
        %2546 = vmatpush1.msra.mxu0 0.0
        %2547 = vmatprep.subr.mxu0 0.0
        %2548 = vmatpush1.msra.mxu0 0.0
        %2549 = vmatprep.subr.mxu0 0.0
        %2550 = vmatpush1.msra.mxu0 0.0
        %2551 = vmatprep.subr.mxu0 0.0
        %2552 = vmatpush1.msra.mxu0 0.0
        %2553 = vmatprep.subr.mxu0 0.0
        %2554 = vmatpush1.msra.mxu0 0.0
        %2555 = vmatprep.subr.mxu0 0.0
        %2556 = vmatpush1.msra.mxu0 0.0
        %2557 = vmatprep.subr.mxu0 0.0
        %2558 = vmatpush1.msra.mxu0 0.0
        %2559 = vmatprep.subr.mxu0 0.0
        %2560 = vmatpush1.msra.mxu0 0.0
        %2561 = vmatprep.subr.mxu0 0.0
        %2562 = vmatpush1.msra.mxu0 0.0
        %2563 = vmatprep.subr.mxu0 0.0
        %2564 = vmatpush1.msra.mxu0 0.0
        %2565 = vmatprep.subr.mxu0 0.0
        %2566 = vmatpush1.msra.mxu0 0.0
        %2567 = vmatprep.subr.mxu0 0.0
        %2568 = vmatpush1.msra.mxu0 0.0
        %2569 = vmatprep.subr.mxu0 0.0
        %2570 = vmatpush1.msra.mxu0 0.0
        %2571 = vmatprep.subr.mxu0 0.0
        %2572 = vmatpush1.msra.mxu0 0.0
        %2573 = vmatprep.subr.mxu0 0.0
        %2574 = vmatpush1.msra.mxu0 0.0
        %2575 = vmatprep.subr.mxu0 0.0
        %2576 = vmatpush1.msra.mxu0 0.0
        %2577 = vmatprep.subr.mxu0 0.0
        %2578 = vmatpush1.msra.mxu0 0.0
        %2579 = vmatprep.subr.mxu0 0.0
        %2580 = vmatpush1.msra.mxu0 0.0
        %2581 = vmatprep.subr.mxu0 0.0
        %2582 = vmatpush1.msra.mxu0 0.0
        %2583 = vmatprep.subr.mxu0 0.0
        %2584 = vmatpush1.msra.mxu0 0.0
        %2585 = vmatprep.subr.mxu0 0.0
        %2586 = vmatpush1.msra.mxu0 0.0
        %2587 = vmatprep.subr.mxu0 0.0
        %2588 = vmatpush1.msra.mxu0 0.0
        %2589 = vmatprep.subr.mxu0 0.0
        %2590 = vmatpush1.msra.mxu0 0.0
        %2591 = vmatprep.subr.mxu0 0.0
        %2592 = vmatpush1.msra.mxu0 0.0
        %2593 = vmatprep.mubr.f32.mxu0 0.0
        %v2594 = vand.u32 %v2498, 4294901760
        %v2595 = vsub.f32 %v2498, %v2594
        %v2596 = vand.u32 %v2595, 4294901760
        %v2597 = vsub.f32 %v2595, %v2596
        %v2598 = vand.u32 %v2597, 4294901760
        %2599 = vmatmul.mubr.f32.gmra.mrb[0].mxu0 %v2598
        %v2600 = vpop.f32.mrb[0].mxu0
        %v2601 = vadd.f32 0.0, %v2600
        %v2602 = vpop.f32.mrb[0].mxu0
        %v2603 = vadd.f32 0.0, %v2602
        %2604 = vmatprep.mubr.f32.mxu0 0.0
        %v2605 = vand.u32 %v2501, 4294901760
        %v2606 = vsub.f32 %v2501, %v2605
        %v2607 = vand.u32 %v2606, 4294901760
        %v2608 = vsub.f32 %v2606, %v2607
        %v2609 = vand.u32 %v2608, 4294901760
        %2610 = vmatmul.mubr.f32.gmra.mrb[0].mxu0 %v2609
        %v2611 = vpop.f32.mrb[0].mxu0
        %v2612 = vadd.f32 0.0, %v2611
        %v2613 = vpop.f32.mrb[0].mxu0
        %v2614 = vadd.f32 0.0, %v2613
        %2615 = vmatprep.mubr.f32.mxu0 0.0
        %v2616 = vand.u32 %v2504, 4294901760
        %v2617 = vsub.f32 %v2504, %v2616
        %v2618 = vand.u32 %v2617, 4294901760
        %v2619 = vsub.f32 %v2617, %v2618
        %v2620 = vand.u32 %v2619, 4294901760
        %2621 = vmatmul.mubr.f32.gmra.mrb[0].mxu0 %v2620
        %v2622 = vpop.f32.mrb[0].mxu0
        %v2623 = vadd.f32 0.0, %v2622
        %v2624 = vpop.f32.mrb[0].mxu0
        %v2625 = vadd.f32 0.0, %v2624
        %2626 = vmatprep.mubr.f32.mxu0 0.0
        %v2627 = vand.u32 %v2507, 4294901760
        %v2628 = vsub.f32 %v2507, %v2627
        %v2629 = vand.u32 %v2628, 4294901760
        %v2630 = vsub.f32 %v2628, %v2629
        %v2631 = vand.u32 %v2630, 4294901760
        %2632 = vmatmul.mubr.f32.gmra.mrb[0].mxu0 %v2631
        %v2633 = vpop.f32.mrb[0].mxu0
        %v2634 = vadd.f32 0.0, %v2633
        %v2635 = vpop.f32.mrb[0].mxu0
        %v2636 = vadd.f32 0.0, %v2635
        %2637 = vmatprep.mubr.f32.mxu0 0.0
        %v2638 = vand.u32 %v2510, 4294901760
        %v2639 = vsub.f32 %v2510, %v2638
        %v2640 = vand.u32 %v2639, 4294901760
        %v2641 = vsub.f32 %v2639, %v2640
        %v2642 = vand.u32 %v2641, 4294901760
        %2643 = vmatmul.mubr.f32.gmra.mrb[0].mxu0 %v2642
        %v2644 = vpop.f32.mrb[0].mxu0
        %v2645 = vadd.f32 0.0, %v2644
        %v2646 = vpop.f32.mrb[0].mxu0
        %v2647 = vadd.f32 0.0, %v2646
        %2648 = vmatprep.mubr.f32.mxu0 0.0
        %v2649 = vand.u32 %v2513, 4294901760
        %v2650 = vsub.f32 %v2513, %v2649
        %v2651 = vand.u32 %v2650, 4294901760
        %v2652 = vsub.f32 %v2650, %v2651
        %v2653 = vand.u32 %v2652, 4294901760
        %2654 = vmatmul.mubr.f32.gmra.mrb[0].mxu0 %v2653
        %v2655 = vpop.f32.mrb[0].mxu0
        %v2656 = vadd.f32 0.0, %v2655
        %v2657 = vpop.f32.mrb[0].mxu0
        %v2658 = vadd.f32 0.0, %v2657
        %2659 = vmatprep.mubr.f32.mxu0 0.0
        %v2660 = vand.u32 %v2516, 4294901760
        %v2661 = vsub.f32 %v2516, %v2660
        %v2662 = vand.u32 %v2661, 4294901760
        %v2663 = vsub.f32 %v2661, %v2662
        %v2664 = vand.u32 %v2663, 4294901760
        %2665 = vmatmul.mubr.f32.gmra.mrb[0].mxu0 %v2664
        %v2666 = vpop.f32.mrb[0].mxu0
        %v2667 = vadd.f32 0.0, %v2666
        %v2668 = vpop.f32.mrb[0].mxu0
        %v2669 = vadd.f32 0.0, %v2668
        %2670 = vmatprep.mubr.f32.mxu0 0.0
        %v2671 = vand.u32 %v2519, 4294901760
        %v2672 = vsub.f32 %v2519, %v2671
        %v2673 = vand.u32 %v2672, 4294901760
        %v2674 = vsub.f32 %v2672, %v2673
        %v2675 = vand.u32 %v2674, 4294901760
        %2676 = vmatmul.mubr.f32.gmra.mrb[0].mxu0 %v2675
        %v2677 = vpop.f32.mrb[0].mxu0
        %v2678 = vadd.f32 0.0, %v2677
        %v2679 = vpop.f32.mrb[0].mxu0
        %v2680 = vadd.f32 0.0, %v2679
        %2681 = vdwg.mxu0
        %v2682 = vand.u32 %v2489, 4294901760
        %v2683 = vsub.f32 %v2489, %v2682
        %v2684 = vand.u32 %v2683, 4294901760
        %v2685 = vsub.f32 %v2683, %v2684
        %v2686 = vand.u32 %v2685, 4294901760
        %2687 = vmatprep.subr.mxu0 %v2686
        %v2688 = vand.u32 %v2488, 4294901760
        %v2689 = vsub.f32 %v2488, %v2688
        %v2690 = vand.u32 %v2689, 4294901760
        %v2691 = vsub.f32 %v2689, %v2690
        %v2692 = vand.u32 %v2691, 4294901760
        %2693 = vmatpush1.msra.mxu0 %v2692
        %v2694 = vand.u32 %v2491, 4294901760
        %v2695 = vsub.f32 %v2491, %v2694
        %v2696 = vand.u32 %v2695, 4294901760
        %v2697 = vsub.f32 %v2695, %v2696
        %v2698 = vand.u32 %v2697, 4294901760
        %2699 = vmatprep.subr.mxu0 %v2698
        %v2700 = vand.u32 %v2490, 4294901760
        %v2701 = vsub.f32 %v2490, %v2700
        %v2702 = vand.u32 %v2701, 4294901760
        %v2703 = vsub.f32 %v2701, %v2702
        %v2704 = vand.u32 %v2703, 4294901760
        %2705 = vmatpush1.msra.mxu0 %v2704
        %v2706 = vand.u32 %v2493, 4294901760
        %v2707 = vsub.f32 %v2493, %v2706
        %v2708 = vand.u32 %v2707, 4294901760
        %v2709 = vsub.f32 %v2707, %v2708
        %v2710 = vand.u32 %v2709, 4294901760
        %2711 = vmatprep.subr.mxu0 %v2710
        %v2712 = vand.u32 %v2492, 4294901760
        %v2713 = vsub.f32 %v2492, %v2712
        %v2714 = vand.u32 %v2713, 4294901760
        %v2715 = vsub.f32 %v2713, %v2714
        %v2716 = vand.u32 %v2715, 4294901760
        %2717 = vmatpush1.msra.mxu0 %v2716
        %v2718 = vand.u32 %v2495, 4294901760
        %v2719 = vsub.f32 %v2495, %v2718
        %v2720 = vand.u32 %v2719, 4294901760
        %v2721 = vsub.f32 %v2719, %v2720
        %v2722 = vand.u32 %v2721, 4294901760
        %2723 = vmatprep.subr.mxu0 %v2722
        %v2724 = vand.u32 %v2494, 4294901760
        %v2725 = vsub.f32 %v2494, %v2724
        %v2726 = vand.u32 %v2725, 4294901760
        %v2727 = vsub.f32 %v2725, %v2726
        %v2728 = vand.u32 %v2727, 4294901760
        %2729 = vmatpush1.msra.mxu0 %v2728
        %2730 = vmatprep.subr.mxu0 0.0
        %2731 = vmatpush1.msra.mxu0 0.0
        %2732 = vmatprep.subr.mxu0 0.0
        %2733 = vmatpush1.msra.mxu0 0.0
        %2734 = vmatprep.subr.mxu0 0.0
        %2735 = vmatpush1.msra.mxu0 0.0
        %2736 = vmatprep.subr.mxu0 0.0
        %2737 = vmatpush1.msra.mxu0 0.0
        %2738 = vmatprep.subr.mxu0 0.0
        %2739 = vmatpush1.msra.mxu0 0.0
        %2740 = vmatprep.subr.mxu0 0.0
        %2741 = vmatpush1.msra.mxu0 0.0
        %2742 = vmatprep.subr.mxu0 0.0
        %2743 = vmatpush1.msra.mxu0 0.0
        %2744 = vmatprep.subr.mxu0 0.0
        %2745 = vmatpush1.msra.mxu0 0.0
        %2746 = vmatprep.subr.mxu0 0.0
        %2747 = vmatpush1.msra.mxu0 0.0
        %2748 = vmatprep.subr.mxu0 0.0
        %2749 = vmatpush1.msra.mxu0 0.0
        %2750 = vmatprep.subr.mxu0 0.0
        %2751 = vmatpush1.msra.mxu0 0.0
        %2752 = vmatprep.subr.mxu0 0.0
        %2753 = vmatpush1.msra.mxu0 0.0
        %2754 = vmatprep.subr.mxu0 0.0
        %2755 = vmatpush1.msra.mxu0 0.0
        %2756 = vmatprep.subr.mxu0 0.0
        %2757 = vmatpush1.msra.mxu0 0.0
        %2758 = vmatprep.subr.mxu0 0.0
        %2759 = vmatpush1.msra.mxu0 0.0
        %2760 = vmatprep.subr.mxu0 0.0
        %2761 = vmatpush1.msra.mxu0 0.0
        %2762 = vmatprep.subr.mxu0 0.0
        %2763 = vmatpush1.msra.mxu0 0.0
        %2764 = vmatprep.subr.mxu0 0.0
        %2765 = vmatpush1.msra.mxu0 0.0
        %2766 = vmatprep.subr.mxu0 0.0
        %2767 = vmatpush1.msra.mxu0 0.0
        %2768 = vmatprep.subr.mxu0 0.0
        %2769 = vmatpush1.msra.mxu0 0.0
        %2770 = vmatprep.subr.mxu0 0.0
        %2771 = vmatpush1.msra.mxu0 0.0
        %2772 = vmatprep.subr.mxu0 0.0
        %2773 = vmatpush1.msra.mxu0 0.0
        %2774 = vmatprep.subr.mxu0 0.0
        %2775 = vmatpush1.msra.mxu0 0.0
        %2776 = vmatprep.subr.mxu0 0.0
        %2777 = vmatpush1.msra.mxu0 0.0
        %2778 = vmatprep.subr.mxu0 0.0
        %2779 = vmatpush1.msra.mxu0 0.0
        %2780 = vmatprep.subr.mxu0 0.0
        %2781 = vmatpush1.msra.mxu0 0.0
        %2782 = vmatprep.subr.mxu0 0.0
        %2783 = vmatpush1.msra.mxu0 0.0
        %2784 = vmatprep.subr.mxu0 0.0
        %2785 = vmatpush1.msra.mxu0 0.0
        %2786 = vmatprep.mubr.f32.mxu0 0.0
        %v2787 = vand.u32 %v2498, 4294901760
        %2788 = vmatmul.mubr.f32.gmra.mrb[0].mxu0 %v2787
        %v2789 = vpop.f32.mrb[0].mxu0
        %v2790 = vadd.f32 %v2601, %v2789
        %v2791 = vpop.f32.mrb[0].mxu0
        %v2792 = vadd.f32 %v2603, %v2791
        %2793 = vmatprep.mubr.f32.mxu0 0.0
        %v2794 = vand.u32 %v2501, 4294901760
        %2795 = vmatmul.mubr.f32.gmra.mrb[0].mxu0 %v2794
        %v2796 = vpop.f32.mrb[0].mxu0
        %v2797 = vadd.f32 %v2612, %v2796
        %v2798 = vpop.f32.mrb[0].mxu0
        %v2799 = vadd.f32 %v2614, %v2798
        %2800 = vmatprep.mubr.f32.mxu0 0.0
        %v2801 = vand.u32 %v2504, 4294901760
        %2802 = vmatmul.mubr.f32.gmra.mrb[0].mxu0 %v2801
        %v2803 = vpop.f32.mrb[0].mxu0
        %v2804 = vadd.f32 %v2623, %v2803
        %v2805 = vpop.f32.mrb[0].mxu0
        %v2806 = vadd.f32 %v2625, %v2805
        %2807 = vmatprep.mubr.f32.mxu0 0.0
        %v2808 = vand.u32 %v2507, 4294901760
        %2809 = vmatmul.mubr.f32.gmra.mrb[0].mxu0 %v2808
        %v2810 = vpop.f32.mrb[0].mxu0
        %v2811 = vadd.f32 %v2634, %v2810
        %v2812 = vpop.f32.mrb[0].mxu0
        %v2813 = vadd.f32 %v2636, %v2812
        %2814 = vmatprep.mubr.f32.mxu0 0.0
        %v2815 = vand.u32 %v2510, 4294901760
        %2816 = vmatmul.mubr.f32.gmra.mrb[0].mxu0 %v2815
        %v2817 = vpop.f32.mrb[0].mxu0
        %v2818 = vadd.f32 %v2645, %v2817
        %v2819 = vpop.f32.mrb[0].mxu0
        %v2820 = vadd.f32 %v2647, %v2819
        %2821 = vmatprep.mubr.f32.mxu0 0.0
        %v2822 = vand.u32 %v2513, 4294901760
        %2823 = vmatmul.mubr.f32.gmra.mrb[0].mxu0 %v2822
        %v2824 = vpop.f32.mrb[0].mxu0
        %v2825 = vadd.f32 %v2656, %v2824
        %v2826 = vpop.f32.mrb[0].mxu0
        %v2827 = vadd.f32 %v2658, %v2826
        %2828 = vmatprep.mubr.f32.mxu0 0.0
        %v2829 = vand.u32 %v2516, 4294901760
        %2830 = vmatmul.mubr.f32.gmra.mrb[0].mxu0 %v2829
        %v2831 = vpop.f32.mrb[0].mxu0
        %v2832 = vadd.f32 %v2667, %v2831
        %v2833 = vpop.f32.mrb[0].mxu0
        %v2834 = vadd.f32 %v2669, %v2833
        %2835 = vmatprep.mubr.f32.mxu0 0.0
        %v2836 = vand.u32 %v2519, 4294901760
        %2837 = vmatmul.mubr.f32.gmra.mrb[0].mxu0 %v2836
        %v2838 = vpop.f32.mrb[0].mxu0
        %v2839 = vadd.f32 %v2678, %v2838
        %v2840 = vpop.f32.mrb[0].mxu0
        %v2841 = vadd.f32 %v2680, %v2840
        %2842 = vdwg.mxu0
        %v2843 = vand.u32 %v2489, 4294901760
        %v2844 = vsub.f32 %v2489, %v2843
        %2845 = vmatprep.subr.mxu0 %v2844
        %v2846 = vand.u32 %v2488, 4294901760
        %v2847 = vsub.f32 %v2488, %v2846
        %2848 = vmatpush1.msra.mxu0 %v2847
        %v2849 = vand.u32 %v2491, 4294901760
        %v2850 = vsub.f32 %v2491, %v2849
        %2851 = vmatprep.subr.mxu0 %v2850
        %v2852 = vand.u32 %v2490, 4294901760
        %v2853 = vsub.f32 %v2490, %v2852
        %2854 = vmatpush1.msra.mxu0 %v2853
        %v2855 = vand.u32 %v2493, 4294901760
        %v2856 = vsub.f32 %v2493, %v2855
        %2857 = vmatprep.subr.mxu0 %v2856
        %v2858 = vand.u32 %v2492, 4294901760
        %v2859 = vsub.f32 %v2492, %v2858
        %2860 = vmatpush1.msra.mxu0 %v2859
        %v2861 = vand.u32 %v2495, 4294901760
        %v2862 = vsub.f32 %v2495, %v2861
        %2863 = vmatprep.subr.mxu0 %v2862
        %v2864 = vand.u32 %v2494, 4294901760
        %v2865 = vsub.f32 %v2494, %v2864
        %2866 = vmatpush1.msra.mxu0 %v2865
        %2867 = vmatprep.subr.mxu0 0.0
        %2868 = vmatpush1.msra.mxu0 0.0
        %2869 = vmatprep.subr.mxu0 0.0
        %2870 = vmatpush1.msra.mxu0 0.0
        %2871 = vmatprep.subr.mxu0 0.0
        %2872 = vmatpush1.msra.mxu0 0.0
        %2873 = vmatprep.subr.mxu0 0.0
        %2874 = vmatpush1.msra.mxu0 0.0
        %2875 = vmatprep.subr.mxu0 0.0
        %2876 = vmatpush1.msra.mxu0 0.0
        %2877 = vmatprep.subr.mxu0 0.0
        %2878 = vmatpush1.msra.mxu0 0.0
        %2879 = vmatprep.subr.mxu0 0.0
        %2880 = vmatpush1.msra.mxu0 0.0
        %2881 = vmatprep.subr.mxu0 0.0
        %2882 = vmatpush1.msra.mxu0 0.0
        %2883 = vmatprep.subr.mxu0 0.0
        %2884 = vmatpush1.msra.mxu0 0.0
        %2885 = vmatprep.subr.mxu0 0.0
        %2886 = vmatpush1.msra.mxu0 0.0
        %2887 = vmatprep.subr.mxu0 0.0
        %2888 = vmatpush1.msra.mxu0 0.0
        %2889 = vmatprep.subr.mxu0 0.0
        %2890 = vmatpush1.msra.mxu0 0.0
        %2891 = vmatprep.subr.mxu0 0.0
        %2892 = vmatpush1.msra.mxu0 0.0
        %2893 = vmatprep.subr.mxu0 0.0
        %2894 = vmatpush1.msra.mxu0 0.0
        %2895 = vmatprep.subr.mxu0 0.0
        %2896 = vmatpush1.msra.mxu0 0.0
        %2897 = vmatprep.subr.mxu0 0.0
        %2898 = vmatpush1.msra.mxu0 0.0
        %2899 = vmatprep.subr.mxu0 0.0
        %2900 = vmatpush1.msra.mxu0 0.0
        %2901 = vmatprep.subr.mxu0 0.0
        %2902 = vmatpush1.msra.mxu0 0.0
        %2903 = vmatprep.subr.mxu0 0.0
        %2904 = vmatpush1.msra.mxu0 0.0
        %2905 = vmatprep.subr.mxu0 0.0
        %2906 = vmatpush1.msra.mxu0 0.0
        %2907 = vmatprep.subr.mxu0 0.0
        %2908 = vmatpush1.msra.mxu0 0.0
        %2909 = vmatprep.subr.mxu0 0.0
        %2910 = vmatpush1.msra.mxu0 0.0
        %2911 = vmatprep.subr.mxu0 0.0
        %2912 = vmatpush1.msra.mxu0 0.0
        %2913 = vmatprep.subr.mxu0 0.0
        %2914 = vmatpush1.msra.mxu0 0.0
        %2915 = vmatprep.subr.mxu0 0.0
        %2916 = vmatpush1.msra.mxu0 0.0
        %2917 = vmatprep.subr.mxu0 0.0
        %2918 = vmatpush1.msra.mxu0 0.0
        %2919 = vmatprep.subr.mxu0 0.0
        %2920 = vmatpush1.msra.mxu0 0.0
        %2921 = vmatprep.subr.mxu0 0.0
        %2922 = vmatpush1.msra.mxu0 0.0
        %2923 = vmatprep.mubr.f32.mxu0 0.0
        %v2924 = vand.u32 %v2498, 4294901760
        %v2925 = vsub.f32 %v2498, %v2924
        %2926 = vmatmul.mubr.f32.gmra.mrb[0].mxu0 %v2925
        %v2927 = vpop.f32.mrb[0].mxu0
        %v2928 = vadd.f32 %v2790, %v2927
        %v2929 = vpop.f32.mrb[0].mxu0
        %v2930 = vadd.f32 %v2792, %v2929
        %2931 = vmatprep.mubr.f32.mxu0 0.0
        %v2932 = vand.u32 %v2501, 4294901760
        %v2933 = vsub.f32 %v2501, %v2932
        %2934 = vmatmul.mubr.f32.gmra.mrb[0].mxu0 %v2933
        %v2935 = vpop.f32.mrb[0].mxu0
        %v2936 = vadd.f32 %v2797, %v2935
        %v2937 = vpop.f32.mrb[0].mxu0
        %v2938 = vadd.f32 %v2799, %v2937
        %2939 = vmatprep.mubr.f32.mxu0 0.0
        %v2940 = vand.u32 %v2504, 4294901760
        %v2941 = vsub.f32 %v2504, %v2940
        %2942 = vmatmul.mubr.f32.gmra.mrb[0].mxu0 %v2941
        %v2943 = vpop.f32.mrb[0].mxu0
        %v2944 = vadd.f32 %v2804, %v2943
        %v2945 = vpop.f32.mrb[0].mxu0
        %v2946 = vadd.f32 %v2806, %v2945
        %2947 = vmatprep.mubr.f32.mxu0 0.0
        %v2948 = vand.u32 %v2507, 4294901760
        %v2949 = vsub.f32 %v2507, %v2948
        %2950 = vmatmul.mubr.f32.gmra.mrb[0].mxu0 %v2949
        %v2951 = vpop.f32.mrb[0].mxu0
        %v2952 = vadd.f32 %v2811, %v2951
        %v2953 = vpop.f32.mrb[0].mxu0
        %v2954 = vadd.f32 %v2813, %v2953
        %2955 = vmatprep.mubr.f32.mxu0 0.0
        %v2956 = vand.u32 %v2510, 4294901760
        %v2957 = vsub.f32 %v2510, %v2956
        %2958 = vmatmul.mubr.f32.gmra.mrb[0].mxu0 %v2957
        %v2959 = vpop.f32.mrb[0].mxu0
        %v2960 = vadd.f32 %v2818, %v2959
        %v2961 = vpop.f32.mrb[0].mxu0
        %v2962 = vadd.f32 %v2820, %v2961
        %2963 = vmatprep.mubr.f32.mxu0 0.0
        %v2964 = vand.u32 %v2513, 4294901760
        %v2965 = vsub.f32 %v2513, %v2964
        %2966 = vmatmul.mubr.f32.gmra.mrb[0].mxu0 %v2965
        %v2967 = vpop.f32.mrb[0].mxu0
        %v2968 = vadd.f32 %v2825, %v2967
        %v2969 = vpop.f32.mrb[0].mxu0
        %v2970 = vadd.f32 %v2827, %v2969
        %2971 = vmatprep.mubr.f32.mxu0 0.0
        %v2972 = vand.u32 %v2516, 4294901760
        %v2973 = vsub.f32 %v2516, %v2972
        %2974 = vmatmul.mubr.f32.gmra.mrb[0].mxu0 %v2973
        %v2975 = vpop.f32.mrb[0].mxu0
        %v2976 = vadd.f32 %v2832, %v2975
        %v2977 = vpop.f32.mrb[0].mxu0
        %v2978 = vadd.f32 %v2834, %v2977
        %2979 = vmatprep.mubr.f32.mxu0 0.0
        %v2980 = vand.u32 %v2519, 4294901760
        %v2981 = vsub.f32 %v2519, %v2980
        %2982 = vmatmul.mubr.f32.gmra.mrb[0].mxu0 %v2981
        %v2983 = vpop.f32.mrb[0].mxu0
        %v2984 = vadd.f32 %v2839, %v2983
        %v2985 = vpop.f32.mrb[0].mxu0
        %v2986 = vadd.f32 %v2841, %v2985
        %2987 = vdwg.mxu0
        %v2988 = vand.u32 %v2489, 4294901760
        %2989 = vmatprep.subr.mxu0 %v2988
        %v2990 = vand.u32 %v2488, 4294901760
        %2991 = vmatpush1.msra.mxu0 %v2990
        %v2992 = vand.u32 %v2491, 4294901760
        %2993 = vmatprep.subr.mxu0 %v2992
        %v2994 = vand.u32 %v2490, 4294901760
        %2995 = vmatpush1.msra.mxu0 %v2994
        %v2996 = vand.u32 %v2493, 4294901760
        %2997 = vmatprep.subr.mxu0 %v2996
        %v2998 = vand.u32 %v2492, 4294901760
        %2999 = vmatpush1.msra.mxu0 %v2998
        %v3000 = vand.u32 %v2495, 4294901760
        %3001 = vmatprep.subr.mxu0 %v3000
        %v3002 = vand.u32 %v2494, 4294901760
        %3003 = vmatpush1.msra.mxu0 %v3002
        %3004 = vmatprep.subr.mxu0 0.0
        %3005 = vmatpush1.msra.mxu0 0.0
        %3006 = vmatprep.subr.mxu0 0.0
        %3007 = vmatpush1.msra.mxu0 0.0
        %3008 = vmatprep.subr.mxu0 0.0
        %3009 = vmatpush1.msra.mxu0 0.0
        %3010 = vmatprep.subr.mxu0 0.0
        %3011 = vmatpush1.msra.mxu0 0.0
        %3012 = vmatprep.subr.mxu0 0.0
        %3013 = vmatpush1.msra.mxu0 0.0
        %3014 = vmatprep.subr.mxu0 0.0
        %3015 = vmatpush1.msra.mxu0 0.0
        %3016 = vmatprep.subr.mxu0 0.0
        %3017 = vmatpush1.msra.mxu0 0.0
        %3018 = vmatprep.subr.mxu0 0.0
        %3019 = vmatpush1.msra.mxu0 0.0
        %3020 = vmatprep.subr.mxu0 0.0
        %3021 = vmatpush1.msra.mxu0 0.0
        %3022 = vmatprep.subr.mxu0 0.0
        %3023 = vmatpush1.msra.mxu0 0.0
        %3024 = vmatprep.subr.mxu0 0.0
        %3025 = vmatpush1.msra.mxu0 0.0
        %3026 = vmatprep.subr.mxu0 0.0
        %3027 = vmatpush1.msra.mxu0 0.0
        %3028 = vmatprep.subr.mxu0 0.0
        %3029 = vmatpush1.msra.mxu0 0.0
        %3030 = vmatprep.subr.mxu0 0.0
        %3031 = vmatpush1.msra.mxu0 0.0
        %3032 = vmatprep.subr.mxu0 0.0
        %3033 = vmatpush1.msra.mxu0 0.0
        %3034 = vmatprep.subr.mxu0 0.0
        %3035 = vmatpush1.msra.mxu0 0.0
        %3036 = vmatprep.subr.mxu0 0.0
        %3037 = vmatpush1.msra.mxu0 0.0
        %3038 = vmatprep.subr.mxu0 0.0
        %3039 = vmatpush1.msra.mxu0 0.0
        %3040 = vmatprep.subr.mxu0 0.0
        %3041 = vmatpush1.msra.mxu0 0.0
        %3042 = vmatprep.subr.mxu0 0.0
        %3043 = vmatpush1.msra.mxu0 0.0
        %3044 = vmatprep.subr.mxu0 0.0
        %3045 = vmatpush1.msra.mxu0 0.0
        %3046 = vmatprep.subr.mxu0 0.0
        %3047 = vmatpush1.msra.mxu0 0.0
        %3048 = vmatprep.subr.mxu0 0.0
        %3049 = vmatpush1.msra.mxu0 0.0
        %3050 = vmatprep.subr.mxu0 0.0
        %3051 = vmatpush1.msra.mxu0 0.0
        %3052 = vmatprep.subr.mxu0 0.0
        %3053 = vmatpush1.msra.mxu0 0.0
        %3054 = vmatprep.subr.mxu0 0.0
        %3055 = vmatpush1.msra.mxu0 0.0
        %3056 = vmatprep.subr.mxu0 0.0
        %3057 = vmatpush1.msra.mxu0 0.0
        %3058 = vmatprep.subr.mxu0 0.0
        %3059 = vmatpush1.msra.mxu0 0.0
        %3060 = vmatprep.mubr.f32.mxu0 0.0
        %v3061 = vand.u32 %v2498, 4294901760
        %v3062 = vsub.f32 %v2498, %v3061
        %v3063 = vand.u32 %v3062, 4294901760
        %3064 = vmatmul.mubr.f32.gmra.mrb[0].mxu0 %v3063
        %v3065 = vpop.f32.mrb[0].mxu0
        %v3066 = vadd.f32 %v2928, %v3065
        %v3067 = vpop.f32.mrb[0].mxu0
        %v3068 = vadd.f32 %v2930, %v3067
        %3069 = vmatprep.mubr.f32.mxu0 0.0
        %v3070 = vand.u32 %v2501, 4294901760
        %v3071 = vsub.f32 %v2501, %v3070
        %v3072 = vand.u32 %v3071, 4294901760
        %3073 = vmatmul.mubr.f32.gmra.mrb[0].mxu0 %v3072
        %v3074 = vpop.f32.mrb[0].mxu0
        %v3075 = vadd.f32 %v2936, %v3074
        %v3076 = vpop.f32.mrb[0].mxu0
        %v3077 = vadd.f32 %v2938, %v3076
        %3078 = vmatprep.mubr.f32.mxu0 0.0
        %v3079 = vand.u32 %v2504, 4294901760
        %v3080 = vsub.f32 %v2504, %v3079
        %v3081 = vand.u32 %v3080, 4294901760
        %3082 = vmatmul.mubr.f32.gmra.mrb[0].mxu0 %v3081
        %v3083 = vpop.f32.mrb[0].mxu0
        %v3084 = vadd.f32 %v2944, %v3083
        %v3085 = vpop.f32.mrb[0].mxu0
        %v3086 = vadd.f32 %v2946, %v3085
        %3087 = vmatprep.mubr.f32.mxu0 0.0
        %v3088 = vand.u32 %v2507, 4294901760
        %v3089 = vsub.f32 %v2507, %v3088
        %v3090 = vand.u32 %v3089, 4294901760
        %3091 = vmatmul.mubr.f32.gmra.mrb[0].mxu0 %v3090
        %v3092 = vpop.f32.mrb[0].mxu0
        %v3093 = vadd.f32 %v2952, %v3092
        %v3094 = vpop.f32.mrb[0].mxu0
        %v3095 = vadd.f32 %v2954, %v3094
        %3096 = vmatprep.mubr.f32.mxu0 0.0
        %v3097 = vand.u32 %v2510, 4294901760
        %v3098 = vsub.f32 %v2510, %v3097
        %v3099 = vand.u32 %v3098, 4294901760
        %3100 = vmatmul.mubr.f32.gmra.mrb[0].mxu0 %v3099
        %v3101 = vpop.f32.mrb[0].mxu0
        %v3102 = vadd.f32 %v2960, %v3101
        %v3103 = vpop.f32.mrb[0].mxu0
        %v3104 = vadd.f32 %v2962, %v3103
        %3105 = vmatprep.mubr.f32.mxu0 0.0
        %v3106 = vand.u32 %v2513, 4294901760
        %v3107 = vsub.f32 %v2513, %v3106
        %v3108 = vand.u32 %v3107, 4294901760
        %3109 = vmatmul.mubr.f32.gmra.mrb[0].mxu0 %v3108
        %v3110 = vpop.f32.mrb[0].mxu0
        %v3111 = vadd.f32 %v2968, %v3110
        %v3112 = vpop.f32.mrb[0].mxu0
        %v3113 = vadd.f32 %v2970, %v3112
        %3114 = vmatprep.mubr.f32.mxu0 0.0
        %v3115 = vand.u32 %v2516, 4294901760
        %v3116 = vsub.f32 %v2516, %v3115
        %v3117 = vand.u32 %v3116, 4294901760
        %3118 = vmatmul.mubr.f32.gmra.mrb[0].mxu0 %v3117
        %v3119 = vpop.f32.mrb[0].mxu0
        %v3120 = vadd.f32 %v2976, %v3119
        %v3121 = vpop.f32.mrb[0].mxu0
        %v3122 = vadd.f32 %v2978, %v3121
        %3123 = vmatprep.mubr.f32.mxu0 0.0
        %v3124 = vand.u32 %v2519, 4294901760
        %v3125 = vsub.f32 %v2519, %v3124
        %v3126 = vand.u32 %v3125, 4294901760
        %3127 = vmatmul.mubr.f32.gmra.mrb[0].mxu0 %v3126
        %v3128 = vpop.f32.mrb[0].mxu0
        %v3129 = vadd.f32 %v2984, %v3128
        %v3130 = vpop.f32.mrb[0].mxu0
        %v3131 = vadd.f32 %v2986, %v3130
        %3132 = vdwg.mxu0
        %v3133 = vand.u32 %v2489, 4294901760
        %v3134 = vsub.f32 %v2489, %v3133
        %v3135 = vand.u32 %v3134, 4294901760
        %3136 = vmatprep.subr.mxu0 %v3135
        %v3137 = vand.u32 %v2488, 4294901760
        %v3138 = vsub.f32 %v2488, %v3137
        %v3139 = vand.u32 %v3138, 4294901760
        %3140 = vmatpush1.msra.mxu0 %v3139
        %v3141 = vand.u32 %v2491, 4294901760
        %v3142 = vsub.f32 %v2491, %v3141
        %v3143 = vand.u32 %v3142, 4294901760
        %3144 = vmatprep.subr.mxu0 %v3143
        %v3145 = vand.u32 %v2490, 4294901760
        %v3146 = vsub.f32 %v2490, %v3145
        %v3147 = vand.u32 %v3146, 4294901760
        %3148 = vmatpush1.msra.mxu0 %v3147
        %v3149 = vand.u32 %v2493, 4294901760
        %v3150 = vsub.f32 %v2493, %v3149
        %v3151 = vand.u32 %v3150, 4294901760
        %3152 = vmatprep.subr.mxu0 %v3151
        %v3153 = vand.u32 %v2492, 4294901760
        %v3154 = vsub.f32 %v2492, %v3153
        %v3155 = vand.u32 %v3154, 4294901760
        %3156 = vmatpush1.msra.mxu0 %v3155
        %v3157 = vand.u32 %v2495, 4294901760
        %v3158 = vsub.f32 %v2495, %v3157
        %v3159 = vand.u32 %v3158, 4294901760
        %3160 = vmatprep.subr.mxu0 %v3159
        %v3161 = vand.u32 %v2494, 4294901760
        %v3162 = vsub.f32 %v2494, %v3161
        %v3163 = vand.u32 %v3162, 4294901760
        %3164 = vmatpush1.msra.mxu0 %v3163
        %3165 = vmatprep.subr.mxu0 0.0
        %3166 = vmatpush1.msra.mxu0 0.0
        %3167 = vmatprep.subr.mxu0 0.0
        %3168 = vmatpush1.msra.mxu0 0.0
        %3169 = vmatprep.subr.mxu0 0.0
        %3170 = vmatpush1.msra.mxu0 0.0
        %3171 = vmatprep.subr.mxu0 0.0
        %3172 = vmatpush1.msra.mxu0 0.0
        %3173 = vmatprep.subr.mxu0 0.0
        %3174 = vmatpush1.msra.mxu0 0.0
        %3175 = vmatprep.subr.mxu0 0.0
        %3176 = vmatpush1.msra.mxu0 0.0
        %3177 = vmatprep.subr.mxu0 0.0
        %3178 = vmatpush1.msra.mxu0 0.0
        %3179 = vmatprep.subr.mxu0 0.0
        %3180 = vmatpush1.msra.mxu0 0.0
        %3181 = vmatprep.subr.mxu0 0.0
        %3182 = vmatpush1.msra.mxu0 0.0
        %3183 = vmatprep.subr.mxu0 0.0
        %3184 = vmatpush1.msra.mxu0 0.0
        %3185 = vmatprep.subr.mxu0 0.0
        %3186 = vmatpush1.msra.mxu0 0.0
        %3187 = vmatprep.subr.mxu0 0.0
        %3188 = vmatpush1.msra.mxu0 0.0
        %3189 = vmatprep.subr.mxu0 0.0
        %3190 = vmatpush1.msra.mxu0 0.0
        %3191 = vmatprep.subr.mxu0 0.0
        %3192 = vmatpush1.msra.mxu0 0.0
        %3193 = vmatprep.subr.mxu0 0.0
        %3194 = vmatpush1.msra.mxu0 0.0
        %3195 = vmatprep.subr.mxu0 0.0
        %3196 = vmatpush1.msra.mxu0 0.0
        %3197 = vmatprep.subr.mxu0 0.0
        %3198 = vmatpush1.msra.mxu0 0.0
        %3199 = vmatprep.subr.mxu0 0.0
        %3200 = vmatpush1.msra.mxu0 0.0
        %3201 = vmatprep.subr.mxu0 0.0
        %3202 = vmatpush1.msra.mxu0 0.0
        %3203 = vmatprep.subr.mxu0 0.0
        %3204 = vmatpush1.msra.mxu0 0.0
        %3205 = vmatprep.subr.mxu0 0.0
        %3206 = vmatpush1.msra.mxu0 0.0
        %3207 = vmatprep.subr.mxu0 0.0
        %3208 = vmatpush1.msra.mxu0 0.0
        %3209 = vmatprep.subr.mxu0 0.0
        %3210 = vmatpush1.msra.mxu0 0.0
        %3211 = vmatprep.subr.mxu0 0.0
        %3212 = vmatpush1.msra.mxu0 0.0
        %3213 = vmatprep.subr.mxu0 0.0
        %3214 = vmatpush1.msra.mxu0 0.0
        %3215 = vmatprep.subr.mxu0 0.0
        %3216 = vmatpush1.msra.mxu0 0.0
        %3217 = vmatprep.subr.mxu0 0.0
        %3218 = vmatpush1.msra.mxu0 0.0
        %3219 = vmatprep.subr.mxu0 0.0
        %3220 = vmatpush1.msra.mxu0 0.0
        %3221 = vmatprep.mubr.f32.mxu0 0.0
        %v3222 = vand.u32 %v2498, 4294901760
        %3223 = vmatmul.mubr.f32.gmra.mrb[0].mxu0 %v3222
        %v3224 = vpop.f32.mrb[0].mxu0
        %v3225 = vadd.f32 %v3066, %v3224
        %v3226 = vpop.f32.mrb[0].mxu0
        %v3227 = vadd.f32 %v3068, %v3226
        %3228 = vmatprep.mubr.f32.mxu0 0.0
        %v3229 = vand.u32 %v2501, 4294901760
        %3230 = vmatmul.mubr.f32.gmra.mrb[0].mxu0 %v3229
        %v3231 = vpop.f32.mrb[0].mxu0
        %v3232 = vadd.f32 %v3075, %v3231
        %v3233 = vpop.f32.mrb[0].mxu0
        %v3234 = vadd.f32 %v3077, %v3233
        %3235 = vmatprep.mubr.f32.mxu0 0.0
        %v3236 = vand.u32 %v2504, 4294901760
        %3237 = vmatmul.mubr.f32.gmra.mrb[0].mxu0 %v3236
        %v3238 = vpop.f32.mrb[0].mxu0
        %v3239 = vadd.f32 %v3084, %v3238
        %v3240 = vpop.f32.mrb[0].mxu0
        %v3241 = vadd.f32 %v3086, %v3240
        %3242 = vmatprep.mubr.f32.mxu0 0.0
        %v3243 = vand.u32 %v2507, 4294901760
        %3244 = vmatmul.mubr.f32.gmra.mrb[0].mxu0 %v3243
        %v3245 = vpop.f32.mrb[0].mxu0
        %v3246 = vadd.f32 %v3093, %v3245
        %v3247 = vpop.f32.mrb[0].mxu0
        %v3248 = vadd.f32 %v3095, %v3247
        %3249 = vmatprep.mubr.f32.mxu0 0.0
        %v3250 = vand.u32 %v2510, 4294901760
        %3251 = vmatmul.mubr.f32.gmra.mrb[0].mxu0 %v3250
        %v3252 = vpop.f32.mrb[0].mxu0
        %v3253 = vadd.f32 %v3102, %v3252
        %v3254 = vpop.f32.mrb[0].mxu0
        %v3255 = vadd.f32 %v3104, %v3254
        %3256 = vmatprep.mubr.f32.mxu0 0.0
        %v3257 = vand.u32 %v2513, 4294901760
        %3258 = vmatmul.mubr.f32.gmra.mrb[0].mxu0 %v3257
        %v3259 = vpop.f32.mrb[0].mxu0
        %v3260 = vadd.f32 %v3111, %v3259
        %v3261 = vpop.f32.mrb[0].mxu0
        %v3262 = vadd.f32 %v3113, %v3261
        %3263 = vmatprep.mubr.f32.mxu0 0.0
        %v3264 = vand.u32 %v2516, 4294901760
        %3265 = vmatmul.mubr.f32.gmra.mrb[0].mxu0 %v3264
        %v3266 = vpop.f32.mrb[0].mxu0
        %v3267 = vadd.f32 %v3120, %v3266
        %v3268 = vpop.f32.mrb[0].mxu0
        %v3269 = vadd.f32 %v3122, %v3268
        %3270 = vmatprep.mubr.f32.mxu0 0.0
        %v3271 = vand.u32 %v2519, 4294901760
        %3272 = vmatmul.mubr.f32.gmra.mrb[0].mxu0 %v3271
        %v3273 = vpop.f32.mrb[0].mxu0
        %v3274 = vadd.f32 %v3129, %v3273
        %v3275 = vpop.f32.mrb[0].mxu0
        %v3276 = vadd.f32 %v3131, %v3275
        %3277 = vdwg.mxu0
        %v3278 = vand.u32 %v2489, 4294901760
        %3279 = vmatprep.subr.mxu0 %v3278
        %v3280 = vand.u32 %v2488, 4294901760
        %3281 = vmatpush1.msra.mxu0 %v3280
        %v3282 = vand.u32 %v2491, 4294901760
        %3283 = vmatprep.subr.mxu0 %v3282
        %v3284 = vand.u32 %v2490, 4294901760
        %3285 = vmatpush1.msra.mxu0 %v3284
        %v3286 = vand.u32 %v2493, 4294901760
        %3287 = vmatprep.subr.mxu0 %v3286
        %v3288 = vand.u32 %v2492, 4294901760
        %3289 = vmatpush1.msra.mxu0 %v3288
        %v3290 = vand.u32 %v2495, 4294901760
        %3291 = vmatprep.subr.mxu0 %v3290
        %v3292 = vand.u32 %v2494, 4294901760
        %3293 = vmatpush1.msra.mxu0 %v3292
        %3294 = vmatprep.subr.mxu0 0.0
        %3295 = vmatpush1.msra.mxu0 0.0
        %3296 = vmatprep.subr.mxu0 0.0
        %3297 = vmatpush1.msra.mxu0 0.0
        %3298 = vmatprep.subr.mxu0 0.0
        %3299 = vmatpush1.msra.mxu0 0.0
        %3300 = vmatprep.subr.mxu0 0.0
        %3301 = vmatpush1.msra.mxu0 0.0
        %3302 = vmatprep.subr.mxu0 0.0
        %3303 = vmatpush1.msra.mxu0 0.0
        %3304 = vmatprep.subr.mxu0 0.0
        %3305 = vmatpush1.msra.mxu0 0.0
        %3306 = vmatprep.subr.mxu0 0.0
        %3307 = vmatpush1.msra.mxu0 0.0
        %3308 = vmatprep.subr.mxu0 0.0
        %3309 = vmatpush1.msra.mxu0 0.0
        %3310 = vmatprep.subr.mxu0 0.0
        %3311 = vmatpush1.msra.mxu0 0.0
        %3312 = vmatprep.subr.mxu0 0.0
        %3313 = vmatpush1.msra.mxu0 0.0
        %3314 = vmatprep.subr.mxu0 0.0
        %3315 = vmatpush1.msra.mxu0 0.0
        %3316 = vmatprep.subr.mxu0 0.0
        %3317 = vmatpush1.msra.mxu0 0.0
        %3318 = vmatprep.subr.mxu0 0.0
        %3319 = vmatpush1.msra.mxu0 0.0
        %3320 = vmatprep.subr.mxu0 0.0
        %3321 = vmatpush1.msra.mxu0 0.0
        %3322 = vmatprep.subr.mxu0 0.0
        %3323 = vmatpush1.msra.mxu0 0.0
        %3324 = vmatprep.subr.mxu0 0.0
        %3325 = vmatpush1.msra.mxu0 0.0
        %3326 = vmatprep.subr.mxu0 0.0
        %3327 = vmatpush1.msra.mxu0 0.0
        %3328 = vmatprep.subr.mxu0 0.0
        %3329 = vmatpush1.msra.mxu0 0.0
        %3330 = vmatprep.subr.mxu0 0.0
        %3331 = vmatpush1.msra.mxu0 0.0
        %3332 = vmatprep.subr.mxu0 0.0
        %3333 = vmatpush1.msra.mxu0 0.0
        %3334 = vmatprep.subr.mxu0 0.0
        %3335 = vmatpush1.msra.mxu0 0.0
        %3336 = vmatprep.subr.mxu0 0.0
        %3337 = vmatpush1.msra.mxu0 0.0
        %3338 = vmatprep.subr.mxu0 0.0
        %3339 = vmatpush1.msra.mxu0 0.0
        %3340 = vmatprep.subr.mxu0 0.0
        %3341 = vmatpush1.msra.mxu0 0.0
        %3342 = vmatprep.subr.mxu0 0.0
        %3343 = vmatpush1.msra.mxu0 0.0
        %3344 = vmatprep.subr.mxu0 0.0
        %3345 = vmatpush1.msra.mxu0 0.0
        %3346 = vmatprep.subr.mxu0 0.0
        %3347 = vmatpush1.msra.mxu0 0.0
        %3348 = vmatprep.subr.mxu0 0.0
        %3349 = vmatpush1.msra.mxu0 0.0
        %3350 = vmatprep.mubr.f32.mxu0 0.0
        %v3351 = vand.u32 %v2498, 4294901760
        %3352 = vmatmul.mubr.f32.gmra.mrb[0].mxu0 %v3351
        %v3353 = vpop.f32.mrb[0].mxu0
        %v3354 = vadd.f32 %v3225, %v3353
        %v3355 = vpop.f32.mrb[0].mxu0
        %v3356 = vadd.f32 %v3227, %v3355
        %3357 = vmatprep.mubr.f32.mxu0 0.0
        %v3358 = vand.u32 %v2501, 4294901760
        %3359 = vmatmul.mubr.f32.gmra.mrb[0].mxu0 %v3358
        %v3360 = vpop.f32.mrb[0].mxu0
        %v3361 = vadd.f32 %v3232, %v3360
        %v3362 = vpop.f32.mrb[0].mxu0
        %v3363 = vadd.f32 %v3234, %v3362
        %3364 = vmatprep.mubr.f32.mxu0 0.0
        %v3365 = vand.u32 %v2504, 4294901760
        %3366 = vmatmul.mubr.f32.gmra.mrb[0].mxu0 %v3365
        %v3367 = vpop.f32.mrb[0].mxu0
        %v3368 = vadd.f32 %v3239, %v3367
        %v3369 = vpop.f32.mrb[0].mxu0
        %v3370 = vadd.f32 %v3241, %v3369
        %3371 = vmatprep.mubr.f32.mxu0 0.0
        %v3372 = vand.u32 %v2507, 4294901760
        %3373 = vmatmul.mubr.f32.gmra.mrb[0].mxu0 %v3372
        %v3374 = vpop.f32.mrb[0].mxu0
        %v3375 = vadd.f32 %v3246, %v3374
        %v3376 = vpop.f32.mrb[0].mxu0
        %v3377 = vadd.f32 %v3248, %v3376
        %3378 = vmatprep.mubr.f32.mxu0 0.0
        %v3379 = vand.u32 %v2510, 4294901760
        %3380 = vmatmul.mubr.f32.gmra.mrb[0].mxu0 %v3379
        %v3381 = vpop.f32.mrb[0].mxu0
        %v3382 = vadd.f32 %v3253, %v3381
        %v3383 = vpop.f32.mrb[0].mxu0
        %v3384 = vadd.f32 %v3255, %v3383
        %3385 = vmatprep.mubr.f32.mxu0 0.0
        %v3386 = vand.u32 %v2513, 4294901760
        %3387 = vmatmul.mubr.f32.gmra.mrb[0].mxu0 %v3386
        %v3388 = vpop.f32.mrb[0].mxu0
        %v3389 = vadd.f32 %v3260, %v3388
        %v3390 = vpop.f32.mrb[0].mxu0
        %v3391 = vadd.f32 %v3262, %v3390
        %3392 = vmatprep.mubr.f32.mxu0 0.0
        %v3393 = vand.u32 %v2516, 4294901760
        %3394 = vmatmul.mubr.f32.gmra.mrb[0].mxu0 %v3393
        %v3395 = vpop.f32.mrb[0].mxu0
        %v3396 = vadd.f32 %v3267, %v3395
        %v3397 = vpop.f32.mrb[0].mxu0
        %v3398 = vadd.f32 %v3269, %v3397
        %3399 = vmatprep.mubr.f32.mxu0 0.0
        %v3400 = vand.u32 %v2519, 4294901760
        %3401 = vmatmul.mubr.f32.gmra.mrb[0].mxu0 %v3400
        %v3402 = vpop.f32.mrb[0].mxu0
        %v3403 = vadd.f32 %v3274, %v3402
        %v3404 = vpop.f32.mrb[0].mxu0
        %v3405 = vadd.f32 %v3276, %v3404
        %3406 = vdwg.mxu0
        %v3407 = vadd.f32 %v279, %v295
        %v3408 = vadd.f32 %v280, %v296
        %v3409 = vadd.f32 %v281, %v297
        %v3410 = vadd.f32 %v282, %v298
        %v3411 = vadd.f32 %v283, %v299
        %v3412 = vadd.f32 %v284, %v300
        %v3413 = vadd.f32 %v285, %v301
        %v3414 = vadd.f32 %v286, %v302
        %v3415 = vadd.f32 %v287, %v303
        %v3416 = vadd.f32 %v288, %v304
        %v3417 = vadd.f32 %v289, %v305
        %v3418 = vadd.f32 %v290, %v306
        %v3419 = vadd.f32 %v291, %v307
        %v3420 = vadd.f32 %v292, %v308
        %v3421 = vadd.f32 %v293, %v309
        %v3422 = vadd.f32 %v294, %v310
        %v3423 = vmul.f32 %v3407, %v3354
        %v3424 = vmul.f32 %v3408, %v3356
        %v3425 = vmul.f32 %v3409, %v3361
        %v3426 = vmul.f32 %v3410, %v3363
        %v3427 = vmul.f32 %v3411, %v3368
        %v3428 = vmul.f32 %v3412, %v3370
        %v3429 = vmul.f32 %v3413, %v3375
        %v3430 = vmul.f32 %v3414, %v3377
        %v3431 = vmul.f32 %v3415, %v3382
        %v3432 = vmul.f32 %v3416, %v3384
        %v3433 = vmul.f32 %v3417, %v3389
        %v3434 = vmul.f32 %v3418, %v3391
        %v3435 = vmul.f32 %v3419, %v3396
        %v3436 = vmul.f32 %v3420, %v3398
        %v3437 = vmul.f32 %v3421, %v3403
        %v3438 = vmul.f32 %v3422, %v3405
        %3439 = vst [vmem:[%s266] sm:$0xff] %v3423
        %3440 = vst [vmem:[%s266 + $0x8] sm:$0xff] %v3424
        %3441 = vst [vmem:[%s266 + $0x10] sm:$0xff] %v3425
        %3442 = vst [vmem:[%s266 + $0x18] sm:$0xff] %v3426
        %3443 = vst [vmem:[%s266 + $0x20] sm:$0xff] %v3427
        %3444 = vst [vmem:[%s266 + $0x28] sm:$0xff] %v3428
        %3445 = vst [vmem:[%s266 + $0x30] sm:$0xff] %v3429
        %3446 = vst [vmem:[%s266 + $0x38] sm:$0xff] %v3430
        %3447 = vst [vmem:[%s266 + $0x40] sm:$0xff] %v3431
        %3448 = vst [vmem:[%s266 + $0x48] sm:$0xff] %v3432
        %3449 = vst [vmem:[%s266 + $0x50] sm:$0xff] %v3433
        %3450 = vst [vmem:[%s266 + $0x58] sm:$0xff] %v3434
        %3451 = vst [vmem:[%s266 + $0x60] sm:$0xff] %v3435
        %3452 = vst [vmem:[%s266 + $0x68] sm:$0xff] %v3436
        %3453 = vst [vmem:[%s266 + $0x70] sm:$0xff] %v3437
        %3454 = vst [vmem:[%s266 + $0x78] sm:$0xff] %v3438
        %s3455 = sand.u32 %s127, 1
        %s3456 = scalar_lea.sflag [#allocation4], %s3455
        %s3457 = sand.u32 %s127, 1
        %s3458 = smul.addr %s3457, 128
        %s3459 = scalar_lea.vmem [#allocation7], %s3458
        // Predicated region
        $region41: #{tpu_custom_call.1} parent=31 // pred_check
          %p3460 = pneg %p137
        $region42: #{tpu_custom_call.1} parent=31 // pred_check_branch
          %3462 = sbr.rel (%p3460) target = $region44
        $region43: #{tpu_custom_call.1} parent=31 // pred_region
          %s3463 = sadd.s32 %s27, %s28
          %s3464 = smul.u32 8, %s3463
          %s3466 = ssub.s32 2048, 2048
          %3467 = vsyncadd %s3456, %s3466
          %s3468 = smul.addr %s3464, 2
          %s3469 = smul.addr %s3468, 128
          %s3470 = scalar_lea.hbm %s3, %s3469
          %s3471 = sshll.u32 %s3459, 4
          %s3472 = int_to_ptr.vmem [resolvable:$true] %s3471
          %3477 = dma.vmem_to_hbm [thread:$0]  %s3472, 2048, %s3470, %s3456, 256, 256, 16
        $region44: #{tpu_custom_call.1} parent=31 // pred_fallthru
          _
      $region32: #{tpu_custom_call.1} parent=5 // pred_fallthru
        _
      %p3478 = scmp.le.s32.totalorder 2, %s18
      // Predicated region
      $region45: #{tpu_custom_call.1} parent=5 // pred_check
        %p3479 = pneg %p3478
      $region46: #{tpu_custom_call.1} parent=5 // pred_check_branch
        %3481 = sbr.rel (%p3479) target = $region48
      $region47: #{tpu_custom_call.1} parent=5 // pred_region
        %s3482 = ssub.s32 %s18, 2
        // Predicated region
        $region49: #{tpu_custom_call.1} parent=47 // pred_check
          %p3483 = pneg %p143
        $region50: #{tpu_custom_call.1} parent=47 // pred_check_branch
          %3485 = sbr.rel (%p3483) target = $region52
        $region51: #{tpu_custom_call.1} parent=47 // pred_region
          %s3486 = sand.u32 %s128, 1
          %s3487 = scalar_lea.sflag [#allocation4], %s3486
          %s3488 = sand.u32 %s128, 1
          %s3489 = smul.addr %s3488, 128
          %s3490 = scalar_lea.vmem [#allocation7], %s3489
          %3491 = dma.done %s3487, 2048
        $region52: #{tpu_custom_call.1} parent=47 // pred_fallthru
          _
      $region48: #{tpu_custom_call.1} parent=5 // pred_fallthru
        _
    $region6: #{tpu_custom_call.1} parent=1 // loop_footer
      %s22 = sadd.s32 1, %s18
    $region7: #{tpu_custom_call.1} parent=1 // loop_footer_branch
      %17 = sbr.rel target = $region3
    $region8: #{tpu_custom_call.1} parent=1 // loop_exit
      _
    %3492 = vsyncpa [#allocation3], 1
    %s3493 = scalar_lea.sflag [#allocation3], 1
    %3494 = vsyncpa %s3493, 1
    %3495 = vsyncpa [#allocation6], 1
    %s3496 = scalar_lea.sflag [#allocation6], 1
    %3497 = vsyncpa %s3496, 1
    %3498 = vsyncpa [#allocation4], 1
    %s3499 = scalar_lea.sflag [#allocation4], 1
    %3500 = vsyncpa %s3499, 1

</llo_original>
